<compile_context>
chip_gen: v7x
topology: tpu7x:2x2x1
jax: 0.10.0
libtpu: 0.0.40
codegen_flags: <defaults>
</compile_context>

<pallas_src>
import functools
import math

import jax
import jax.numpy as jnp
from jax.experimental import pallas as pl
from jax.experimental.pallas import tpu as pltpu


def _layernorm(x, eps=1e-5):
    # LayerNorm over the last axis with gamma=1, beta=0.  The PyTorch module constructs a
    # *fresh* nn.LayerNorm in every forward call, so identity affine params are exact.
    mean = jnp.mean(x, axis=-1, keepdims=True)
    var = jnp.mean((x - mean) ** 2, axis=-1, keepdims=True)
    return (x - mean) * jax.lax.rsqrt(var + eps)


def _encoder_layer_kernel(xq_ref, xkv_ref, nmask_ref, wq_ref, wkv_ref, wo_ref,
                          w1_ref, w2_ref, out_ref, attn_ref, *, n_heads, d_k, d_v):
    f32 = jnp.float32
    bf16 = jnp.bfloat16

    xq = xq_ref[0]                                   # [tq, d_model] f32 (residual path)
    xkv = xkv_ref[0]                                 # [S,  d_model] bf16 (key/value path)
    tq, d_model = xq.shape
    hk = n_heads * d_k

    # Fused lane-dense projections (bf16 MXU operands, f32 accumulation, bf16-resident).
    q = jnp.dot(xq.astype(bf16), wq_ref[...], preferred_element_type=f32).astype(bf16)
    kv = jnp.dot(xkv, wkv_ref[...], preferred_element_type=f32).astype(bf16)

    nmask = nmask_ref[0].astype(f32)                 # [tq, S] additive mask (0 / -1e9)

    attn_out = jnp.zeros((tq, d_model), dtype=f32)
    # Heads are split with static lane slices of the fused projections; scores / context
    # matmuls are inherently per-head (block-diagonal), and the output projection is
    # accumulated directly into `attn_out` (no [H, tq, d_model] intermediate, no reduce).
    # TODO(synk): switch to lax.fori_loop over heads for large n_heads (bounds live ranges).
    for h in range(n_heads):
        q_h = q[:, h * d_k:(h + 1) * d_k]                       # [tq, d_k] (1/sqrt(d_k) folded)
        k_h = kv[:, h * d_k:(h + 1) * d_k]                      # [S,  d_k]
        v_h = kv[:, hk + h * d_v: hk + (h + 1) * d_v]           # [S,  d_v]

        s = jnp.einsum("qd,kd->qk", q_h, k_h,
                       preferred_element_type=f32) + nmask      # [tq, S] f32
        m = jnp.max(s, axis=-1, keepdims=True)
        e = jnp.exp(s - m)
        denom = jnp.sum(e, axis=-1, keepdims=True)
        p = e * pl.reciprocal(denom, approx=True)               # softmax, f32
        attn_ref[0, h] = p.astype(attn_ref.dtype)               # lane-dense [tq, S] store

        ctx_h = jnp.dot(p.astype(bf16), v_h,
                        preferred_element_type=f32).astype(bf16)    # [tq, d_v]
        attn_out += jnp.dot(ctx_h, wo_ref[h * d_v:(h + 1) * d_v, :],
                            preferred_element_type=f32)         # [tq, d_model] accumulate

    y = _layernorm(attn_out + xq)                               # residual + LN (f32)

    # Position-wise FFN.  TODO(synk): tile over d_ff for large d_ff (v7x VMEM budget).
    h1 = jnp.maximum(jnp.dot(y.astype(bf16), w1_ref[...],
                             preferred_element_type=f32), 0.0)
    ffn = jnp.dot(h1.astype(bf16), w2_ref[...], preferred_element_type=f32)
    out_ref[0] = _layernorm(ffn + y).astype(out_ref.dtype)      # residual + LN (f32)


def _vmem_limit_bytes():
    # Per-generation scoped-VMEM budget: ~48 MiB stays under v7x's 64 MiB/TC with headroom,
    # ~96 MiB exploits v5e/v6e's 128 MiB once tiles are scaled up.
    try:
        cap = pltpu.get_tpu_info().vmem_capacity_bytes
    except Exception:
        cap = 64 * 1024 * 1024
    return 96 * 1024 * 1024 if cap >= 128 * 1024 * 1024 else 48 * 1024 * 1024


def encoder_layer(x, mask, params, *, n_heads, d_k, d_v, tq=None,
                  attn_dtype=jnp.bfloat16):
    """x: [B, S, d_model] f32; mask: [B, S, S] float (1.0 == masked key position).

    Returns (out [B, S, d_model] f32, attn [B, n_heads, S, S] attn_dtype)."""
    B, S, d_model = x.shape
    wq, wk, wv, wo, w1, w2 = params
    d_ff = w1.shape[1]
    bf16 = jnp.bfloat16

    if tq is None:
        tq = min(S, 128)
    assert S % tq == 0 and tq % 8 == 0, "query tile must divide S and be sublane-aligned"
    n_q_tiles = S // tq

    # One-time wrapper-side layout / dtype prep (plain JAX):
    #   * 1/sqrt(d_k) folded into W_Q,
    #   * W_K | W_V fused along the lane axis (single K/V projection matmul in-kernel),
    #   * weights, mask and key/value activations cast to bf16,
    #   * mask converted to additive form (0 / -1e9).
    wq_s = (wq * (1.0 / math.sqrt(d_k))).astype(bf16)           # [d_model, H*d_k]
    wkv = jnp.concatenate([wk, wv], axis=1).astype(bf16)        # [d_model, H*(d_k+d_v)]
    wo_b = wo.astype(bf16)                                      # [H*d_v, d_model]
    w1_b = w1.astype(bf16)
    w2_b = w2.astype(bf16)
    x_bf = x.astype(bf16)                                       # key/value path input
    neg_mask = (mask * jnp.float32(-1e9)).astype(bf16)          # additive mask

    kernel = functools.partial(_encoder_layer_kernel,
                               n_heads=n_heads, d_k=d_k, d_v=d_v)

    full2 = lambda b, q: (0, 0)
    out_shapes = (
        jax.ShapeDtypeStruct((B, S, d_model), jnp.float32),
        jax.ShapeDtypeStruct((B, n_heads, S, S), attn_dtype),
    )

    return pl.pallas_call(
        kernel,
        out_shape=out_shapes,
        grid=(B, n_q_tiles),
        in_specs=[
            pl.BlockSpec((1, tq, d_model), lambda b, q: (b, q, 0)),   # x (query/residual rows, f32)
            pl.BlockSpec((1, S, d_model), lambda b, q: (b, 0, 0)),    # x (key/value rows, bf16)
            pl.BlockSpec((1, tq, S), lambda b, q: (b, q, 0)),         # additive mask (bf16)
            pl.BlockSpec((d_model, n_heads * d_k), full2),            # W_Q (pre-scaled)
            pl.BlockSpec((d_model, n_heads * (d_k + d_v)), full2),    # W_K | W_V fused
            pl.BlockSpec((n_heads * d_v, d_model), full2),            # W_O
            pl.BlockSpec((d_model, d_ff), full2),                     # FFN fc1
            pl.BlockSpec((d_ff, d_model), full2),                     # FFN fc2
        ],
        out_specs=(
            pl.BlockSpec((1, tq, d_model), lambda b, q: (b, q, 0)),
            pl.BlockSpec((1, n_heads, tq, S), lambda b, q: (b, 0, q, 0)),
        ),
        compiler_params=pltpu.CompilerParams(
            dimension_semantics=("parallel", "parallel"),
            vmem_limit_bytes=_vmem_limit_bytes(),
        ),
    )(x, x_bf, neg_mask, wq_s, wkv, wo_b, w1_b, w2_b)


def _reference(x, mask, params, *, n_heads, d_k, d_v):
    """Pure-JAX f32 reference mirroring the PyTorch forward."""
    wq, wk, wv, wo, w1, w2 = params
    B, S, d_model = x.shape
    Q = (x @ wq).reshape(B, S, n_heads, d_k).transpose(0, 2, 1, 3)
    K = (x @ wk).reshape(B, S, n_heads, d_k).transpose(0, 2, 1, 3)
    V = (x @ wv).reshape(B, S, n_heads, d_v).transpose(0, 2, 1, 3)
    scores = jnp.einsum("bhqd,bhkd->bhqk", Q, K) / math.sqrt(d_k)
    scores = jnp.where(mask[:, None, :, :] > 0.0, -1e9, scores)
    attn = jax.nn.softmax(scores, axis=-1)
    ctx = jnp.einsum("bhqk,bhkd->bhqd", attn, V)
    ctx = ctx.transpose(0, 2, 1, 3).reshape(B, S, n_heads * d_v)
    y = _layernorm(ctx @ wo + x)
    out = _layernorm(jnp.maximum(y @ w1, 0.0) @ w2 + y)
    return out, attn


if __name__ == "__main__":
    # Small but lane-aligned shapes (trailing dims multiples of 128 where possible, per review).
    B, S = 2, 128
    d_model, d_ff, d_k, d_v, n_heads = 128, 256, 32, 32, 4

    key = jax.random.PRNGKey(0)
    ks = jax.random.split(key, 8)

    x = jax.random.normal(ks[0], (B, S, d_model), dtype=jnp.float32)

    # Deterministic padding mask: mask out the last 32 key positions of batch element 1.
    key_pos = jnp.arange(S)[None, :]                       # [1, S]
    lengths = jnp.array([S, S - 32])[:, None]              # [B, 1]
    mask_bool = key_pos >= lengths                         # [B, S]
    mask = jnp.broadcast_to(mask_bool[:, None, :], (B, S, S)).astype(jnp.float32)

    def init(k, shape):
        fan_in = shape[0]
        bound = 1.0 / math.sqrt(fan_in)
        return jax.random.uniform(k, shape, jnp.float32, -bound, bound)

    params = (
        init(ks[1], (d_model, n_heads * d_k)),   # W_Q^T
        init(ks[2], (d_model, n_heads * d_k)),   # W_K^T
        init(ks[3], (d_model, n_heads * d_v)),   # W_V^T
        init(ks[4], (n_heads * d_v, d_model)),   # fc^T
        init(ks[5], (d_model, d_ff)),            # ffn fc1^T
        init(ks[6], (d_ff, d_model)),            # ffn fc2^T
    )

    out, attn = encoder_layer(x, mask, params, n_heads=n_heads, d_k=d_k, d_v=d_v, tq=64)
    out = jax.block_until_ready(out)
    attn = jax.block_until_ready(attn)

    out_want, attn_want = _reference(x, mask, params, n_heads=n_heads, d_k=d_k, d_v=d_v)
    assert out.shape == (B, S, d_model) and attn.shape == (B, n_heads, S, S)

    attn_f32 = attn.astype(jnp.float32)
    # bf16 MXU operands, bf16 attention writeback and an approximate softmax reciprocal ->
    # compare against the f32 reference with bf16-level tolerances.
    assert jnp.allclose(attn_f32, attn_want, atol=2e-2, rtol=2e-2), \
        f"attn max abs diff = {jnp.max(jnp.abs(attn_f32 - attn_want))}"
    assert jnp.allclose(out, out_want, atol=5e-2, rtol=5e-2), \
        f"out max abs diff = {jnp.max(jnp.abs(out - out_want))}"

    print("KERNEL_OK")
</pallas_src>

<mosaic_0001>
module attributes {stable_mosaic.version = 11 : i64} {
  func.func @_encoder_layer_kernel(%arg0: i32, %arg1: i32, %arg2: memref<1x64x128xf32, #tpu.memory_space<vmem>>, %arg3: memref<1x128x128xbf16, #tpu.memory_space<vmem>>, %arg4: memref<1x64x128xbf16, #tpu.memory_space<vmem>>, %arg5: memref<128x128xbf16, #tpu.memory_space<vmem>>, %arg6: memref<128x256xbf16, #tpu.memory_space<vmem>>, %arg7: memref<128x128xbf16, #tpu.memory_space<vmem>>, %arg8: memref<128x256xbf16, #tpu.memory_space<vmem>>, %arg9: memref<256x128xbf16, #tpu.memory_space<vmem>>, %arg10: memref<1x64x128xf32, #tpu.memory_space<vmem>>, %arg11: memref<1x4x64x128xbf16, #tpu.memory_space<vmem>>) attributes {dimension_semantics = [#tpu.dimension_semantics<parallel>, #tpu.dimension_semantics<parallel>], iteration_bounds = array<i64: 2, 2>, scalar_prefetch = 0 : i64, scratch_operands = 0 : i64, tpu.core_type = #tpu.core_type<tc>, window_params = [{transform_indices = @transform_0, window_bounds = array<i64: 1, 64, 128>}, {transform_indices = @transform_1, window_bounds = array<i64: 1, 128, 128>}, {transform_indices = @transform_2, window_bounds = array<i64: 1, 64, 128>}, {pipeline_mode = #tpu.pipeline_mode<synchronous>, transform_indices = @transform_3, window_bounds = array<i64: 128, 128>}, {pipeline_mode = #tpu.pipeline_mode<synchronous>, transform_indices = @transform_4, window_bounds = array<i64: 128, 256>}, {pipeline_mode = #tpu.pipeline_mode<synchronous>, transform_indices = @transform_5, window_bounds = array<i64: 128, 128>}, {pipeline_mode = #tpu.pipeline_mode<synchronous>, transform_indices = @transform_6, window_bounds = array<i64: 128, 256>}, {pipeline_mode = #tpu.pipeline_mode<synchronous>, transform_indices = @transform_7, window_bounds = array<i64: 256, 128>}, {transform_indices = @transform_8, window_bounds = array<i64: 1, 64, 128>}, {transform_indices = @transform_9, window_bounds = array<i64: 1, 4, 64, 128>}]} {
    %c0 = arith.constant 0 : index
    %c0_0 = arith.constant 0 : index
    %c0_1 = arith.constant 0 : index
    %0 = vector.load %arg2[%c0, %c0_0, %c0_1] : memref<1x64x128xf32, #tpu.memory_space<vmem>>, vector<1x64x128xf32>
    %1 = vector.shape_cast %0 : vector<1x64x128xf32> to vector<64x128xf32>
    %c0_2 = arith.constant 0 : index
    %c0_3 = arith.constant 0 : index
    %c0_4 = arith.constant 0 : index
    %2 = vector.load %arg3[%c0_2, %c0_3, %c0_4] : memref<1x128x128xbf16, #tpu.memory_space<vmem>>, vector<1x128x128xbf16>
    %3 = vector.shape_cast %2 : vector<1x128x128xbf16> to vector<128x128xbf16>
    %4 = arith.truncf %1 : vector<64x128xf32> to vector<64x128xbf16>
    %c0_5 = arith.constant 0 : index
    %c0_6 = arith.constant 0 : index
    %5 = vector.load %arg5[%c0_5, %c0_6] : memref<128x128xbf16, #tpu.memory_space<vmem>>, vector<128x128xbf16>
    %cst = arith.constant dense<0.000000e+00> : vector<64x128xf32>
    %6 = tpu.matmul %4, %5, %cst {dimension_numbers = #tpu.dot_dimension_numbers<[1], [0], [0], [1], [0, 0, 1, 1], [], []>} : vector<64x128xbf16>, vector<128x128xbf16>, vector<64x128xf32> -> vector<64x128xf32>
    %7 = arith.truncf %6 : vector<64x128xf32> to vector<64x128xbf16>
    %c0_7 = arith.constant 0 : index
    %c0_8 = arith.constant 0 : index
    %8 = vector.load %arg6[%c0_7, %c0_8] : memref<128x256xbf16, #tpu.memory_space<vmem>>, vector<128x256xbf16>
    %cst_9 = arith.constant dense<0.000000e+00> : vector<128x256xf32>
    %9 = tpu.matmul %3, %8, %cst_9 {dimension_numbers = #tpu.dot_dimension_numbers<[1], [0], [0], [1], [0, 0, 1, 1], [], []>} : vector<128x128xbf16>, vector<128x256xbf16>, vector<128x256xf32> -> vector<128x256xf32>
    %10 = arith.truncf %9 : vector<128x256xf32> to vector<128x256xbf16>
    %c0_10 = arith.constant 0 : index
    %c0_11 = arith.constant 0 : index
    %c0_12 = arith.constant 0 : index
    %11 = vector.load %arg4[%c0_10, %c0_11, %c0_12] : memref<1x64x128xbf16, #tpu.memory_space<vmem>>, vector<1x64x128xbf16>
    %12 = vector.shape_cast %11 : vector<1x64x128xbf16> to vector<64x128xbf16>
    %13 = arith.extf %12 : vector<64x128xbf16> to vector<64x128xf32>
    %cst_13 = arith.constant 0.000000e+00 : f32
    %14 = vector.broadcast %cst_13 : f32 to vector<64x128xf32>
    %15 = vector.extract_strided_slice %7 {offsets = [0, 0], sizes = [64, 32], strides = [1, 1]} : vector<64x128xbf16> to vector<64x32xbf16>
    %16 = vector.extract_strided_slice %10 {offsets = [0, 0], sizes = [128, 32], strides = [1, 1]} : vector<128x256xbf16> to vector<128x32xbf16>
    %17 = vector.extract_strided_slice %10 {offsets = [0, 128], sizes = [128, 32], strides = [1, 1]} : vector<128x256xbf16> to vector<128x32xbf16>
    "tpu.trace_start"() <{level = 10 : i32, message = "qd,kd->qk"}> : () -> ()
    %cst_14 = arith.constant dense<0.000000e+00> : vector<64x128xf32>
    %18 = tpu.matmul %15, %16, %cst_14 {dimension_numbers = #tpu.dot_dimension_numbers<[1], [1], [0], [0], [0, 0, 1, 0], [], []>} : vector<64x32xbf16>, vector<128x32xbf16>, vector<64x128xf32> -> vector<64x128xf32>
    "tpu.trace_stop"() : () -> ()
    %19 = arith.addf %18, %13 : vector<64x128xf32>
    %cst_15 = arith.constant dense<0xFF800000> : vector<64xf32>
    %20 = vector.multi_reduction <maximumf>, %19, %cst_15 [1] : vector<64x128xf32> to vector<64xf32>
    %21 = vector.shape_cast %20 : vector<64xf32> to vector<64x1xf32>
    %22 = vector.broadcast %21 : vector<64x1xf32> to vector<64x128xf32>
    %23 = arith.subf %19, %22 : vector<64x128xf32>
    %24 = math.exp %23 : vector<64x128xf32>
    %cst_16 = arith.constant dense<0.000000e+00> : vector<64xf32>
    %25 = vector.multi_reduction <add>, %24, %cst_16 [1] : vector<64x128xf32> to vector<64xf32>
    %26 = vector.shape_cast %25 : vector<64xf32> to vector<64x1xf32>
    %27 = tpu.reciprocal %26 {approx = true} : vector<64x1xf32> -> vector<64x1xf32>
    %28 = vector.broadcast %27 : vector<64x1xf32> to vector<64x128xf32>
    %29 = arith.mulf %24, %28 : vector<64x128xf32>
    %30 = arith.truncf %29 : vector<64x128xf32> to vector<64x128xbf16>
    %c0_17 = arith.constant 0 : index
    %c0_18 = arith.constant 0 : index
    %c0_19 = arith.constant 0 : index
    %c0_20 = arith.constant 0 : index
    %31 = vector.load %arg11[%c0_17, %c0_18, %c0_19, %c0_20] : memref<1x4x64x128xbf16, #tpu.memory_space<vmem>>, vector<1x1x64x128xbf16>
    %32 = vector.shape_cast %31 : vector<1x1x64x128xbf16> to vector<64x128xbf16>
    %33 = vector.shape_cast %30 : vector<64x128xbf16> to vector<1x1x64x128xbf16>
    tpu.vector_store %arg11[%c0_17, %c0_18, %c0_19, %c0_20], %33 {strides = array<i32>} : memref<1x4x64x128xbf16, #tpu.memory_space<vmem>>, vector<1x1x64x128xbf16>,
    %34 = arith.truncf %29 : vector<64x128xf32> to vector<64x128xbf16>
    %cst_21 = arith.constant dense<0.000000e+00> : vector<64x32xf32>
    %35 = tpu.matmul %34, %17, %cst_21 {dimension_numbers = #tpu.dot_dimension_numbers<[1], [0], [0], [1], [0, 0, 1, 1], [], []>} : vector<64x128xbf16>, vector<128x32xbf16>, vector<64x32xf32> -> vector<64x32xf32>
    %36 = arith.truncf %35 : vector<64x32xf32> to vector<64x32xbf16>
    %c0_22 = arith.constant 0 : index
    %c0_23 = arith.constant 0 : index
    %37 = vector.load %arg7[%c0_22, %c0_23] : memref<128x128xbf16, #tpu.memory_space<vmem>>, vector<32x128xbf16>
    %cst_24 = arith.constant dense<0.000000e+00> : vector<64x128xf32>
    %38 = tpu.matmul %36, %37, %cst_24 {dimension_numbers = #tpu.dot_dimension_numbers<[1], [0], [0], [1], [0, 0, 1, 1], [], []>} : vector<64x32xbf16>, vector<32x128xbf16>, vector<64x128xf32> -> vector<64x128xf32>
    %39 = arith.addf %14, %38 : vector<64x128xf32>
    %40 = vector.extract_strided_slice %7 {offsets = [0, 32], sizes = [64, 32], strides = [1, 1]} : vector<64x128xbf16> to vector<64x32xbf16>
    %41 = vector.extract_strided_slice %10 {offsets = [0, 32], sizes = [128, 32], strides = [1, 1]} : vector<128x256xbf16> to vector<128x32xbf16>
    %42 = vector.extract_strided_slice %10 {offsets = [0, 160], sizes = [128, 32], strides = [1, 1]} : vector<128x256xbf16> to vector<128x32xbf16>
    "tpu.trace_start"() <{level = 10 : i32, message = "qd,kd->qk"}> : () -> ()
    %cst_25 = arith.constant dense<0.000000e+00> : vector<64x128xf32>
    %43 = tpu.matmul %40, %41, %cst_25 {dimension_numbers = #tpu.dot_dimension_numbers<[1], [1], [0], [0], [0, 0, 1, 0], [], []>} : vector<64x32xbf16>, vector<128x32xbf16>, vector<64x128xf32> -> vector<64x128xf32>
    "tpu.trace_stop"() : () -> ()
    %44 = arith.addf %43, %13 : vector<64x128xf32>
    %cst_26 = arith.constant dense<0xFF800000> : vector<64xf32>
    %45 = vector.multi_reduction <maximumf>, %44, %cst_26 [1] : vector<64x128xf32> to vector<64xf32>
    %46 = vector.shape_cast %45 : vector<64xf32> to vector<64x1xf32>
    %47 = vector.broadcast %46 : vector<64x1xf32> to vector<64x128xf32>
    %48 = arith.subf %44, %47 : vector<64x128xf32>
    %49 = math.exp %48 : vector<64x128xf32>
    %cst_27 = arith.constant dense<0.000000e+00> : vector<64xf32>
    %50 = vector.multi_reduction <add>, %49, %cst_27 [1] : vector<64x128xf32> to vector<64xf32>
    %51 = vector.shape_cast %50 : vector<64xf32> to vector<64x1xf32>
    %52 = tpu.reciprocal %51 {approx = true} : vector<64x1xf32> -> vector<64x1xf32>
    %53 = vector.broadcast %52 : vector<64x1xf32> to vector<64x128xf32>
    %54 = arith.mulf %49, %53 : vector<64x128xf32>
    %55 = arith.truncf %54 : vector<64x128xf32> to vector<64x128xbf16>
    %c0_28 = arith.constant 0 : index
    %c1 = arith.constant 1 : index
    %c0_29 = arith.constant 0 : index
    %c0_30 = arith.constant 0 : index
    %56 = vector.load %arg11[%c0_28, %c1, %c0_29, %c0_30] : memref<1x4x64x128xbf16, #tpu.memory_space<vmem>>, vector<1x1x64x128xbf16>
    %57 = vector.shape_cast %56 : vector<1x1x64x128xbf16> to vector<64x128xbf16>
    %58 = vector.shape_cast %55 : vector<64x128xbf16> to vector<1x1x64x128xbf16>
    tpu.vector_store %arg11[%c0_28, %c1, %c0_29, %c0_30], %58 {strides = array<i32>} : memref<1x4x64x128xbf16, #tpu.memory_space<vmem>>, vector<1x1x64x128xbf16>,
    %59 = arith.truncf %54 : vector<64x128xf32> to vector<64x128xbf16>
    %cst_31 = arith.constant dense<0.000000e+00> : vector<64x32xf32>
    %60 = tpu.matmul %59, %42, %cst_31 {dimension_numbers = #tpu.dot_dimension_numbers<[1], [0], [0], [1], [0, 0, 1, 1], [], []>} : vector<64x128xbf16>, vector<128x32xbf16>, vector<64x32xf32> -> vector<64x32xf32>
    %61 = arith.truncf %60 : vector<64x32xf32> to vector<64x32xbf16>
    %c32 = arith.constant 32 : index
    %c0_32 = arith.constant 0 : index
    %62 = vector.load %arg7[%c32, %c0_32] : memref<128x128xbf16, #tpu.memory_space<vmem>>, vector<32x128xbf16>
    %cst_33 = arith.constant dense<0.000000e+00> : vector<64x128xf32>
    %63 = tpu.matmul %61, %62, %cst_33 {dimension_numbers = #tpu.dot_dimension_numbers<[1], [0], [0], [1], [0, 0, 1, 1], [], []>} : vector<64x32xbf16>, vector<32x128xbf16>, vector<64x128xf32> -> vector<64x128xf32>
    %64 = arith.addf %39, %63 : vector<64x128xf32>
    %65 = vector.extract_strided_slice %7 {offsets = [0, 64], sizes = [64, 32], strides = [1, 1]} : vector<64x128xbf16> to vector<64x32xbf16>
    %66 = vector.extract_strided_slice %10 {offsets = [0, 64], sizes = [128, 32], strides = [1, 1]} : vector<128x256xbf16> to vector<128x32xbf16>
    %67 = vector.extract_strided_slice %10 {offsets = [0, 192], sizes = [128, 32], strides = [1, 1]} : vector<128x256xbf16> to vector<128x32xbf16>
    "tpu.trace_start"() <{level = 10 : i32, message = "qd,kd->qk"}> : () -> ()
    %cst_34 = arith.constant dense<0.000000e+00> : vector<64x128xf32>
    %68 = tpu.matmul %65, %66, %cst_34 {dimension_numbers = #tpu.dot_dimension_numbers<[1], [1], [0], [0], [0, 0, 1, 0], [], []>} : vector<64x32xbf16>, vector<128x32xbf16>, vector<64x128xf32> -> vector<64x128xf32>
    "tpu.trace_stop"() : () -> ()
    %69 = arith.addf %68, %13 : vector<64x128xf32>
    %cst_35 = arith.constant dense<0xFF800000> : vector<64xf32>
    %70 = vector.multi_reduction <maximumf>, %69, %cst_35 [1] : vector<64x128xf32> to vector<64xf32>
    %71 = vector.shape_cast %70 : vector<64xf32> to vector<64x1xf32>
    %72 = vector.broadcast %71 : vector<64x1xf32> to vector<64x128xf32>
    %73 = arith.subf %69, %72 : vector<64x128xf32>
    %74 = math.exp %73 : vector<64x128xf32>
    %cst_36 = arith.constant dense<0.000000e+00> : vector<64xf32>
    %75 = vector.multi_reduction <add>, %74, %cst_36 [1] : vector<64x128xf32> to vector<64xf32>
    %76 = vector.shape_cast %75 : vector<64xf32> to vector<64x1xf32>
    %77 = tpu.reciprocal %76 {approx = true} : vector<64x1xf32> -> vector<64x1xf32>
    %78 = vector.broadcast %77 : vector<64x1xf32> to vector<64x128xf32>
    %79 = arith.mulf %74, %78 : vector<64x128xf32>
    %80 = arith.truncf %79 : vector<64x128xf32> to vector<64x128xbf16>
    %c0_37 = arith.constant 0 : index
    %c2 = arith.constant 2 : index
    %c0_38 = arith.constant 0 : index
    %c0_39 = arith.constant 0 : index
    %81 = vector.load %arg11[%c0_37, %c2, %c0_38, %c0_39] : memref<1x4x64x128xbf16, #tpu.memory_space<vmem>>, vector<1x1x64x128xbf16>
    %82 = vector.shape_cast %81 : vector<1x1x64x128xbf16> to vector<64x128xbf16>
    %83 = vector.shape_cast %80 : vector<64x128xbf16> to vector<1x1x64x128xbf16>
    tpu.vector_store %arg11[%c0_37, %c2, %c0_38, %c0_39], %83 {strides = array<i32>} : memref<1x4x64x128xbf16, #tpu.memory_space<vmem>>, vector<1x1x64x128xbf16>,
    %84 = arith.truncf %79 : vector<64x128xf32> to vector<64x128xbf16>
    %cst_40 = arith.constant dense<0.000000e+00> : vector<64x32xf32>
    %85 = tpu.matmul %84, %67, %cst_40 {dimension_numbers = #tpu.dot_dimension_numbers<[1], [0], [0], [1], [0, 0, 1, 1], [], []>} : vector<64x128xbf16>, vector<128x32xbf16>, vector<64x32xf32> -> vector<64x32xf32>
    %86 = arith.truncf %85 : vector<64x32xf32> to vector<64x32xbf16>
    %c64 = arith.constant 64 : index
    %c0_41 = arith.constant 0 : index
    %87 = vector.load %arg7[%c64, %c0_41] : memref<128x128xbf16, #tpu.memory_space<vmem>>, vector<32x128xbf16>
    %cst_42 = arith.constant dense<0.000000e+00> : vector<64x128xf32>
    %88 = tpu.matmul %86, %87, %cst_42 {dimension_numbers = #tpu.dot_dimension_numbers<[1], [0], [0], [1], [0, 0, 1, 1], [], []>} : vector<64x32xbf16>, vector<32x128xbf16>, vector<64x128xf32> -> vector<64x128xf32>
    %89 = arith.addf %64, %88 : vector<64x128xf32>
    %90 = vector.extract_strided_slice %7 {offsets = [0, 96], sizes = [64, 32], strides = [1, 1]} : vector<64x128xbf16> to vector<64x32xbf16>
    %91 = vector.extract_strided_slice %10 {offsets = [0, 96], sizes = [128, 32], strides = [1, 1]} : vector<128x256xbf16> to vector<128x32xbf16>
    %92 = vector.extract_strided_slice %10 {offsets = [0, 224], sizes = [128, 32], strides = [1, 1]} : vector<128x256xbf16> to vector<128x32xbf16>
    "tpu.trace_start"() <{level = 10 : i32, message = "qd,kd->qk"}> : () -> ()
    %cst_43 = arith.constant dense<0.000000e+00> : vector<64x128xf32>
    %93 = tpu.matmul %90, %91, %cst_43 {dimension_numbers = #tpu.dot_dimension_numbers<[1], [1], [0], [0], [0, 0, 1, 0], [], []>} : vector<64x32xbf16>, vector<128x32xbf16>, vector<64x128xf32> -> vector<64x128xf32>
    "tpu.trace_stop"() : () -> ()
    %94 = arith.addf %93, %13 : vector<64x128xf32>
    %cst_44 = arith.constant dense<0xFF800000> : vector<64xf32>
    %95 = vector.multi_reduction <maximumf>, %94, %cst_44 [1] : vector<64x128xf32> to vector<64xf32>
    %96 = vector.shape_cast %95 : vector<64xf32> to vector<64x1xf32>
    %97 = vector.broadcast %96 : vector<64x1xf32> to vector<64x128xf32>
    %98 = arith.subf %94, %97 : vector<64x128xf32>
    %99 = math.exp %98 : vector<64x128xf32>
    %cst_45 = arith.constant dense<0.000000e+00> : vector<64xf32>
    %100 = vector.multi_reduction <add>, %99, %cst_45 [1] : vector<64x128xf32> to vector<64xf32>
    %101 = vector.shape_cast %100 : vector<64xf32> to vector<64x1xf32>
    %102 = tpu.reciprocal %101 {approx = true} : vector<64x1xf32> -> vector<64x1xf32>
    %103 = vector.broadcast %102 : vector<64x1xf32> to vector<64x128xf32>
    %104 = arith.mulf %99, %103 : vector<64x128xf32>
    %105 = arith.truncf %104 : vector<64x128xf32> to vector<64x128xbf16>
    %c0_46 = arith.constant 0 : index
    %c3 = arith.constant 3 : index
    %c0_47 = arith.constant 0 : index
    %c0_48 = arith.constant 0 : index
    %106 = vector.load %arg11[%c0_46, %c3, %c0_47, %c0_48] : memref<1x4x64x128xbf16, #tpu.memory_space<vmem>>, vector<1x1x64x128xbf16>
    %107 = vector.shape_cast %106 : vector<1x1x64x128xbf16> to vector<64x128xbf16>
    %108 = vector.shape_cast %105 : vector<64x128xbf16> to vector<1x1x64x128xbf16>
    tpu.vector_store %arg11[%c0_46, %c3, %c0_47, %c0_48], %108 {strides = array<i32>} : memref<1x4x64x128xbf16, #tpu.memory_space<vmem>>, vector<1x1x64x128xbf16>,
    %109 = arith.truncf %104 : vector<64x128xf32> to vector<64x128xbf16>
    %cst_49 = arith.constant dense<0.000000e+00> : vector<64x32xf32>
    %110 = tpu.matmul %109, %92, %cst_49 {dimension_numbers = #tpu.dot_dimension_numbers<[1], [0], [0], [1], [0, 0, 1, 1], [], []>} : vector<64x128xbf16>, vector<128x32xbf16>, vector<64x32xf32> -> vector<64x32xf32>
    %111 = arith.truncf %110 : vector<64x32xf32> to vector<64x32xbf16>
    %c96 = arith.constant 96 : index
    %c0_50 = arith.constant 0 : index
    %112 = vector.load %arg7[%c96, %c0_50] : memref<128x128xbf16, #tpu.memory_space<vmem>>, vector<32x128xbf16>
    %cst_51 = arith.constant dense<0.000000e+00> : vector<64x128xf32>
    %113 = tpu.matmul %111, %112, %cst_51 {dimension_numbers = #tpu.dot_dimension_numbers<[1], [0], [0], [1], [0, 0, 1, 1], [], []>} : vector<64x32xbf16>, vector<32x128xbf16>, vector<64x128xf32> -> vector<64x128xf32>
    %114 = arith.addf %89, %113 : vector<64x128xf32>
    %115 = arith.addf %114, %1 : vector<64x128xf32>
    %cst_52 = arith.constant dense<0.000000e+00> : vector<64xf32>
    %116 = vector.multi_reduction <add>, %115, %cst_52 [1] : vector<64x128xf32> to vector<64xf32>
    %117 = vector.shape_cast %116 : vector<64xf32> to vector<64x1xf32>
    %cst_53 = arith.constant 1.280000e+02 : f32
    %118 = vector.broadcast %cst_53 : f32 to vector<64x1xf32>
    %119 = arith.divf %117, %118 : vector<64x1xf32>
    %120 = vector.broadcast %119 : vector<64x1xf32> to vector<64x128xf32>
    %121 = arith.subf %115, %120 : vector<64x128xf32>
    %122 = arith.mulf %121, %121 : vector<64x128xf32>
    %cst_54 = arith.constant dense<0.000000e+00> : vector<64xf32>
    %123 = vector.multi_reduction <add>, %122, %cst_54 [1] : vector<64x128xf32> to vector<64xf32>
    %124 = vector.shape_cast %123 : vector<64xf32> to vector<64x1xf32>
    %cst_55 = arith.constant 1.280000e+02 : f32
    %125 = vector.broadcast %cst_55 : f32 to vector<64x1xf32>
    %126 = arith.divf %124, %125 : vector<64x1xf32>
    %127 = vector.broadcast %119 : vector<64x1xf32> to vector<64x128xf32>
    %128 = arith.subf %115, %127 : vector<64x128xf32>
    %cst_56 = arith.constant 9.99999974E-6 : f32
    %129 = vector.broadcast %cst_56 : f32 to vector<64x1xf32>
    %130 = arith.addf %126, %129 : vector<64x1xf32>
    %131 = math.rsqrt %130 : vector<64x1xf32>
    %132 = vector.broadcast %131 : vector<64x1xf32> to vector<64x128xf32>
    %133 = arith.mulf %128, %132 : vector<64x128xf32>
    %134 = arith.truncf %133 : vector<64x128xf32> to vector<64x128xbf16>
    %c0_57 = arith.constant 0 : index
    %c0_58 = arith.constant 0 : index
    %135 = vector.load %arg8[%c0_57, %c0_58] : memref<128x256xbf16, #tpu.memory_space<vmem>>, vector<128x256xbf16>
    %cst_59 = arith.constant dense<0.000000e+00> : vector<64x256xf32>
    %136 = tpu.matmul %134, %135, %cst_59 {dimension_numbers = #tpu.dot_dimension_numbers<[1], [0], [0], [1], [0, 0, 1, 1], [], []>} : vector<64x128xbf16>, vector<128x256xbf16>, vector<64x256xf32> -> vector<64x256xf32>
    %cst_60 = arith.constant 0.000000e+00 : f32
    %137 = vector.broadcast %cst_60 : f32 to vector<64x256xf32>
    %138 = arith.maximumf %136, %137 : vector<64x256xf32>
    %139 = arith.truncf %138 : vector<64x256xf32> to vector<64x256xbf16>
    %c0_61 = arith.constant 0 : index
    %c0_62 = arith.constant 0 : index
    %140 = vector.load %arg9[%c0_61, %c0_62] : memref<256x128xbf16, #tpu.memory_space<vmem>>, vector<256x128xbf16>
    %cst_63 = arith.constant dense<0.000000e+00> : vector<64x128xf32>
    %141 = tpu.matmul %139, %140, %cst_63 {dimension_numbers = #tpu.dot_dimension_numbers<[1], [0], [0], [1], [0, 0, 1, 1], [], []>} : vector<64x256xbf16>, vector<256x128xbf16>, vector<64x128xf32> -> vector<64x128xf32>
    %142 = arith.addf %141, %133 : vector<64x128xf32>
    %cst_64 = arith.constant dense<0.000000e+00> : vector<64xf32>
    %143 = vector.multi_reduction <add>, %142, %cst_64 [1] : vector<64x128xf32> to vector<64xf32>
    %144 = vector.shape_cast %143 : vector<64xf32> to vector<64x1xf32>
    %cst_65 = arith.constant 1.280000e+02 : f32
    %145 = vector.broadcast %cst_65 : f32 to vector<64x1xf32>
    %146 = arith.divf %144, %145 : vector<64x1xf32>
    %147 = vector.broadcast %146 : vector<64x1xf32> to vector<64x128xf32>
    %148 = arith.subf %142, %147 : vector<64x128xf32>
    %149 = arith.mulf %148, %148 : vector<64x128xf32>
    %cst_66 = arith.constant dense<0.000000e+00> : vector<64xf32>
    %150 = vector.multi_reduction <add>, %149, %cst_66 [1] : vector<64x128xf32> to vector<64xf32>
    %151 = vector.shape_cast %150 : vector<64xf32> to vector<64x1xf32>
    %cst_67 = arith.constant 1.280000e+02 : f32
    %152 = vector.broadcast %cst_67 : f32 to vector<64x1xf32>
    %153 = arith.divf %151, %152 : vector<64x1xf32>
    %154 = vector.broadcast %146 : vector<64x1xf32> to vector<64x128xf32>
    %155 = arith.subf %142, %154 : vector<64x128xf32>
    %cst_68 = arith.constant 9.99999974E-6 : f32
    %156 = vector.broadcast %cst_68 : f32 to vector<64x1xf32>
    %157 = arith.addf %153, %156 : vector<64x1xf32>
    %158 = math.rsqrt %157 : vector<64x1xf32>
    %159 = vector.broadcast %158 : vector<64x1xf32> to vector<64x128xf32>
    %160 = arith.mulf %155, %159 : vector<64x128xf32>
    %c0_69 = arith.constant 0 : index
    %c0_70 = arith.constant 0 : index
    %c0_71 = arith.constant 0 : index
    %161 = vector.load %arg10[%c0_69, %c0_70, %c0_71] : memref<1x64x128xf32, #tpu.memory_space<vmem>>, vector<1x64x128xf32>
    %162 = vector.shape_cast %161 : vector<1x64x128xf32> to vector<64x128xf32>
    %163 = vector.shape_cast %160 : vector<64x128xf32> to vector<1x64x128xf32>
    tpu.vector_store %arg10[%c0_69, %c0_70, %c0_71], %163 {strides = array<i32>} : memref<1x64x128xf32, #tpu.memory_space<vmem>>, vector<1x64x128xf32>,
    return
  }
  func.func @transform_0(%arg0: i32, %arg1: i32) -> (i32, i32, i32) {
    %c0_i32 = arith.constant 0 : i32
    %c0_i32_0 = arith.constant 0 : i32
    return %arg0, %arg1, %c0_i32 : i32, i32, i32
  }
  func.func @transform_1(%arg0: i32, %arg1: i32) -> (i32, i32, i32) {
    %c0_i32 = arith.constant 0 : i32
    %c0_i32_0 = arith.constant 0 : i32
    %c0_i32_1 = arith.constant 0 : i32
    return %arg0, %c0_i32, %c0_i32_0 : i32, i32, i32
  }
  func.func @transform_2(%arg0: i32, %arg1: i32) -> (i32, i32, i32) {
    %c0_i32 = arith.constant 0 : i32
    %c0_i32_0 = arith.constant 0 : i32
    return %arg0, %arg1, %c0_i32 : i32, i32, i32
  }
  func.func @transform_3(%arg0: i32, %arg1: i32) -> (i32, i32) {
    %c0_i32 = arith.constant 0 : i32
    %c0_i32_0 = arith.constant 0 : i32
    %c0_i32_1 = arith.constant 0 : i32
    return %c0_i32, %c0_i32_0 : i32, i32
  }
  func.func @transform_4(%arg0: i32, %arg1: i32) -> (i32, i32) {
    %c0_i32 = arith.constant 0 : i32
    %c0_i32_0 = arith.constant 0 : i32
    %c0_i32_1 = arith.constant 0 : i32
    return %c0_i32, %c0_i32_0 : i32, i32
  }
  func.func @transform_5(%arg0: i32, %arg1: i32) -> (i32, i32) {
    %c0_i32 = arith.constant 0 : i32
    %c0_i32_0 = arith.constant 0 : i32
    %c0_i32_1 = arith.constant 0 : i32
    return %c0_i32, %c0_i32_0 : i32, i32
  }
  func.func @transform_6(%arg0: i32, %arg1: i32) -> (i32, i32) {
    %c0_i32 = arith.constant 0 : i32
    %c0_i32_0 = arith.constant 0 : i32
    %c0_i32_1 = arith.constant 0 : i32
    return %c0_i32, %c0_i32_0 : i32, i32
  }
  func.func @transform_7(%arg0: i32, %arg1: i32) -> (i32, i32) {
    %c0_i32 = arith.constant 0 : i32
    %c0_i32_0 = arith.constant 0 : i32
    %c0_i32_1 = arith.constant 0 : i32
    return %c0_i32, %c0_i32_0 : i32, i32
  }
  func.func @transform_8(%arg0: i32, %arg1: i32) -> (i32, i32, i32) {
    %c0_i32 = arith.constant 0 : i32
    %c0_i32_0 = arith.constant 0 : i32
    return %arg0, %arg1, %c0_i32 : i32, i32, i32
  }
  func.func @transform_9(%arg0: i32, %arg1: i32) -> (i32, i32, i32, i32) {
    %c0_i32 = arith.constant 0 : i32
    %c0_i32_0 = arith.constant 0 : i32
    %c0_i32_1 = arith.constant 0 : i32
    return %arg0, %c0_i32, %arg1, %c0_i32_0 : i32, i32, i32, i32
  }
}

</mosaic_0001>

<llo_original>
// kernel: tpu_custom_call.1
$region0: #{tpu_custom_call.1}
  #allocation0 [shape = 'u32[]', space=smem, size = 0x4, offset = 0x4, fixed_abs, tag = 'smem constant byte address 0x4 - core index']
  #allocation1 [shape = 'u32[144,128]{1,0:T(1,128)}', space=vmem, size = 0x12000, scoped, tag = 'internal scratch']
  #allocation19 [shape = 's32[]', space=sflag, size = 0x4, offset = 0, fixed_abs, tag = 'sflag constant byte address 0x0 - dummy sync flag']
  %s0 = inlined_call_operand.hbm [shape: f32[2,128,128], index: 0, kind: input, shape index: {}]
  %s1 = inlined_call_operand.hbm [shape: bf16[2,128,128], index: 1, kind: input, shape index: {}]
  %s2 = inlined_call_operand.hbm [shape: bf16[2,128,128], index: 2, kind: input, shape index: {}]
  %s3 = inlined_call_operand.hbm [shape: bf16[128,128], index: 3, kind: input, shape index: {}]
  %s4 = inlined_call_operand.hbm [shape: bf16[128,256], index: 4, kind: input, shape index: {}]
  %s5 = inlined_call_operand.hbm [shape: bf16[128,128], index: 5, kind: input, shape index: {}]
  %s6 = inlined_call_operand.hbm [shape: bf16[128,256], index: 6, kind: input, shape index: {}]
  %s7 = inlined_call_operand.hbm [shape: bf16[256,128], index: 7, kind: input, shape index: {}]
  %s8 = inlined_call_operand.hbm [shape: f32[2,128,128], index: 8, kind: output, shape index: {0}]
  %s9 = inlined_call_operand.hbm [shape: bf16[2,4,128,128], index: 9, kind: output, shape index: {1}]
  %10 = xla_tuple %s8, %s9
  %s11 = sld [smem:[#allocation0]]
  $region105: #{tpu_custom_call.1} parent=0
    _
  %s13 = ssub.s32 1, %s11
  %s14 = scalar_select 0, %s13, %s11
  $region1: #{tpu_custom_call.1} parent=0
    #allocation2 [shape = 'u8[65536]{0}', space=vmem, size = 0x10000, scoped, tag = 'input window, operand 0']
    #allocation3 [shape = 's32[2]{0}', space=sflag, size = 0x8, scoped, tag = 'scoped memory for tpu_custom_call.1']
    #allocation4 [shape = 's32[2]{0}', space=sflag, size = 0x8, scoped, tag = 'scoped memory for tpu_custom_call.1']
    #allocation5 [shape = 'u8[65536]{0}', space=vmem, size = 0x10000, scoped, tag = 'input window, operand 1']
    #allocation6 [shape = 's32[2]{0}', space=sflag, size = 0x8, scoped, tag = 'scoped memory for tpu_custom_call.1']
    #allocation7 [shape = 'u8[32768]{0}', space=vmem, size = 0x8000, scoped, tag = 'input window, operand 2']
    #allocation8 [shape = 'u8[32768]{0}', space=vmem, size = 0x8000, scoped, tag = 'input window, operand 3, single buffered']
    #allocation9 [shape = 's32[1]{0}', space=sflag, size = 0x4, scoped, tag = 'scoped memory for tpu_custom_call.1']
    #allocation10 [shape = 'u8[65536]{0}', space=vmem, size = 0x10000, scoped, tag = 'input window, operand 4, single buffered']
    #allocation11 [shape = 'u8[32768]{0}', space=vmem, size = 0x8000, scoped, tag = 'input window, operand 5, single buffered']
    #allocation12 [shape = 's32[1]{0}', space=sflag, size = 0x4, scoped, tag = 'scoped memory for tpu_custom_call.1']
    #allocation13 [shape = 'u8[65536]{0}', space=vmem, size = 0x10000, scoped, tag = 'input window, operand 6, single buffered']
    #allocation14 [shape = 'u8[65536]{0}', space=vmem, size = 0x10000, scoped, tag = 'input window, operand 7, single buffered']
    #allocation15 [shape = 's32[1]{0}', space=sflag, size = 0x4, scoped, tag = 'scoped memory for tpu_custom_call.1']
    #allocation16 [shape = 'u8[65536]{0}', space=vmem, size = 0x10000, scoped, tag = 'output window, operand 0']
    #allocation17 [shape = 'u8[131072]{0}', space=vmem, size = 0x20000, scoped, tag = 'output window, operand 1']
    #allocation18 [shape = 's32[2]{0}', space=sflag, size = 0x8, scoped, tag = 'scoped memory for tpu_custom_call.1']
    %15 = vsyncpa [#allocation3], 0
    %s16 = scalar_lea.sflag [#allocation3], 1
    %17 = vsyncpa %s16, 0
    %18 = vsyncpa [#allocation6], 0
    %s19 = scalar_lea.sflag [#allocation6], 1
    %20 = vsyncpa %s19, 0
    %21 = vsyncpa [#allocation9], 0
    %22 = vsyncpa [#allocation12], 0
    %23 = vsyncpa [#allocation15], 0
    %24 = vsyncpa [#allocation4], 0
    %s25 = scalar_lea.sflag [#allocation4], 1
    %26 = vsyncpa %s25, 0
    %27 = vsyncpa [#allocation18], 0
    %s28 = scalar_lea.sflag [#allocation18], 1
    %29 = vsyncpa %s28, 0
    loop: start=0, step=1, limit=6
    $region2: #{tpu_custom_call.1} parent=1 // loop_pre_header
      _
    $region3: #{tpu_custom_call.1} parent=1 // loop_header
      %s31 = sphi 0, %s35
      %p32 = scmp.ge.s32.totalorder %s31, 6
      %s38 = sphi 0, %s50
      %s39 = sphi 0, %s46
      %s40 = sphi 0, %s38
      %s41 = sphi 0, %s39
      %s42 = sphi 0, %s40
      %s43 = sphi 0, %s41
      %s55 = sphi 0, %s57
      %s58 = sphi 0, %s55
      %s59 = sphi 0, %s58
      %s75 = sphi 0, %s59
      %s81 = sphi 0, %s83
      %s84 = sphi 0, %s81
      %s85 = sphi 0, %s84
      %s101 = sphi 0, %s85
      %s109 = sphi 0, %s111
      %s112 = sphi 0, %s109
      %s113 = sphi 0, %s112
      %s129 = sphi 0, %s113
      %s133 = sphi 0, %s133
      %s135 = sphi 0, %s133
      %s136 = sphi 0, %s135
      %s150 = sphi 0, %s136
      %s154 = sphi 0, %s154
      %s156 = sphi 0, %s154
      %s157 = sphi 0, %s156
      %s171 = sphi 0, %s157
      %s175 = sphi 0, %s175
      %s177 = sphi 0, %s175
      %s178 = sphi 0, %s177
      %s192 = sphi 0, %s178
      %s196 = sphi 0, %s196
      %s198 = sphi 0, %s196
      %s199 = sphi 0, %s198
      %s213 = sphi 0, %s199
      %s217 = sphi 0, %s217
      %s219 = sphi 0, %s217
      %s220 = sphi 0, %s219
      %s234 = sphi 0, %s220
      %s242 = sphi 0, %s244
      %s245 = sphi 0, %s242
      %s246 = sphi 0, %s245
      %s262 = sphi 0, %s246
      %s270 = sphi 0, %s272
      %s273 = sphi 0, %s270
      %s274 = sphi 0, %s273
      %s290 = sphi 0, %s274
    $region4: #{tpu_custom_call.1} parent=1 // loop_header_branch
      %34 = sbr.rel (%p32) target = $region8
    $region5: #{tpu_custom_call.1} parent=1 // loop_body
      %s36 = ssub.s32 %s31, 1
      %s37 = ssub.s32 %s31, 2
      %s44 = sadd.s32 1, %s39
      %p45 = scmp.ge.s32.totalorder %s44, 2
      %s46 = scalar_select %p45, 0, %s44
      %s47 = sadd.s32 1, %s38
      %s48 = scalar_select %p45, %s47, %s38
      %p49 = scmp.ge.s32.totalorder %s48, 2
      %s50 = scalar_select %p49, 0, %s48
      %s51 = ssub.s32 %s38, %s50
      %s52 = ssub.s32 %s39, %s46
      %s53 = sor.u32 %s51, %s52
      %p54 = scmp.eq.s32.totalorder %s53, 0
      %s56 = sadd.s32 %s55, 1
      %s57 = scalar_select %p54, %s55, %s56
      %p60 = pneg %p54
      %p61 = scmp.eq.s32.totalorder %s31, 3
      %p62 = por %p60, %p61
      %p63 = scmp.ne.s32.totalorder %s55, %s58
      %p64 = scmp.eq.s32.totalorder %s31, 0
      %p65 = por %p63, %p64
      %p66 = scmp.ne.s32.totalorder %s55, %s58
      %p67 = scmp.eq.s32.totalorder %s36, 3
      %p68 = por %p66, %p67
      %p69 = scmp.ne.s32.totalorder %s58, %s59
      %p70 = scmp.eq.s32.totalorder %s36, 0
      %p71 = por %p69, %p70
      %p72 = scmp.ne.s32.totalorder %s58, %s59
      %p73 = scmp.eq.s32.totalorder %s37, 3
      %p74 = por %p72, %p73
      %p76 = scmp.ne.s32.totalorder %s59, %s75
      %p77 = scmp.eq.s32.totalorder %s37, 0
      %p78 = por %p76, %p77
      %s79 = ssub.s32 %s38, %s50
      %p80 = scmp.eq.s32.totalorder %s79, 0
      %s82 = sadd.s32 %s81, 1
      %s83 = scalar_select %p80, %s81, %s82
      %p86 = pneg %p80
      %p87 = scmp.eq.s32.totalorder %s31, 3
      %p88 = por %p86, %p87
      %p89 = scmp.ne.s32.totalorder %s81, %s84
      %p90 = scmp.eq.s32.totalorder %s31, 0
      %p91 = por %p89, %p90
      %p92 = scmp.ne.s32.totalorder %s81, %s84
      %p93 = scmp.eq.s32.totalorder %s36, 3
      %p94 = por %p92, %p93
      %p95 = scmp.ne.s32.totalorder %s84, %s85
      %p96 = scmp.eq.s32.totalorder %s36, 0
      %p97 = por %p95, %p96
      %p98 = scmp.ne.s32.totalorder %s84, %s85
      %p99 = scmp.eq.s32.totalorder %s37, 3
      %p100 = por %p98, %p99
      %p102 = scmp.ne.s32.totalorder %s85, %s101
      %p103 = scmp.eq.s32.totalorder %s37, 0
      %p104 = por %p102, %p103
      %s105 = ssub.s32 %s38, %s50
      %s106 = ssub.s32 %s39, %s46
      %s107 = sor.u32 %s105, %s106
      %p108 = scmp.eq.s32.totalorder %s107, 0
      %s110 = sadd.s32 %s109, 1
      %s111 = scalar_select %p108, %s109, %s110
      %p114 = pneg %p108
      %p115 = scmp.eq.s32.totalorder %s31, 3
      %p116 = por %p114, %p115
      %p117 = scmp.ne.s32.totalorder %s109, %s112
      %p118 = scmp.eq.s32.totalorder %s31, 0
      %p119 = por %p117, %p118
      %p120 = scmp.ne.s32.totalorder %s109, %s112
      %p121 = scmp.eq.s32.totalorder %s36, 3
      %p122 = por %p120, %p121
      %p123 = scmp.ne.s32.totalorder %s112, %s113
      %p124 = scmp.eq.s32.totalorder %s36, 0
      %p125 = por %p123, %p124
      %p126 = scmp.ne.s32.totalorder %s112, %s113
      %p127 = scmp.eq.s32.totalorder %s37, 3
      %p128 = por %p126, %p127
      %p130 = scmp.ne.s32.totalorder %s113, %s129
      %p131 = scmp.eq.s32.totalorder %s37, 0
      %p132 = por %p130, %p131
      %s134 = sadd.s32 %s133, 1
      %p137 = scmp.eq.s32.totalorder %s31, 3
      %p138 = scmp.ne.s32.totalorder %s133, %s135
      %p139 = scmp.eq.s32.totalorder %s31, 0
      %p140 = por %p138, %p139
      %p141 = scmp.ne.s32.totalorder %s133, %s135
      %p142 = scmp.eq.s32.totalorder %s36, 3
      %p143 = por %p141, %p142
      %p144 = scmp.ne.s32.totalorder %s135, %s136
      %p145 = scmp.eq.s32.totalorder %s36, 0
      %p146 = por %p144, %p145
      %p147 = scmp.ne.s32.totalorder %s135, %s136
      %p148 = scmp.eq.s32.totalorder %s37, 3
      %p149 = por %p147, %p148
      %p151 = scmp.ne.s32.totalorder %s136, %s150
      %p152 = scmp.eq.s32.totalorder %s37, 0
      %p153 = por %p151, %p152
      %s155 = sadd.s32 %s154, 1
      %p158 = scmp.eq.s32.totalorder %s31, 3
      %p159 = scmp.ne.s32.totalorder %s154, %s156
      %p160 = scmp.eq.s32.totalorder %s31, 0
      %p161 = por %p159, %p160
      %p162 = scmp.ne.s32.totalorder %s154, %s156
      %p163 = scmp.eq.s32.totalorder %s36, 3
      %p164 = por %p162, %p163
      %p165 = scmp.ne.s32.totalorder %s156, %s157
      %p166 = scmp.eq.s32.totalorder %s36, 0
      %p167 = por %p165, %p166
      %p168 = scmp.ne.s32.totalorder %s156, %s157
      %p169 = scmp.eq.s32.totalorder %s37, 3
      %p170 = por %p168, %p169
      %p172 = scmp.ne.s32.totalorder %s157, %s171
      %p173 = scmp.eq.s32.totalorder %s37, 0
      %p174 = por %p172, %p173
      %s176 = sadd.s32 %s175, 1
      %p179 = scmp.eq.s32.totalorder %s31, 3
      %p180 = scmp.ne.s32.totalorder %s175, %s177
      %p181 = scmp.eq.s32.totalorder %s31, 0
      %p182 = por %p180, %p181
      %p183 = scmp.ne.s32.totalorder %s175, %s177
      %p184 = scmp.eq.s32.totalorder %s36, 3
      %p185 = por %p183, %p184
      %p186 = scmp.ne.s32.totalorder %s177, %s178
      %p187 = scmp.eq.s32.totalorder %s36, 0
      %p188 = por %p186, %p187
      %p189 = scmp.ne.s32.totalorder %s177, %s178
      %p190 = scmp.eq.s32.totalorder %s37, 3
      %p191 = por %p189, %p190
      %p193 = scmp.ne.s32.totalorder %s178, %s192
      %p194 = scmp.eq.s32.totalorder %s37, 0
      %p195 = por %p193, %p194
      %s197 = sadd.s32 %s196, 1
      %p200 = scmp.eq.s32.totalorder %s31, 3
      %p201 = scmp.ne.s32.totalorder %s196, %s198
      %p202 = scmp.eq.s32.totalorder %s31, 0
      %p203 = por %p201, %p202
      %p204 = scmp.ne.s32.totalorder %s196, %s198
      %p205 = scmp.eq.s32.totalorder %s36, 3
      %p206 = por %p204, %p205
      %p207 = scmp.ne.s32.totalorder %s198, %s199
      %p208 = scmp.eq.s32.totalorder %s36, 0
      %p209 = por %p207, %p208
      %p210 = scmp.ne.s32.totalorder %s198, %s199
      %p211 = scmp.eq.s32.totalorder %s37, 3
      %p212 = por %p210, %p211
      %p214 = scmp.ne.s32.totalorder %s199, %s213
      %p215 = scmp.eq.s32.totalorder %s37, 0
      %p216 = por %p214, %p215
      %s218 = sadd.s32 %s217, 1
      %p221 = scmp.eq.s32.totalorder %s31, 3
      %p222 = scmp.ne.s32.totalorder %s217, %s219
      %p223 = scmp.eq.s32.totalorder %s31, 0
      %p224 = por %p222, %p223
      %p225 = scmp.ne.s32.totalorder %s217, %s219
      %p226 = scmp.eq.s32.totalorder %s36, 3
      %p227 = por %p225, %p226
      %p228 = scmp.ne.s32.totalorder %s219, %s220
      %p229 = scmp.eq.s32.totalorder %s36, 0
      %p230 = por %p228, %p229
      %p231 = scmp.ne.s32.totalorder %s219, %s220
      %p232 = scmp.eq.s32.totalorder %s37, 3
      %p233 = por %p231, %p232
      %p235 = scmp.ne.s32.totalorder %s220, %s234
      %p236 = scmp.eq.s32.totalorder %s37, 0
      %p237 = por %p235, %p236
      %s238 = ssub.s32 %s38, %s50
      %s239 = ssub.s32 %s39, %s46
      %s240 = sor.u32 %s238, %s239
      %p241 = scmp.eq.s32.totalorder %s240, 0
      %s243 = sadd.s32 %s242, 1
      %s244 = scalar_select %p241, %s242, %s243
      %p247 = pneg %p241
      %p248 = scmp.eq.s32.totalorder %s31, 3
      %p249 = por %p247, %p248
      %p250 = scmp.ne.s32.totalorder %s242, %s245
      %p251 = scmp.eq.s32.totalorder %s31, 0
      %p252 = por %p250, %p251
      %p253 = scmp.ne.s32.totalorder %s242, %s245
      %p254 = scmp.eq.s32.totalorder %s36, 3
      %p255 = por %p253, %p254
      %p256 = scmp.ne.s32.totalorder %s245, %s246
      %p257 = scmp.eq.s32.totalorder %s36, 0
      %p258 = por %p256, %p257
      %p259 = scmp.ne.s32.totalorder %s245, %s246
      %p260 = scmp.eq.s32.totalorder %s37, 3
      %p261 = por %p259, %p260
      %p263 = scmp.ne.s32.totalorder %s246, %s262
      %p264 = scmp.eq.s32.totalorder %s37, 0
      %p265 = por %p263, %p264
      %s266 = ssub.s32 %s38, %s50
      %s267 = ssub.s32 %s39, %s46
      %s268 = sor.u32 %s266, %s267
      %p269 = scmp.eq.s32.totalorder %s268, 0
      %s271 = sadd.s32 %s270, 1
      %s272 = scalar_select %p269, %s270, %s271
      %p275 = pneg %p269
      %p276 = scmp.eq.s32.totalorder %s31, 3
      %p277 = por %p275, %p276
      %p278 = scmp.ne.s32.totalorder %s270, %s273
      %p279 = scmp.eq.s32.totalorder %s31, 0
      %p280 = por %p278, %p279
      %p281 = scmp.ne.s32.totalorder %s270, %s273
      %p282 = scmp.eq.s32.totalorder %s36, 3
      %p283 = por %p281, %p282
      %p284 = scmp.ne.s32.totalorder %s273, %s274
      %p285 = scmp.eq.s32.totalorder %s36, 0
      %p286 = por %p284, %p285
      %p287 = scmp.ne.s32.totalorder %s273, %s274
      %p288 = scmp.eq.s32.totalorder %s37, 3
      %p289 = por %p287, %p288
      %p291 = scmp.ne.s32.totalorder %s274, %s290
      %p292 = scmp.eq.s32.totalorder %s37, 0
      %p293 = por %p291, %p292
      %p294 = scmp.le.s32.totalorder 1, %s31
      %p295 = scmp.lt.s32.totalorder %s31, 5
      %p296 = pnand %p294, %p295
      %p297 = pneg %p296
      // Predicated region
      $region9: #{tpu_custom_call.1} parent=5 // pred_check
        _
      $region10: #{tpu_custom_call.1} parent=5 // pred_check_branch
        %299 = sbr.rel (%p296) target = $region12
      $region11: #{tpu_custom_call.1} parent=5 // pred_region
        %s300 = ssub.s32 %s31, 1
        // Predicated region
        $region13: #{tpu_custom_call.1} parent=11 // pred_check
          %p301 = pneg %p146
        $region14: #{tpu_custom_call.1} parent=11 // pred_check_branch
          %303 = sbr.rel (%p301) target = $region16
        $region15: #{tpu_custom_call.1} parent=11 // pred_region
          %s305 = ssub.s32 1024, 1024
          %306 = vsyncadd [#allocation9], %s305
          %s307 = sshll.u32 [#allocation8], 4
          %s308 = int_to_ptr.vmem [resolvable:$true] %s307
          %313 = dma.hbm_to_vmem [thread:$0]  %s3, 1024, %s308, [#allocation9], 64, 64, 4
        $region16: #{tpu_custom_call.1} parent=11 // pred_fallthru
          _
        // Predicated region
        $region17: #{tpu_custom_call.1} parent=11 // pred_check
          %p314 = pneg %p167
        $region18: #{tpu_custom_call.1} parent=11 // pred_check_branch
          %316 = sbr.rel (%p314) target = $region20
        $region19: #{tpu_custom_call.1} parent=11 // pred_region
          %s318 = ssub.s32 2048, 2048
          %319 = vsyncadd [#allocation9], %s318
          %s320 = sshll.u32 [#allocation10], 4
          %s321 = int_to_ptr.vmem [resolvable:$true] %s320
          %326 = dma.hbm_to_vmem [thread:$0]  %s4, 2048, %s321, [#allocation9], 128, 128, 8
        $region20: #{tpu_custom_call.1} parent=11 // pred_fallthru
          _
        // Predicated region
        $region21: #{tpu_custom_call.1} parent=11 // pred_check
          %p327 = pneg %p188
        $region22: #{tpu_custom_call.1} parent=11 // pred_check_branch
          %329 = sbr.rel (%p327) target = $region24
        $region23: #{tpu_custom_call.1} parent=11 // pred_region
          %s331 = ssub.s32 1024, 1024
          %332 = vsyncadd [#allocation12], %s331
          %s333 = sshll.u32 [#allocation11], 4
          %s334 = int_to_ptr.vmem [resolvable:$true] %s333
          %339 = dma.hbm_to_vmem [thread:$0]  %s5, 1024, %s334, [#allocation12], 64, 64, 4
        $region24: #{tpu_custom_call.1} parent=11 // pred_fallthru
          _
        // Predicated region
        $region25: #{tpu_custom_call.1} parent=11 // pred_check
          %p340 = pneg %p209
        $region26: #{tpu_custom_call.1} parent=11 // pred_check_branch
          %342 = sbr.rel (%p340) target = $region28
        $region27: #{tpu_custom_call.1} parent=11 // pred_region
          %s344 = ssub.s32 2048, 2048
          %345 = vsyncadd [#allocation12], %s344
          %s346 = sshll.u32 [#allocation13], 4
          %s347 = int_to_ptr.vmem [resolvable:$true] %s346
          %352 = dma.hbm_to_vmem [thread:$0]  %s6, 2048, %s347, [#allocation12], 128, 128, 8
        $region28: #{tpu_custom_call.1} parent=11 // pred_fallthru
          _
        // Predicated region
        $region29: #{tpu_custom_call.1} parent=11 // pred_check
          %p353 = pneg %p230
        $region30: #{tpu_custom_call.1} parent=11 // pred_check_branch
          %355 = sbr.rel (%p353) target = $region32
        $region31: #{tpu_custom_call.1} parent=11 // pred_region
          %s357 = ssub.s32 2048, 2048
          %358 = vsyncadd [#allocation15], %s357
          %s359 = sshll.u32 [#allocation14], 4
          %s360 = int_to_ptr.vmem [resolvable:$true] %s359
          %365 = dma.hbm_to_vmem [thread:$0]  %s7, 2048, %s360, [#allocation15], 64, 64, 4
        $region32: #{tpu_custom_call.1} parent=11 // pred_fallthru
          _
      $region12: #{tpu_custom_call.1} parent=5 // pred_fallthru
        _
      %p366 = scmp.lt.s32.totalorder %s31, 4
      // Predicated region
      $region33: #{tpu_custom_call.1} parent=5 // pred_check
        %p367 = pneg %p366
      $region34: #{tpu_custom_call.1} parent=5 // pred_check_branch
        %369 = sbr.rel (%p367) target = $region36
      $region35: #{tpu_custom_call.1} parent=5 // pred_region
        // Predicated region
        $region37: #{tpu_custom_call.1} parent=35 // pred_check
          %p370 = pneg %p65
        $region38: #{tpu_custom_call.1} parent=35 // pred_check_branch
          %372 = sbr.rel (%p370) target = $region40
        $region39: #{tpu_custom_call.1} parent=35 // pred_region
          %s373 = sand.u32 %s55, 1
          %s374 = scalar_lea.sflag [#allocation3], %s373
          %s375 = sand.u32 %s55, 1
          %s376 = smul.addr %s375, 64
          %s377 = scalar_lea.vmem [#allocation2], %s376
          %s378 = smul.u32 8, %s39
          %s380 = ssub.s32 1024, 1024
          %381 = vsyncadd %s374, %s380
          %s382 = smul.addr %s38, 16
          %s383 = sadd.s32 %s378, %s382
          %s384 = smul.addr %s383, 128
          %s385 = scalar_lea.hbm %s0, %s384
          %s386 = sshll.u32 %s377, 4
          %s387 = int_to_ptr.vmem [resolvable:$true] %s386
          %392 = dma.hbm_to_vmem [thread:$0]  %s385, 1024, %s387, %s374, 128, 128, 8
        $region40: #{tpu_custom_call.1} parent=35 // pred_fallthru
          _
        // Predicated region
        $region41: #{tpu_custom_call.1} parent=35 // pred_check
          %p393 = pneg %p91
        $region42: #{tpu_custom_call.1} parent=35 // pred_check_branch
          %395 = sbr.rel (%p393) target = $region44
        $region43: #{tpu_custom_call.1} parent=35 // pred_region
          %s396 = sand.u32 %s31, 1
          %s397 = scalar_lea.sflag [#allocation6], %s396
          %s398 = sand.u32 %s81, 1
          %s399 = smul.addr %s398, 64
          %s400 = scalar_lea.vmem [#allocation5], %s399
          %s402 = ssub.s32 1024, 1024
          %403 = vsyncadd %s397, %s402
          %s404 = smul.addr %s38, 16
          %s405 = smul.addr %s404, 64
          %s406 = scalar_lea.hbm %s1, %s405
          %s407 = sshll.u32 %s400, 4
          %s408 = int_to_ptr.vmem [resolvable:$true] %s407
          %413 = dma.hbm_to_vmem [thread:$0]  %s406, 1024, %s408, %s397, 64, 64, 4
        $region44: #{tpu_custom_call.1} parent=35 // pred_fallthru
          _
        // Predicated region
        $region45: #{tpu_custom_call.1} parent=35 // pred_check
          %p414 = pneg %p119
        $region46: #{tpu_custom_call.1} parent=35 // pred_check_branch
          %416 = sbr.rel (%p414) target = $region48
        $region47: #{tpu_custom_call.1} parent=35 // pred_region
          %s417 = sand.u32 %s31, 1
          %s418 = scalar_lea.sflag [#allocation6], %s417
          %s419 = sand.u32 %s109, 1
          %s420 = smul.addr %s419, 32
          %s421 = scalar_lea.vmem [#allocation7], %s420
          %s422 = smul.u32 8, %s39
          %s424 = ssub.s32 512, 512
          %425 = vsyncadd %s418, %s424
          %s426 = smul.addr %s38, 16
          %s427 = sadd.s32 %s422, %s426
          %s428 = smul.addr %s427, 64
          %s429 = scalar_lea.hbm %s2, %s428
          %s430 = sshll.u32 %s421, 4
          %s431 = int_to_ptr.vmem [resolvable:$true] %s430
          %436 = dma.hbm_to_vmem [thread:$0]  %s429, 512, %s431, %s418, 64, 64, 4
        $region48: #{tpu_custom_call.1} parent=35 // pred_fallthru
          _
      $region36: #{tpu_custom_call.1} parent=5 // pred_fallthru
        _
      %p437 = scmp.le.s32.totalorder 1, %s31
      %p438 = scmp.lt.s32.totalorder %s31, 5
      %p439 = pnand %p437, %p438
      %p440 = pneg %p439
      // Predicated region
      $region49: #{tpu_custom_call.1} parent=5 // pred_check
        _
      $region50: #{tpu_custom_call.1} parent=5 // pred_check_branch
        %442 = sbr.rel (%p439) target = $region52
      $region51: #{tpu_custom_call.1} parent=5 // pred_region
        %s443 = ssub.s32 %s31, 1
        %s444 = sand.u32 %s58, 1
        %s445 = scalar_lea.sflag [#allocation3], %s444
        %s446 = sand.u32 %s58, 1
        %s447 = smul.addr %s446, 64
        %s448 = scalar_lea.vmem [#allocation2], %s447
        // Predicated region
        $region53: #{tpu_custom_call.1} parent=51 // pred_check
          %p449 = pneg %p71
        $region54: #{tpu_custom_call.1} parent=51 // pred_check_branch
          %451 = sbr.rel (%p449) target = $region56
        $region55: #{tpu_custom_call.1} parent=51 // pred_region
          %452 = dma.done %s445, 1024
        $region56: #{tpu_custom_call.1} parent=51 // pred_fallthru
          _
        %s453 = sand.u32 %s36, 1
        %s454 = scalar_lea.sflag [#allocation6], %s453
        %s455 = sand.u32 %s84, 1
        %s456 = smul.addr %s455, 64
        %s457 = scalar_lea.vmem [#allocation5], %s456
        // Predicated region
        $region57: #{tpu_custom_call.1} parent=51 // pred_check
          %p458 = pneg %p97
        $region58: #{tpu_custom_call.1} parent=51 // pred_check_branch
          %460 = sbr.rel (%p458) target = $region60
        $region59: #{tpu_custom_call.1} parent=51 // pred_region
          %461 = dma.done %s454, 1024
        $region60: #{tpu_custom_call.1} parent=51 // pred_fallthru
          _
        %s462 = sand.u32 %s36, 1
        %s463 = scalar_lea.sflag [#allocation6], %s462
        %s464 = sand.u32 %s112, 1
        %s465 = smul.addr %s464, 32
        %s466 = scalar_lea.vmem [#allocation7], %s465
        // Predicated region
        $region61: #{tpu_custom_call.1} parent=51 // pred_check
          %p467 = pneg %p125
        $region62: #{tpu_custom_call.1} parent=51 // pred_check_branch
          %469 = sbr.rel (%p467) target = $region64
        $region63: #{tpu_custom_call.1} parent=51 // pred_region
          %470 = dma.done %s463, 512
        $region64: #{tpu_custom_call.1} parent=51 // pred_fallthru
          _
        // Predicated region
        $region65: #{tpu_custom_call.1} parent=51 // pred_check
          %p471 = pneg %p146
        $region66: #{tpu_custom_call.1} parent=51 // pred_check_branch
          %473 = sbr.rel (%p471) target = $region68
        $region67: #{tpu_custom_call.1} parent=51 // pred_region
          %474 = dma.done [#allocation9], 1024
        $region68: #{tpu_custom_call.1} parent=51 // pred_fallthru
          _
        // Predicated region
        $region69: #{tpu_custom_call.1} parent=51 // pred_check
          %p475 = pneg %p167
        $region70: #{tpu_custom_call.1} parent=51 // pred_check_branch
          %477 = sbr.rel (%p475) target = $region72
        $region71: #{tpu_custom_call.1} parent=51 // pred_region
          %478 = dma.done [#allocation9], 2048
        $region72: #{tpu_custom_call.1} parent=51 // pred_fallthru
          _
        // Predicated region
        $region73: #{tpu_custom_call.1} parent=51 // pred_check
          %p479 = pneg %p188
        $region74: #{tpu_custom_call.1} parent=51 // pred_check_branch
          %481 = sbr.rel (%p479) target = $region76
        $region75: #{tpu_custom_call.1} parent=51 // pred_region
          %482 = dma.done [#allocation12], 1024
        $region76: #{tpu_custom_call.1} parent=51 // pred_fallthru
          _
        // Predicated region
        $region77: #{tpu_custom_call.1} parent=51 // pred_check
          %p483 = pneg %p209
        $region78: #{tpu_custom_call.1} parent=51 // pred_check_branch
          %485 = sbr.rel (%p483) target = $region80
        $region79: #{tpu_custom_call.1} parent=51 // pred_region
          %486 = dma.done [#allocation12], 2048
        $region80: #{tpu_custom_call.1} parent=51 // pred_fallthru
          _
        // Predicated region
        $region81: #{tpu_custom_call.1} parent=51 // pred_check
          %p487 = pneg %p230
        $region82: #{tpu_custom_call.1} parent=51 // pred_check_branch
          %489 = sbr.rel (%p487) target = $region84
        $region83: #{tpu_custom_call.1} parent=51 // pred_region
          %490 = dma.done [#allocation15], 2048
        $region84: #{tpu_custom_call.1} parent=51 // pred_fallthru
          _
        %s491 = sand.u32 %s58, 1
        %s492 = scalar_lea.sflag [#allocation3], %s491
        %s493 = sand.u32 %s58, 1
        %s494 = smul.addr %s493, 64
        %s495 = scalar_lea.vmem [#allocation2], %s494
        %p496 = pneg %p71
        %p497 = pneg %p68
        %s498 = sand.u32 %s36, 1
        %s499 = scalar_lea.sflag [#allocation6], %s498
        %s500 = sand.u32 %s84, 1
        %s501 = smul.addr %s500, 64
        %s502 = scalar_lea.vmem [#allocation5], %s501
        %p503 = pneg %p97
        %p504 = pneg %p94
        %s505 = sand.u32 %s36, 1
        %s506 = scalar_lea.sflag [#allocation6], %s505
        %s507 = sand.u32 %s112, 1
        %s508 = smul.addr %s507, 32
        %s509 = scalar_lea.vmem [#allocation7], %s508
        %p510 = pneg %p125
        %p511 = pneg %p122
        %p512 = pneg %p146
        %p513 = pneg %p143
        %p514 = pneg %p167
        %p515 = pneg %p164
        %p516 = pneg %p188
        %p517 = pneg %p185
        %p518 = pneg %p209
        %p519 = pneg %p206
        %p520 = pneg %p230
        %p521 = pneg %p227
        %p522 = pneg %p258
        %p523 = pneg %p255
        %s524 = sand.u32 %s245, 1
        %s525 = scalar_lea.sflag [#allocation4], %s524
        %s526 = sand.u32 %s245, 1
        %s527 = smul.addr %s526, 64
        %s528 = scalar_lea.vmem [#allocation16], %s527
        %p529 = pneg %p286
        %p530 = pneg %p283
        %s531 = sand.u32 %s273, 1
        %s532 = scalar_lea.sflag [#allocation18], %s531
        %s533 = sand.u32 %s273, 1
        %s534 = smul.addr %s533, 128
        %s535 = scalar_lea.vmem [#allocation17], %s534
        %s536 = smul.u32 8, %s41
        %s537 = smul.u32 8, %s41
        %s538 = smul.u32 8, %s41
        %s539 = smul.u32 8, %s41
        %v541 = vld [vmem:[%s448] sm:$0xff]
        %v542 = vld [vmem:[%s448 + $0x8] sm:$0xff]
        %v543 = vld [vmem:[%s448 + $0x10] sm:$0xff]
        %v544 = vld [vmem:[%s448 + $0x18] sm:$0xff]
        %v545 = vld [vmem:[%s448 + $0x20] sm:$0xff]
        %v546 = vld [vmem:[%s448 + $0x28] sm:$0xff]
        %v547 = vld [vmem:[%s448 + $0x30] sm:$0xff]
        %v548 = vld [vmem:[%s448 + $0x38] sm:$0xff]
        %v549 = vld [vmem:[%s457] sm:$0xf]
        %v550 = vld [vmem:[%s457 + $0x4] sm:$0xf]
        %v551 = vld [vmem:[%s457 + $0x8] sm:$0xf]
        %v552 = vld [vmem:[%s457 + $0xc] sm:$0xf]
        %v553 = vld [vmem:[%s457 + $0x10] sm:$0xf]
        %v554 = vld [vmem:[%s457 + $0x14] sm:$0xf]
        %v555 = vld [vmem:[%s457 + $0x18] sm:$0xf]
        %v556 = vld [vmem:[%s457 + $0x1c] sm:$0xf]
        %v557 = vld [vmem:[%s457 + $0x20] sm:$0xf]
        %v558 = vld [vmem:[%s457 + $0x24] sm:$0xf]
        %v559 = vld [vmem:[%s457 + $0x28] sm:$0xf]
        %v560 = vld [vmem:[%s457 + $0x2c] sm:$0xf]
        %v561 = vld [vmem:[%s457 + $0x30] sm:$0xf]
        %v562 = vld [vmem:[%s457 + $0x34] sm:$0xf]
        %v563 = vld [vmem:[%s457 + $0x38] sm:$0xf]
        %v564 = vld [vmem:[%s457 + $0x3c] sm:$0xf]
        %v565 = vpack.c.bf16 %v542, %v541
        %v566 = vpack.c.bf16 %v544, %v543
        %v567 = vpack.c.bf16 %v546, %v545
        %v568 = vpack.c.bf16 %v548, %v547
        %v569 = vld [vmem:[#allocation8] sm:$0xf]
        %v570 = vld [vmem:[#allocation8 + $0x4] sm:$0xf]
        %v571 = vld [vmem:[#allocation8 + $0x8] sm:$0xf]
        %v572 = vld [vmem:[#allocation8 + $0xc] sm:$0xf]
        %v573 = vld [vmem:[#allocation8 + $0x10] sm:$0xf]
        %v574 = vld [vmem:[#allocation8 + $0x14] sm:$0xf]
        %v575 = vld [vmem:[#allocation8 + $0x18] sm:$0xf]
        %v576 = vld [vmem:[#allocation8 + $0x1c] sm:$0xf]
        %v577 = vld [vmem:[#allocation8 + $0x20] sm:$0xf]
        %v578 = vld [vmem:[#allocation8 + $0x24] sm:$0xf]
        %v579 = vld [vmem:[#allocation8 + $0x28] sm:$0xf]
        %v580 = vld [vmem:[#allocation8 + $0x2c] sm:$0xf]
        %v581 = vld [vmem:[#allocation8 + $0x30] sm:$0xf]
        %v582 = vld [vmem:[#allocation8 + $0x34] sm:$0xf]
        %v583 = vld [vmem:[#allocation8 + $0x38] sm:$0xf]
        %v584 = vld [vmem:[#allocation8 + $0x3c] sm:$0xf]
        %v601 = vunpack.c.l.b16 %v569
        %v602 = vunpack.c.l.b16 %v570
        %v603 = vunpack.c.l.b16 %v571
        %v604 = vunpack.c.l.b16 %v572
        %v605 = vunpack.c.l.b16 %v573
        %v606 = vunpack.c.l.b16 %v574
        %v607 = vunpack.c.l.b16 %v575
        %v608 = vunpack.c.l.b16 %v576
        %v609 = vunpack.c.l.b16 %v577
        %v610 = vunpack.c.l.b16 %v578
        %v611 = vunpack.c.l.b16 %v579
        %v612 = vunpack.c.l.b16 %v580
        %v613 = vunpack.c.l.b16 %v581
        %v614 = vunpack.c.l.b16 %v582
        %v615 = vunpack.c.l.b16 %v583
        %v616 = vunpack.c.l.b16 %v584
        %v617 = vpack.c.b16 %v602, %v601
        %v618 = vpack.c.b16 %v604, %v603
        %v619 = vpack.c.b16 %v606, %v605
        %v620 = vpack.c.b16 %v608, %v607
        %v621 = vpack.c.b16 %v610, %v609
        %v622 = vpack.c.b16 %v612, %v611
        %v623 = vpack.c.b16 %v614, %v613
        %v624 = vpack.c.b16 %v616, %v615
        %633 = vmatprep.subr.bf16.mxu0 0
        %634 = vmatpush1.bf16.msra.mxu0 %v617
        %635 = vmatprep.subr.bf16.mxu0 0
        %636 = vmatpush1.bf16.msra.mxu0 %v618
        %637 = vmatprep.subr.bf16.mxu0 0
        %638 = vmatpush1.bf16.msra.mxu0 %v619
        %639 = vmatprep.subr.bf16.mxu0 0
        %640 = vmatpush1.bf16.msra.mxu0 %v620
        %641 = vmatprep.subr.bf16.mxu0 0
        %642 = vmatpush1.bf16.msra.mxu0 %v621
        %643 = vmatprep.subr.bf16.mxu0 0
        %644 = vmatpush1.bf16.msra.mxu0 %v622
        %645 = vmatprep.subr.bf16.mxu0 0
        %646 = vmatpush1.bf16.msra.mxu0 %v623
        %647 = vmatprep.subr.bf16.mxu0 0
        %648 = vmatpush1.bf16.msra.mxu0 %v624
        %649 = vmatprep.subr.bf16.mxu0 0
        %650 = vmatpush1.bf16.msra.mxu0 0
        %651 = vmatprep.subr.bf16.mxu0 0
        %652 = vmatpush1.bf16.msra.mxu0 0
        %653 = vmatprep.subr.bf16.mxu0 0
        %654 = vmatpush1.bf16.msra.mxu0 0
        %655 = vmatprep.subr.bf16.mxu0 0
        %656 = vmatpush1.bf16.msra.mxu0 0
        %657 = vmatprep.subr.bf16.mxu0 0
        %658 = vmatpush1.bf16.msra.mxu0 0
        %659 = vmatprep.subr.bf16.mxu0 0
        %660 = vmatpush1.bf16.msra.mxu0 0
        %661 = vmatprep.subr.bf16.mxu0 0
        %662 = vmatpush1.bf16.msra.mxu0 0
        %663 = vmatprep.subr.bf16.mxu0 0
        %664 = vmatpush1.bf16.msra.mxu0 0
        %665 = vmatprep.mubr.bf16.mxu0 0
        %666 = vmatmul.mubr.bf16.gmra.mrb[0].mxu0 %v565
        %v667 = vpop.f32.mrb[0].mxu0
        %v668 = vadd.f32 0.0, %v667
        %v669 = vpop.f32.mrb[0].mxu0
        %v670 = vpop.f32.mrb[0].mxu0
        %v671 = vadd.f32 0.0, %v670
        %v672 = vpop.f32.mrb[0].mxu0
        %673 = vmatprep.mubr.bf16.mxu0 0
        %674 = vmatmul.mubr.bf16.gmra.mrb[0].mxu0 %v566
        %v675 = vpop.f32.mrb[0].mxu0
        %v676 = vadd.f32 0.0, %v675
        %v677 = vpop.f32.mrb[0].mxu0
        %v678 = vpop.f32.mrb[0].mxu0
        %v679 = vadd.f32 0.0, %v678
        %v680 = vpop.f32.mrb[0].mxu0
        %681 = vmatprep.mubr.bf16.mxu0 0
        %682 = vmatmul.mubr.bf16.gmra.mrb[0].mxu0 %v567
        %v683 = vpop.f32.mrb[0].mxu0
        %v684 = vadd.f32 0.0, %v683
        %v685 = vpop.f32.mrb[0].mxu0
        %v686 = vpop.f32.mrb[0].mxu0
        %v687 = vadd.f32 0.0, %v686
        %v688 = vpop.f32.mrb[0].mxu0
        %689 = vmatprep.mubr.bf16.mxu0 0
        %690 = vmatmul.mubr.bf16.gmra.mrb[0].mxu0 %v568
        %v691 = vpop.f32.mrb[0].mxu0
        %v692 = vadd.f32 0.0, %v691
        %v693 = vpop.f32.mrb[0].mxu0
        %v694 = vpop.f32.mrb[0].mxu0
        %v695 = vadd.f32 0.0, %v694
        %v696 = vpop.f32.mrb[0].mxu0
        %697 = vdwg.mxu0
        %v698 = vpack.c.bf16 %v671, %v668
        %v699 = vpack.c.bf16 %v679, %v676
        %v700 = vpack.c.bf16 %v687, %v684
        %v701 = vpack.c.bf16 %v695, %v692
        %v702 = vld [vmem:[#allocation10] sm:$0xff]
        %v703 = vld [vmem:[#allocation10 + $0x8] sm:$0xff]
        %v704 = vld [vmem:[#allocation10 + $0x10] sm:$0xff]
        %v705 = vld [vmem:[#allocation10 + $0x18] sm:$0xff]
        %v706 = vld [vmem:[#allocation10 + $0x20] sm:$0xff]
        %v707 = vld [vmem:[#allocation10 + $0x28] sm:$0xff]
        %v708 = vld [vmem:[#allocation10 + $0x30] sm:$0xff]
        %v709 = vld [vmem:[#allocation10 + $0x38] sm:$0xff]
        %v710 = vld [vmem:[#allocation10 + $0x40] sm:$0xff]
        %v711 = vld [vmem:[#allocation10 + $0x48] sm:$0xff]
        %v712 = vld [vmem:[#allocation10 + $0x50] sm:$0xff]
        %v713 = vld [vmem:[#allocation10 + $0x58] sm:$0xff]
        %v714 = vld [vmem:[#allocation10 + $0x60] sm:$0xff]
        %v715 = vld [vmem:[#allocation10 + $0x68] sm:$0xff]
        %v716 = vld [vmem:[#allocation10 + $0x70] sm:$0xff]
        %v717 = vld [vmem:[#allocation10 + $0x78] sm:$0xff]
        %v734 = vunpack.c.l.b16 %v549
        %v735 = vunpack.c.l.b16 %v550
        %v736 = vunpack.c.l.b16 %v551
        %v737 = vunpack.c.l.b16 %v552
        %v738 = vunpack.c.l.b16 %v553
        %v739 = vunpack.c.l.b16 %v554
        %v740 = vunpack.c.l.b16 %v555
        %v741 = vunpack.c.l.b16 %v556
        %v742 = vunpack.c.l.b16 %v557
        %v743 = vunpack.c.l.b16 %v558
        %v744 = vunpack.c.l.b16 %v559
        %v745 = vunpack.c.l.b16 %v560
        %v746 = vunpack.c.l.b16 %v561
        %v747 = vunpack.c.l.b16 %v562
        %v748 = vunpack.c.l.b16 %v563
        %v749 = vunpack.c.l.b16 %v564
        %v750 = vpack.c.b16 %v735, %v734
        %v751 = vpack.c.b16 %v737, %v736
        %v752 = vpack.c.b16 %v739, %v738
        %v753 = vpack.c.b16 %v741, %v740
        %v754 = vpack.c.b16 %v743, %v742
        %v755 = vpack.c.b16 %v745, %v744
        %v756 = vpack.c.b16 %v747, %v746
        %v757 = vpack.c.b16 %v749, %v748
        %v782 = vunpack.c.l.b16 %v702
        %v783 = vunpack.c.h.b16 %v702
        %v784 = vunpack.c.l.b16 %v703
        %v785 = vunpack.c.h.b16 %v703
        %v786 = vunpack.c.l.b16 %v704
        %v787 = vunpack.c.h.b16 %v704
        %v788 = vunpack.c.l.b16 %v705
        %v789 = vunpack.c.h.b16 %v705
        %v790 = vunpack.c.l.b16 %v706
        %v791 = vunpack.c.h.b16 %v706
        %v792 = vunpack.c.l.b16 %v707
        %v793 = vunpack.c.h.b16 %v707
        %v794 = vunpack.c.l.b16 %v708
        %v795 = vunpack.c.h.b16 %v708
        %v796 = vunpack.c.l.b16 %v709
        %v797 = vunpack.c.h.b16 %v709
        %v798 = vunpack.c.l.b16 %v710
        %v799 = vunpack.c.h.b16 %v710
        %v800 = vunpack.c.l.b16 %v711
        %v801 = vunpack.c.h.b16 %v711
        %v802 = vunpack.c.l.b16 %v712
        %v803 = vunpack.c.h.b16 %v712
        %v804 = vunpack.c.l.b16 %v713
        %v805 = vunpack.c.h.b16 %v713
        %v806 = vunpack.c.l.b16 %v714
        %v807 = vunpack.c.h.b16 %v714
        %v808 = vunpack.c.l.b16 %v715
        %v809 = vunpack.c.h.b16 %v715
        %v810 = vunpack.c.l.b16 %v716
        %v811 = vunpack.c.h.b16 %v716
        %v812 = vunpack.c.l.b16 %v717
        %v813 = vunpack.c.h.b16 %v717
        %v814 = vpack.c.b16 %v784, %v782
        %v815 = vpack.c.b16 %v785, %v783
        %v816 = vpack.c.b16 %v788, %v786
        %v817 = vpack.c.b16 %v789, %v787
        %v818 = vpack.c.b16 %v792, %v790
        %v819 = vpack.c.b16 %v793, %v791
        %v820 = vpack.c.b16 %v796, %v794
        %v821 = vpack.c.b16 %v797, %v795
        %v822 = vpack.c.b16 %v800, %v798
        %v823 = vpack.c.b16 %v801, %v799
        %v824 = vpack.c.b16 %v804, %v802
        %v825 = vpack.c.b16 %v805, %v803
        %v826 = vpack.c.b16 %v808, %v806
        %v827 = vpack.c.b16 %v809, %v807
        %v828 = vpack.c.b16 %v812, %v810
        %v829 = vpack.c.b16 %v813, %v811
        %846 = vmatprep.subr.bf16.mxu0 %v815
        %847 = vmatpush1.bf16.msra.mxu0 %v814
        %848 = vmatprep.subr.bf16.mxu0 %v817
        %849 = vmatpush1.bf16.msra.mxu0 %v816
        %850 = vmatprep.subr.bf16.mxu0 %v819
        %851 = vmatpush1.bf16.msra.mxu0 %v818
        %852 = vmatprep.subr.bf16.mxu0 %v821
        %853 = vmatpush1.bf16.msra.mxu0 %v820
        %854 = vmatprep.subr.bf16.mxu0 %v823
        %855 = vmatpush1.bf16.msra.mxu0 %v822
        %856 = vmatprep.subr.bf16.mxu0 %v825
        %857 = vmatpush1.bf16.msra.mxu0 %v824
        %858 = vmatprep.subr.bf16.mxu0 %v827
        %859 = vmatpush1.bf16.msra.mxu0 %v826
        %860 = vmatprep.subr.bf16.mxu0 %v829
        %861 = vmatpush1.bf16.msra.mxu0 %v828
        %862 = vmatprep.subr.bf16.mxu0 0
        %863 = vmatpush1.bf16.msra.mxu0 0
        %864 = vmatprep.subr.bf16.mxu0 0
        %865 = vmatpush1.bf16.msra.mxu0 0
        %866 = vmatprep.subr.bf16.mxu0 0
        %867 = vmatpush1.bf16.msra.mxu0 0
        %868 = vmatprep.subr.bf16.mxu0 0
        %869 = vmatpush1.bf16.msra.mxu0 0
        %870 = vmatprep.subr.bf16.mxu0 0
        %871 = vmatpush1.bf16.msra.mxu0 0
        %872 = vmatprep.subr.bf16.mxu0 0
        %873 = vmatpush1.bf16.msra.mxu0 0
        %874 = vmatprep.subr.bf16.mxu0 0
        %875 = vmatpush1.bf16.msra.mxu0 0
        %876 = vmatprep.subr.bf16.mxu0 0
        %877 = vmatpush1.bf16.msra.mxu0 0
        %878 = vmatprep.mubr.bf16.mxu0 0
        %879 = vmatmul.mubr.bf16.gmra.mrb[0].mxu0 %v750
        %v880 = vpop.f32.mrb[0].mxu0
        %v881 = vadd.f32 0.0, %v880
        %v882 = vpop.f32.mrb[0].mxu0
        %v883 = vadd.f32 0.0, %v882
        %v884 = vpop.f32.mrb[0].mxu0
        %v885 = vadd.f32 0.0, %v884
        %v886 = vpop.f32.mrb[0].mxu0
        %v887 = vadd.f32 0.0, %v886
        %888 = vmatprep.mubr.bf16.mxu0 0
        %889 = vmatmul.mubr.bf16.gmra.mrb[0].mxu0 %v751
        %v890 = vpop.f32.mrb[0].mxu0
        %v891 = vadd.f32 0.0, %v890
        %v892 = vpop.f32.mrb[0].mxu0
        %v893 = vadd.f32 0.0, %v892
        %v894 = vpop.f32.mrb[0].mxu0
        %v895 = vadd.f32 0.0, %v894
        %v896 = vpop.f32.mrb[0].mxu0
        %v897 = vadd.f32 0.0, %v896
        %898 = vmatprep.mubr.bf16.mxu0 0
        %899 = vmatmul.mubr.bf16.gmra.mrb[0].mxu0 %v752
        %v900 = vpop.f32.mrb[0].mxu0
        %v901 = vadd.f32 0.0, %v900
        %v902 = vpop.f32.mrb[0].mxu0
        %v903 = vadd.f32 0.0, %v902
        %v904 = vpop.f32.mrb[0].mxu0
        %v905 = vadd.f32 0.0, %v904
        %v906 = vpop.f32.mrb[0].mxu0
        %v907 = vadd.f32 0.0, %v906
        %908 = vmatprep.mubr.bf16.mxu0 0
        %909 = vmatmul.mubr.bf16.gmra.mrb[0].mxu0 %v753
        %v910 = vpop.f32.mrb[0].mxu0
        %v911 = vadd.f32 0.0, %v910
        %v912 = vpop.f32.mrb[0].mxu0
        %v913 = vadd.f32 0.0, %v912
        %v914 = vpop.f32.mrb[0].mxu0
        %v915 = vadd.f32 0.0, %v914
        %v916 = vpop.f32.mrb[0].mxu0
        %v917 = vadd.f32 0.0, %v916
        %918 = vmatprep.mubr.bf16.mxu0 0
        %919 = vmatmul.mubr.bf16.gmra.mrb[0].mxu0 %v754
        %v920 = vpop.f32.mrb[0].mxu0
        %v921 = vadd.f32 0.0, %v920
        %v922 = vpop.f32.mrb[0].mxu0
        %v923 = vadd.f32 0.0, %v922
        %v924 = vpop.f32.mrb[0].mxu0
        %v925 = vadd.f32 0.0, %v924
        %v926 = vpop.f32.mrb[0].mxu0
        %v927 = vadd.f32 0.0, %v926
        %928 = vmatprep.mubr.bf16.mxu0 0
        %929 = vmatmul.mubr.bf16.gmra.mrb[0].mxu0 %v755
        %v930 = vpop.f32.mrb[0].mxu0
        %v931 = vadd.f32 0.0, %v930
        %v932 = vpop.f32.mrb[0].mxu0
        %v933 = vadd.f32 0.0, %v932
        %v934 = vpop.f32.mrb[0].mxu0
        %v935 = vadd.f32 0.0, %v934
        %v936 = vpop.f32.mrb[0].mxu0
        %v937 = vadd.f32 0.0, %v936
        %938 = vmatprep.mubr.bf16.mxu0 0
        %939 = vmatmul.mubr.bf16.gmra.mrb[0].mxu0 %v756
        %v940 = vpop.f32.mrb[0].mxu0
        %v941 = vadd.f32 0.0, %v940
        %v942 = vpop.f32.mrb[0].mxu0
        %v943 = vadd.f32 0.0, %v942
        %v944 = vpop.f32.mrb[0].mxu0
        %v945 = vadd.f32 0.0, %v944
        %v946 = vpop.f32.mrb[0].mxu0
        %v947 = vadd.f32 0.0, %v946
        %948 = vmatprep.mubr.bf16.mxu0 0
        %949 = vmatmul.mubr.bf16.gmra.mrb[0].mxu0 %v757
        %v950 = vpop.f32.mrb[0].mxu0
        %v951 = vadd.f32 0.0, %v950
        %v952 = vpop.f32.mrb[0].mxu0
        %v953 = vadd.f32 0.0, %v952
        %v954 = vpop.f32.mrb[0].mxu0
        %v955 = vadd.f32 0.0, %v954
        %v956 = vpop.f32.mrb[0].mxu0
        %v957 = vadd.f32 0.0, %v956
        %958 = vdwg.mxu0
        %v959 = vpack.c.bf16 %v885, %v881
        %v960 = vpack.c.bf16 %v887, %v883
        %v961 = vpack.c.bf16 %v895, %v891
        %v962 = vpack.c.bf16 %v897, %v893
        %v963 = vpack.c.bf16 %v905, %v901
        %v964 = vpack.c.bf16 %v907, %v903
        %v965 = vpack.c.bf16 %v915, %v911
        %v966 = vpack.c.bf16 %v917, %v913
        %v967 = vpack.c.bf16 %v925, %v921
        %v968 = vpack.c.bf16 %v927, %v923
        %v969 = vpack.c.bf16 %v935, %v931
        %v970 = vpack.c.bf16 %v937, %v933
        %v971 = vpack.c.bf16 %v945, %v941
        %v972 = vpack.c.bf16 %v947, %v943
        %v973 = vpack.c.bf16 %v955, %v951
        %v974 = vpack.c.bf16 %v957, %v953
        %v975 = vld [vmem:[%s466] sm:$0xf]
        %v976 = vld [vmem:[%s466 + $0x4] sm:$0xf]
        %v977 = vld [vmem:[%s466 + $0x8] sm:$0xf]
        %v978 = vld [vmem:[%s466 + $0xc] sm:$0xf]
        %v979 = vld [vmem:[%s466 + $0x10] sm:$0xf]
        %v980 = vld [vmem:[%s466 + $0x14] sm:$0xf]
        %v981 = vld [vmem:[%s466 + $0x18] sm:$0xf]
        %v982 = vld [vmem:[%s466 + $0x1c] sm:$0xf]
        %v983 = vunpack.c.l.bf16 %v975
        %v984 = vunpack.c.l.bf16 %v976
        %v985 = vunpack.c.l.bf16 %v977
        %v986 = vunpack.c.l.bf16 %v978
        %v987 = vunpack.c.l.bf16 %v979
        %v988 = vunpack.c.l.bf16 %v980
        %v989 = vunpack.c.l.bf16 %v981
        %v990 = vunpack.c.l.bf16 %v982
        %vm991 = vcmask 261120
        %v993 = vsel %vm991, %v698, 0
        %v996 = vsel %vm991, %v699, 0
        %v999 = vsel %vm991, %v700, 0
        %v1002 = vsel %vm991, %v701, 0
        %v1005 = vsel %vm991, %v959, 0
        %v1008 = vsel %vm991, %v961, 0
        %v1011 = vsel %vm991, %v963, 0
        %v1014 = vsel %vm991, %v965, 0
        %v1017 = vsel %vm991, %v967, 0
        %v1020 = vsel %vm991, %v969, 0
        %v1023 = vsel %vm991, %v971, 0
        %v1026 = vsel %vm991, %v973, 0
        %1028 = vmatprep.subr.bf16.mxu0 0
        %1029 = vmatpush1.bf16.xpose.msra.mxu0 %v1005
        %1030 = vmatprep.subr.bf16.mxu0 0
        %1031 = vmatpush1.bf16.xpose.msra.mxu0 %v1008
        %1032 = vmatprep.subr.bf16.mxu0 0
        %1033 = vmatpush1.bf16.xpose.msra.mxu0 %v1011
        %1034 = vmatprep.subr.bf16.mxu0 0
        %1035 = vmatpush1.bf16.xpose.msra.mxu0 %v1014
        %1036 = vmatprep.subr.bf16.mxu0 0
        %1037 = vmatpush1.bf16.xpose.msra.mxu0 %v1017
        %1038 = vmatprep.subr.bf16.mxu0 0
        %1039 = vmatpush1.bf16.xpose.msra.mxu0 %v1020
        %1040 = vmatprep.subr.bf16.mxu0 0
        %1041 = vmatpush1.bf16.xpose.msra.mxu0 %v1023
        %1042 = vmatprep.subr.bf16.mxu0 0
        %1043 = vmatpush1.bf16.xpose.msra.mxu0 %v1026
        %1044 = vmatprep.subr.bf16.mxu0 0
        %1045 = vmatpush1.bf16.xpose.msra.mxu0 0
        %1046 = vmatprep.subr.bf16.mxu0 0
        %1047 = vmatpush1.bf16.xpose.msra.mxu0 0
        %1048 = vmatprep.subr.bf16.mxu0 0
        %1049 = vmatpush1.bf16.xpose.msra.mxu0 0
        %1050 = vmatprep.subr.bf16.mxu0 0
        %1051 = vmatpush1.bf16.xpose.msra.mxu0 0
        %1052 = vmatprep.subr.bf16.mxu0 0
        %1053 = vmatpush1.bf16.xpose.msra.mxu0 0
        %1054 = vmatprep.subr.bf16.mxu0 0
        %1055 = vmatpush1.bf16.xpose.msra.mxu0 0
        %1056 = vmatprep.subr.bf16.mxu0 0
        %1057 = vmatpush1.bf16.xpose.msra.mxu0 0
        %1058 = vmatprep.subr.bf16.mxu0 0
        %1059 = vmatpush1.bf16.xpose.msra.mxu0 0
        %1060 = vmatprep.mubr.bf16.mxu0 0
        %1061 = vmatmul.mubr.bf16.gmra.mrb[0].mxu0 %v993
        %v1062 = vpop.f32.mrb[0].mxu0
        %v1063 = vadd.f32 %v983, %v1062
        %v1064 = vpop.f32.mrb[0].mxu0
        %v1065 = vpop.f32.mrb[0].mxu0
        %v1066 = vadd.f32 %v984, %v1065
        %v1067 = vpop.f32.mrb[0].mxu0
        %1068 = vmatprep.mubr.bf16.mxu0 0
        %1069 = vmatmul.mubr.bf16.gmra.mrb[0].mxu0 %v996
        %v1070 = vpop.f32.mrb[0].mxu0
        %v1071 = vadd.f32 %v985, %v1070
        %v1072 = vpop.f32.mrb[0].mxu0
        %v1073 = vpop.f32.mrb[0].mxu0
        %v1074 = vadd.f32 %v986, %v1073
        %v1075 = vpop.f32.mrb[0].mxu0
        %1076 = vmatprep.mubr.bf16.mxu0 0
        %1077 = vmatmul.mubr.bf16.gmra.mrb[0].mxu0 %v999
        %v1078 = vpop.f32.mrb[0].mxu0
        %v1079 = vadd.f32 %v987, %v1078
        %v1080 = vpop.f32.mrb[0].mxu0
        %v1081 = vpop.f32.mrb[0].mxu0
        %v1082 = vadd.f32 %v988, %v1081
        %v1083 = vpop.f32.mrb[0].mxu0
        %1084 = vmatprep.mubr.bf16.mxu0 0
        %1085 = vmatmul.mubr.bf16.gmra.mrb[0].mxu0 %v1002
        %v1086 = vpop.f32.mrb[0].mxu0
        %v1087 = vadd.f32 %v989, %v1086
        %v1088 = vpop.f32.mrb[0].mxu0
        %v1089 = vpop.f32.mrb[0].mxu0
        %v1090 = vadd.f32 %v990, %v1089
        %v1091 = vpop.f32.mrb[0].mxu0
        %1092 = vdwg.mxu0
        %1093 = vmax.xlane.f32.xlu0 %v1063
        %v1094 = vpop.xlane.xlu0 %1093
        %1095 = vmax.xlane.f32.xlu0 %v1066
        %v1096 = vpop.xlane.xlu0 %1095
        %1097 = vmax.xlane.f32.xlu0 %v1071
        %v1098 = vpop.xlane.xlu0 %1097
        %1099 = vmax.xlane.f32.xlu0 %v1074
        %v1100 = vpop.xlane.xlu0 %1099
        %1101 = vmax.xlane.f32.xlu0 %v1079
        %v1102 = vpop.xlane.xlu0 %1101
        %1103 = vmax.xlane.f32.xlu0 %v1082
        %v1104 = vpop.xlane.xlu0 %1103
        %1105 = vmax.xlane.f32.xlu0 %v1087
        %v1106 = vpop.xlane.xlu0 %1105
        %1107 = vmax.xlane.f32.xlu0 %v1090
        %v1108 = vpop.xlane.xlu0 %1107
        %v1109 = vsub.f32 %v1063, %v1094
        %v1110 = vsub.f32 %v1066, %v1096
        %v1111 = vsub.f32 %v1071, %v1098
        %v1112 = vsub.f32 %v1074, %v1100
        %v1113 = vsub.f32 %v1079, %v1102
        %v1114 = vsub.f32 %v1082, %v1104
        %v1115 = vsub.f32 %v1087, %v1106
        %v1116 = vsub.f32 %v1090, %v1108
        %v1117 = vmul.f32 %v1109, 1.442695
        %v1118 = vpow.pop %v1117
        %v1119 = vmul.f32 %v1110, 1.442695
        %v1120 = vpow.pop %v1119
        %v1121 = vmul.f32 %v1111, 1.442695
        %v1122 = vpow.pop %v1121
        %v1123 = vmul.f32 %v1112, 1.442695
        %v1124 = vpow.pop %v1123
        %v1125 = vmul.f32 %v1113, 1.442695
        %v1126 = vpow.pop %v1125
        %v1127 = vmul.f32 %v1114, 1.442695
        %v1128 = vpow.pop %v1127
        %v1129 = vmul.f32 %v1115, 1.442695
        %v1130 = vpow.pop %v1129
        %v1131 = vmul.f32 %v1116, 1.442695
        %v1132 = vpow.pop %v1131
        %1133 = vadd.xlane.f32.xlu0 %v1118
        %v1134 = vpop.xlane.xlu0 %1133
        %1135 = vadd.xlane.f32.xlu0 %v1120
        %v1136 = vpop.xlane.xlu0 %1135
        %1137 = vadd.xlane.f32.xlu0 %v1122
        %v1138 = vpop.xlane.xlu0 %1137
        %1139 = vadd.xlane.f32.xlu0 %v1124
        %v1140 = vpop.xlane.xlu0 %1139
        %1141 = vadd.xlane.f32.xlu0 %v1126
        %v1142 = vpop.xlane.xlu0 %1141
        %1143 = vadd.xlane.f32.xlu0 %v1128
        %v1144 = vpop.xlane.xlu0 %1143
        %1145 = vadd.xlane.f32.xlu0 %v1130
        %v1146 = vpop.xlane.xlu0 %1145
        %1147 = vadd.xlane.f32.xlu0 %v1132
        %v1148 = vpop.xlane.xlu0 %1147
        %v1149 = vrcp.pop %v1134
        %v1150 = vrcp.pop %v1136
        %v1151 = vrcp.pop %v1138
        %v1152 = vrcp.pop %v1140
        %v1153 = vrcp.pop %v1142
        %v1154 = vrcp.pop %v1144
        %v1155 = vrcp.pop %v1146
        %v1156 = vrcp.pop %v1148
        %v1157 = vmul.f32 %v1118, %v1149
        %v1158 = vmul.f32 %v1120, %v1150
        %v1159 = vmul.f32 %v1122, %v1151
        %v1160 = vmul.f32 %v1124, %v1152
        %v1161 = vmul.f32 %v1126, %v1153
        %v1162 = vmul.f32 %v1128, %v1154
        %v1163 = vmul.f32 %v1130, %v1155
        %v1164 = vmul.f32 %v1132, %v1156
        %v1165 = vpack.c.bf16 %v1158, %v1157
        %v1166 = vpack.c.bf16 %v1160, %v1159
        %v1167 = vpack.c.bf16 %v1162, %v1161
        %v1168 = vpack.c.bf16 %v1164, %v1163
        %v1173 = vunpack.c.l.b16 %v1165
        %v1174 = vunpack.c.h.b16 %v1165
        %v1175 = vunpack.c.l.b16 %v1166
        %v1176 = vunpack.c.h.b16 %v1166
        %v1177 = vunpack.c.l.b16 %v1167
        %v1178 = vunpack.c.h.b16 %v1167
        %v1179 = vunpack.c.l.b16 %v1168
        %v1180 = vunpack.c.h.b16 %v1168
        %v1181 = vpack.c.b16 %v1173, %v1173
        %v1182 = vpack.c.b16 %v1174, %v1174
        %v1183 = vpack.c.b16 %v1175, %v1175
        %v1184 = vpack.c.b16 %v1176, %v1176
        %v1185 = vpack.c.b16 %v1177, %v1177
        %v1186 = vpack.c.b16 %v1178, %v1178
        %v1187 = vpack.c.b16 %v1179, %v1179
        %v1188 = vpack.c.b16 %v1180, %v1180
        %1197 = vst [vmem:[%s535] sm:$0xf] %v1181
        %1198 = vst [vmem:[%s535 + $0x4] sm:$0xf] %v1182
        %1199 = vst [vmem:[%s535 + $0x8] sm:$0xf] %v1183
        %1200 = vst [vmem:[%s535 + $0xc] sm:$0xf] %v1184
        %1201 = vst [vmem:[%s535 + $0x10] sm:$0xf] %v1185
        %1202 = vst [vmem:[%s535 + $0x14] sm:$0xf] %v1186
        %1203 = vst [vmem:[%s535 + $0x18] sm:$0xf] %v1187
        %1204 = vst [vmem:[%s535 + $0x1c] sm:$0xf] %v1188
        %1205 = vmatprep.subr.bf16.mxu0 0
        %1206 = vmatpush1.bf16.msra.mxu0 %v960
        %1207 = vmatprep.subr.bf16.mxu0 0
        %1208 = vmatpush1.bf16.msra.mxu0 %v962
        %1209 = vmatprep.subr.bf16.mxu0 0
        %1210 = vmatpush1.bf16.msra.mxu0 %v964
        %1211 = vmatprep.subr.bf16.mxu0 0
        %1212 = vmatpush1.bf16.msra.mxu0 %v966
        %1213 = vmatprep.subr.bf16.mxu0 0
        %1214 = vmatpush1.bf16.msra.mxu0 %v968
        %1215 = vmatprep.subr.bf16.mxu0 0
        %1216 = vmatpush1.bf16.msra.mxu0 %v970
        %1217 = vmatprep.subr.bf16.mxu0 0
        %1218 = vmatpush1.bf16.msra.mxu0 %v972
        %1219 = vmatprep.subr.bf16.mxu0 0
        %1220 = vmatpush1.bf16.msra.mxu0 %v974
        %1221 = vmatprep.subr.bf16.mxu0 0
        %1222 = vmatpush1.bf16.msra.mxu0 0
        %1223 = vmatprep.subr.bf16.mxu0 0
        %1224 = vmatpush1.bf16.msra.mxu0 0
        %1225 = vmatprep.subr.bf16.mxu0 0
        %1226 = vmatpush1.bf16.msra.mxu0 0
        %1227 = vmatprep.subr.bf16.mxu0 0
        %1228 = vmatpush1.bf16.msra.mxu0 0
        %1229 = vmatprep.subr.bf16.mxu0 0
        %1230 = vmatpush1.bf16.msra.mxu0 0
        %1231 = vmatprep.subr.bf16.mxu0 0
        %1232 = vmatpush1.bf16.msra.mxu0 0
        %1233 = vmatprep.subr.bf16.mxu0 0
        %1234 = vmatpush1.bf16.msra.mxu0 0
        %1235 = vmatprep.subr.bf16.mxu0 0
        %1236 = vmatpush1.bf16.msra.mxu0 0
        %1237 = vmatprep.mubr.bf16.mxu0 0
        %1238 = vmatmul.mubr.bf16.gmra.mrb[0].mxu0 %v1165
        %v1239 = vpop.f32.mrb[0].mxu0
        %v1240 = vadd.f32 0.0, %v1239
        %v1241 = vpop.f32.mrb[0].mxu0
        %v1242 = vpop.f32.mrb[0].mxu0
        %v1243 = vadd.f32 0.0, %v1242
        %v1244 = vpop.f32.mrb[0].mxu0
        %1245 = vmatprep.mubr.bf16.mxu0 0
        %1246 = vmatmul.mubr.bf16.gmra.mrb[0].mxu0 %v1166
        %v1247 = vpop.f32.mrb[0].mxu0
        %v1248 = vadd.f32 0.0, %v1247
        %v1249 = vpop.f32.mrb[0].mxu0
        %v1250 = vpop.f32.mrb[0].mxu0
        %v1251 = vadd.f32 0.0, %v1250
        %v1252 = vpop.f32.mrb[0].mxu0
        %1253 = vmatprep.mubr.bf16.mxu0 0
        %1254 = vmatmul.mubr.bf16.gmra.mrb[0].mxu0 %v1167
        %v1255 = vpop.f32.mrb[0].mxu0
        %v1256 = vadd.f32 0.0, %v1255
        %v1257 = vpop.f32.mrb[0].mxu0
        %v1258 = vpop.f32.mrb[0].mxu0
        %v1259 = vadd.f32 0.0, %v1258
        %v1260 = vpop.f32.mrb[0].mxu0
        %1261 = vmatprep.mubr.bf16.mxu0 0
        %1262 = vmatmul.mubr.bf16.gmra.mrb[0].mxu0 %v1168
        %v1263 = vpop.f32.mrb[0].mxu0
        %v1264 = vadd.f32 0.0, %v1263
        %v1265 = vpop.f32.mrb[0].mxu0
        %v1266 = vpop.f32.mrb[0].mxu0
        %v1267 = vadd.f32 0.0, %v1266
        %v1268 = vpop.f32.mrb[0].mxu0
        %1269 = vdwg.mxu0
        %v1270 = vpack.c.bf16 %v1243, %v1240
        %v1271 = vpack.c.bf16 %v1251, %v1248
        %v1272 = vpack.c.bf16 %v1259, %v1256
        %v1273 = vpack.c.bf16 %v1267, %v1264
        %v1274 = vld [vmem:[#allocation11] sm:$0xf]
        %v1275 = vld [vmem:[#allocation11 + $0x4] sm:$0xf]
        %v1276 = vld [vmem:[#allocation11 + $0x8] sm:$0xf]
        %v1277 = vld [vmem:[#allocation11 + $0xc] sm:$0xf]
        %1282 = vrot.lane.b32.xlu0 %v698, 96
        %v1283 = vpop.permute.xlu0 %1282
        %1284 = vrot.lane.b32.xlu0 %v699, 96
        %v1285 = vpop.permute.xlu0 %1284
        %1286 = vrot.lane.b32.xlu0 %v700, 96
        %v1287 = vpop.permute.xlu0 %1286
        %1288 = vrot.lane.b32.xlu0 %v701, 96
        %v1289 = vpop.permute.xlu0 %1288
        %1298 = vrot.lane.b32.xlu0 %v959, 96
        %v1299 = vpop.permute.xlu0 %1298
        %1300 = vrot.lane.b32.xlu0 %v961, 96
        %v1301 = vpop.permute.xlu0 %1300
        %1302 = vrot.lane.b32.xlu0 %v963, 96
        %v1303 = vpop.permute.xlu0 %1302
        %1304 = vrot.lane.b32.xlu0 %v965, 96
        %v1305 = vpop.permute.xlu0 %1304
        %1306 = vrot.lane.b32.xlu0 %v967, 96
        %v1307 = vpop.permute.xlu0 %1306
        %1308 = vrot.lane.b32.xlu0 %v969, 96
        %v1309 = vpop.permute.xlu0 %1308
        %1310 = vrot.lane.b32.xlu0 %v971, 96
        %v1311 = vpop.permute.xlu0 %1310
        %1312 = vrot.lane.b32.xlu0 %v973, 96
        %v1313 = vpop.permute.xlu0 %1312
        %v1315 = vsel %vm991, %v1283, 0
        %v1318 = vsel %vm991, %v1285, 0
        %v1321 = vsel %vm991, %v1287, 0
        %v1324 = vsel %vm991, %v1289, 0
        %v1327 = vsel %vm991, %v1299, 0
        %v1330 = vsel %vm991, %v1301, 0
        %v1333 = vsel %vm991, %v1303, 0
        %v1336 = vsel %vm991, %v1305, 0
        %v1339 = vsel %vm991, %v1307, 0
        %v1342 = vsel %vm991, %v1309, 0
        %v1345 = vsel %vm991, %v1311, 0
        %v1348 = vsel %vm991, %v1313, 0
        %1350 = vmatprep.subr.bf16.mxu0 0
        %1351 = vmatpush1.bf16.xpose.msra.mxu0 %v1327
        %1352 = vmatprep.subr.bf16.mxu0 0
        %1353 = vmatpush1.bf16.xpose.msra.mxu0 %v1330
        %1354 = vmatprep.subr.bf16.mxu0 0
        %1355 = vmatpush1.bf16.xpose.msra.mxu0 %v1333
        %1356 = vmatprep.subr.bf16.mxu0 0
        %1357 = vmatpush1.bf16.xpose.msra.mxu0 %v1336
        %1358 = vmatprep.subr.bf16.mxu0 0
        %1359 = vmatpush1.bf16.xpose.msra.mxu0 %v1339
        %1360 = vmatprep.subr.bf16.mxu0 0
        %1361 = vmatpush1.bf16.xpose.msra.mxu0 %v1342
        %1362 = vmatprep.subr.bf16.mxu0 0
        %1363 = vmatpush1.bf16.xpose.msra.mxu0 %v1345
        %1364 = vmatprep.subr.bf16.mxu0 0
        %1365 = vmatpush1.bf16.xpose.msra.mxu0 %v1348
        %1366 = vmatprep.subr.bf16.mxu0 0
        %1367 = vmatpush1.bf16.xpose.msra.mxu0 0
        %1368 = vmatprep.subr.bf16.mxu0 0
        %1369 = vmatpush1.bf16.xpose.msra.mxu0 0
        %1370 = vmatprep.subr.bf16.mxu0 0
        %1371 = vmatpush1.bf16.xpose.msra.mxu0 0
        %1372 = vmatprep.subr.bf16.mxu0 0
        %1373 = vmatpush1.bf16.xpose.msra.mxu0 0
        %1374 = vmatprep.subr.bf16.mxu0 0
        %1375 = vmatpush1.bf16.xpose.msra.mxu0 0
        %1376 = vmatprep.subr.bf16.mxu0 0
        %1377 = vmatpush1.bf16.xpose.msra.mxu0 0
        %1378 = vmatprep.subr.bf16.mxu0 0
        %1379 = vmatpush1.bf16.xpose.msra.mxu0 0
        %1380 = vmatprep.subr.bf16.mxu0 0
        %1381 = vmatpush1.bf16.xpose.msra.mxu0 0
        %1382 = vmatprep.mubr.bf16.mxu0 0
        %1383 = vmatmul.mubr.bf16.gmra.mrb[0].mxu0 %v1315
        %v1384 = vpop.f32.mrb[0].mxu0
        %v1385 = vadd.f32 %v983, %v1384
        %v1386 = vpop.f32.mrb[0].mxu0
        %v1387 = vpop.f32.mrb[0].mxu0
        %v1388 = vadd.f32 %v984, %v1387
        %v1389 = vpop.f32.mrb[0].mxu0
        %1390 = vmatprep.mubr.bf16.mxu0 0
        %1391 = vmatmul.mubr.bf16.gmra.mrb[0].mxu0 %v1318
        %v1392 = vpop.f32.mrb[0].mxu0
        %v1393 = vadd.f32 %v985, %v1392
        %v1394 = vpop.f32.mrb[0].mxu0
        %v1395 = vpop.f32.mrb[0].mxu0
        %v1396 = vadd.f32 %v986, %v1395
        %v1397 = vpop.f32.mrb[0].mxu0
        %1398 = vmatprep.mubr.bf16.mxu0 0
        %1399 = vmatmul.mubr.bf16.gmra.mrb[0].mxu0 %v1321
        %v1400 = vpop.f32.mrb[0].mxu0
        %v1401 = vadd.f32 %v987, %v1400
        %v1402 = vpop.f32.mrb[0].mxu0
        %v1403 = vpop.f32.mrb[0].mxu0
        %v1404 = vadd.f32 %v988, %v1403
        %v1405 = vpop.f32.mrb[0].mxu0
        %1406 = vmatprep.mubr.bf16.mxu0 0
        %1407 = vmatmul.mubr.bf16.gmra.mrb[0].mxu0 %v1324
        %v1408 = vpop.f32.mrb[0].mxu0
        %v1409 = vadd.f32 %v989, %v1408
        %v1410 = vpop.f32.mrb[0].mxu0
        %v1411 = vpop.f32.mrb[0].mxu0
        %v1412 = vadd.f32 %v990, %v1411
        %v1413 = vpop.f32.mrb[0].mxu0
        %1414 = vdwg.mxu0
        %1415 = vmax.xlane.f32.xlu0 %v1385
        %v1416 = vpop.xlane.xlu0 %1415
        %1417 = vmax.xlane.f32.xlu0 %v1388
        %v1418 = vpop.xlane.xlu0 %1417
        %1419 = vmax.xlane.f32.xlu0 %v1393
        %v1420 = vpop.xlane.xlu0 %1419
        %1421 = vmax.xlane.f32.xlu0 %v1396
        %v1422 = vpop.xlane.xlu0 %1421
        %1423 = vmax.xlane.f32.xlu0 %v1401
        %v1424 = vpop.xlane.xlu0 %1423
        %1425 = vmax.xlane.f32.xlu0 %v1404
        %v1426 = vpop.xlane.xlu0 %1425
        %1427 = vmax.xlane.f32.xlu0 %v1409
        %v1428 = vpop.xlane.xlu0 %1427
        %1429 = vmax.xlane.f32.xlu0 %v1412
        %v1430 = vpop.xlane.xlu0 %1429
        %v1431 = vsub.f32 %v1385, %v1416
        %v1432 = vsub.f32 %v1388, %v1418
        %v1433 = vsub.f32 %v1393, %v1420
        %v1434 = vsub.f32 %v1396, %v1422
        %v1435 = vsub.f32 %v1401, %v1424
        %v1436 = vsub.f32 %v1404, %v1426
        %v1437 = vsub.f32 %v1409, %v1428
        %v1438 = vsub.f32 %v1412, %v1430
        %v1439 = vmul.f32 %v1431, 1.442695
        %v1440 = vpow.pop %v1439
        %v1441 = vmul.f32 %v1432, 1.442695
        %v1442 = vpow.pop %v1441
        %v1443 = vmul.f32 %v1433, 1.442695
        %v1444 = vpow.pop %v1443
        %v1445 = vmul.f32 %v1434, 1.442695
        %v1446 = vpow.pop %v1445
        %v1447 = vmul.f32 %v1435, 1.442695
        %v1448 = vpow.pop %v1447
        %v1449 = vmul.f32 %v1436, 1.442695
        %v1450 = vpow.pop %v1449
        %v1451 = vmul.f32 %v1437, 1.442695
        %v1452 = vpow.pop %v1451
        %v1453 = vmul.f32 %v1438, 1.442695
        %v1454 = vpow.pop %v1453
        %1455 = vadd.xlane.f32.xlu0 %v1440
        %v1456 = vpop.xlane.xlu0 %1455
        %1457 = vadd.xlane.f32.xlu0 %v1442
        %v1458 = vpop.xlane.xlu0 %1457
        %1459 = vadd.xlane.f32.xlu0 %v1444
        %v1460 = vpop.xlane.xlu0 %1459
        %1461 = vadd.xlane.f32.xlu0 %v1446
        %v1462 = vpop.xlane.xlu0 %1461
        %1463 = vadd.xlane.f32.xlu0 %v1448
        %v1464 = vpop.xlane.xlu0 %1463
        %1465 = vadd.xlane.f32.xlu0 %v1450
        %v1466 = vpop.xlane.xlu0 %1465
        %1467 = vadd.xlane.f32.xlu0 %v1452
        %v1468 = vpop.xlane.xlu0 %1467
        %1469 = vadd.xlane.f32.xlu0 %v1454
        %v1470 = vpop.xlane.xlu0 %1469
        %v1471 = vrcp.pop %v1456
        %v1472 = vrcp.pop %v1458
        %v1473 = vrcp.pop %v1460
        %v1474 = vrcp.pop %v1462
        %v1475 = vrcp.pop %v1464
        %v1476 = vrcp.pop %v1466
        %v1477 = vrcp.pop %v1468
        %v1478 = vrcp.pop %v1470
        %v1479 = vmul.f32 %v1440, %v1471
        %v1480 = vmul.f32 %v1442, %v1472
        %v1481 = vmul.f32 %v1444, %v1473
        %v1482 = vmul.f32 %v1446, %v1474
        %v1483 = vmul.f32 %v1448, %v1475
        %v1484 = vmul.f32 %v1450, %v1476
        %v1485 = vmul.f32 %v1452, %v1477
        %v1486 = vmul.f32 %v1454, %v1478
        %v1487 = vpack.c.bf16 %v1480, %v1479
        %v1488 = vpack.c.bf16 %v1482, %v1481
        %v1489 = vpack.c.bf16 %v1484, %v1483
        %v1490 = vpack.c.bf16 %v1486, %v1485
        %v1495 = vunpack.c.l.b16 %v1487
        %v1496 = vunpack.c.h.b16 %v1487
        %v1497 = vunpack.c.l.b16 %v1488
        %v1498 = vunpack.c.h.b16 %v1488
        %v1499 = vunpack.c.l.b16 %v1489
        %v1500 = vunpack.c.h.b16 %v1489
        %v1501 = vunpack.c.l.b16 %v1490
        %v1502 = vunpack.c.h.b16 %v1490
        %v1503 = vpack.c.b16 %v1495, %v1495
        %v1504 = vpack.c.b16 %v1496, %v1496
        %v1505 = vpack.c.b16 %v1497, %v1497
        %v1506 = vpack.c.b16 %v1498, %v1498
        %v1507 = vpack.c.b16 %v1499, %v1499
        %v1508 = vpack.c.b16 %v1500, %v1500
        %v1509 = vpack.c.b16 %v1501, %v1501
        %v1510 = vpack.c.b16 %v1502, %v1502
        %s1519 = scalar_lea.vmem %s535, 32 [#allocation17]
        %1520 = vst [vmem:[%s1519] sm:$0xf] %v1503
        %1521 = vst [vmem:[%s1519 + $0x4] sm:$0xf] %v1504
        %1522 = vst [vmem:[%s1519 + $0x8] sm:$0xf] %v1505
        %1523 = vst [vmem:[%s1519 + $0xc] sm:$0xf] %v1506
        %1524 = vst [vmem:[%s1519 + $0x10] sm:$0xf] %v1507
        %1525 = vst [vmem:[%s1519 + $0x14] sm:$0xf] %v1508
        %1526 = vst [vmem:[%s1519 + $0x18] sm:$0xf] %v1509
        %1527 = vst [vmem:[%s1519 + $0x1c] sm:$0xf] %v1510
        %1536 = vrot.lane.b32.xlu0 %v960, 96
        %v1537 = vpop.permute.xlu0 %1536
        %1538 = vrot.lane.b32.xlu0 %v962, 96
        %v1539 = vpop.permute.xlu0 %1538
        %1540 = vrot.lane.b32.xlu0 %v964, 96
        %v1541 = vpop.permute.xlu0 %1540
        %1542 = vrot.lane.b32.xlu0 %v966, 96
        %v1543 = vpop.permute.xlu0 %1542
        %1544 = vrot.lane.b32.xlu0 %v968, 96
        %v1545 = vpop.permute.xlu0 %1544
        %1546 = vrot.lane.b32.xlu0 %v970, 96
        %v1547 = vpop.permute.xlu0 %1546
        %1548 = vrot.lane.b32.xlu0 %v972, 96
        %v1549 = vpop.permute.xlu0 %1548
        %1550 = vrot.lane.b32.xlu0 %v974, 96
        %v1551 = vpop.permute.xlu0 %1550
        %1560 = vmatprep.subr.bf16.mxu0 0
        %1561 = vmatpush1.bf16.msra.mxu0 %v1537
        %1562 = vmatprep.subr.bf16.mxu0 0
        %1563 = vmatpush1.bf16.msra.mxu0 %v1539
        %1564 = vmatprep.subr.bf16.mxu0 0
        %1565 = vmatpush1.bf16.msra.mxu0 %v1541
        %1566 = vmatprep.subr.bf16.mxu0 0
        %1567 = vmatpush1.bf16.msra.mxu0 %v1543
        %1568 = vmatprep.subr.bf16.mxu0 0
        %1569 = vmatpush1.bf16.msra.mxu0 %v1545
        %1570 = vmatprep.subr.bf16.mxu0 0
        %1571 = vmatpush1.bf16.msra.mxu0 %v1547
        %1572 = vmatprep.subr.bf16.mxu0 0
        %1573 = vmatpush1.bf16.msra.mxu0 %v1549
        %1574 = vmatprep.subr.bf16.mxu0 0
        %1575 = vmatpush1.bf16.msra.mxu0 %v1551
        %1576 = vmatprep.subr.bf16.mxu0 0
        %1577 = vmatpush1.bf16.msra.mxu0 0
        %1578 = vmatprep.subr.bf16.mxu0 0
        %1579 = vmatpush1.bf16.msra.mxu0 0
        %1580 = vmatprep.subr.bf16.mxu0 0
        %1581 = vmatpush1.bf16.msra.mxu0 0
        %1582 = vmatprep.subr.bf16.mxu0 0
        %1583 = vmatpush1.bf16.msra.mxu0 0
        %1584 = vmatprep.subr.bf16.mxu0 0
        %1585 = vmatpush1.bf16.msra.mxu0 0
        %1586 = vmatprep.subr.bf16.mxu0 0
        %1587 = vmatpush1.bf16.msra.mxu0 0
        %1588 = vmatprep.subr.bf16.mxu0 0
        %1589 = vmatpush1.bf16.msra.mxu0 0
        %1590 = vmatprep.subr.bf16.mxu0 0
        %1591 = vmatpush1.bf16.msra.mxu0 0
        %1592 = vmatprep.mubr.bf16.mxu0 0
        %1593 = vmatmul.mubr.bf16.gmra.mrb[0].mxu0 %v1487
        %v1594 = vpop.f32.mrb[0].mxu0
        %v1595 = vadd.f32 0.0, %v1594
        %v1596 = vpop.f32.mrb[0].mxu0
        %v1597 = vpop.f32.mrb[0].mxu0
        %v1598 = vadd.f32 0.0, %v1597
        %v1599 = vpop.f32.mrb[0].mxu0
        %1600 = vmatprep.mubr.bf16.mxu0 0
        %1601 = vmatmul.mubr.bf16.gmra.mrb[0].mxu0 %v1488
        %v1602 = vpop.f32.mrb[0].mxu0
        %v1603 = vadd.f32 0.0, %v1602
        %v1604 = vpop.f32.mrb[0].mxu0
        %v1605 = vpop.f32.mrb[0].mxu0
        %v1606 = vadd.f32 0.0, %v1605
        %v1607 = vpop.f32.mrb[0].mxu0
        %1608 = vmatprep.mubr.bf16.mxu0 0
        %1609 = vmatmul.mubr.bf16.gmra.mrb[0].mxu0 %v1489
        %v1610 = vpop.f32.mrb[0].mxu0
        %v1611 = vadd.f32 0.0, %v1610
        %v1612 = vpop.f32.mrb[0].mxu0
        %v1613 = vpop.f32.mrb[0].mxu0
        %v1614 = vadd.f32 0.0, %v1613
        %v1615 = vpop.f32.mrb[0].mxu0
        %1616 = vmatprep.mubr.bf16.mxu0 0
        %1617 = vmatmul.mubr.bf16.gmra.mrb[0].mxu0 %v1490
        %v1618 = vpop.f32.mrb[0].mxu0
        %v1619 = vadd.f32 0.0, %v1618
        %v1620 = vpop.f32.mrb[0].mxu0
        %v1621 = vpop.f32.mrb[0].mxu0
        %v1622 = vadd.f32 0.0, %v1621
        %v1623 = vpop.f32.mrb[0].mxu0
        %1624 = vdwg.mxu0
        %v1625 = vpack.c.bf16 %v1598, %v1595
        %v1626 = vpack.c.bf16 %v1606, %v1603
        %v1627 = vpack.c.bf16 %v1614, %v1611
        %v1628 = vpack.c.bf16 %v1622, %v1619
        %v1629 = vld [vmem:[#allocation11 + $0x10] sm:$0xf]
        %v1630 = vld [vmem:[#allocation11 + $0x14] sm:$0xf]
        %v1631 = vld [vmem:[#allocation11 + $0x18] sm:$0xf]
        %v1632 = vld [vmem:[#allocation11 + $0x1c] sm:$0xf]
        %v1637 = vunpack.c.l.b16 %v1629
        %v1638 = vunpack.c.l.b16 %v1630
        %v1639 = vunpack.c.l.b16 %v1631
        %v1640 = vunpack.c.l.b16 %v1632
        %v1641 = vpack.c.b16 %v1638, %v1637
        %v1642 = vpack.c.b16 %v1640, %v1639
        %v1646 = vsel %vm991, %v1625, 0
        %v1649 = vsel %vm991, %v1626, 0
        %v1652 = vsel %vm991, %v1627, 0
        %v1655 = vsel %vm991, %v1628, 0
        %1657 = vmatprep.subr.bf16.mxu0 0
        %1658 = vmatpush1.bf16.msra.mxu0 %v1641
        %1659 = vmatprep.subr.bf16.mxu0 0
        %1660 = vmatpush1.bf16.msra.mxu0 %v1642
        %1661 = vmatprep.subr.bf16.mxu0 0
        %1662 = vmatpush1.bf16.msra.mxu0 0
        %1663 = vmatprep.subr.bf16.mxu0 0
        %1664 = vmatpush1.bf16.msra.mxu0 0
        %1665 = vmatprep.subr.bf16.mxu0 0
        %1666 = vmatpush1.bf16.msra.mxu0 0
        %1667 = vmatprep.subr.bf16.mxu0 0
        %1668 = vmatpush1.bf16.msra.mxu0 0
        %1669 = vmatprep.subr.bf16.mxu0 0
        %1670 = vmatpush1.bf16.msra.mxu0 0
        %1671 = vmatprep.subr.bf16.mxu0 0
        %1672 = vmatpush1.bf16.msra.mxu0 0
        %1673 = vmatprep.subr.bf16.mxu0 0
        %1674 = vmatpush1.bf16.msra.mxu0 0
        %1675 = vmatprep.subr.bf16.mxu0 0
        %1676 = vmatpush1.bf16.msra.mxu0 0
        %1677 = vmatprep.subr.bf16.mxu0 0
        %1678 = vmatpush1.bf16.msra.mxu0 0
        %1679 = vmatprep.subr.bf16.mxu0 0
        %1680 = vmatpush1.bf16.msra.mxu0 0
        %1681 = vmatprep.subr.bf16.mxu0 0
        %1682 = vmatpush1.bf16.msra.mxu0 0
        %1683 = vmatprep.subr.bf16.mxu0 0
        %1684 = vmatpush1.bf16.msra.mxu0 0
        %1685 = vmatprep.subr.bf16.mxu0 0
        %1686 = vmatpush1.bf16.msra.mxu0 0
        %1687 = vmatprep.subr.bf16.mxu0 0
        %1688 = vmatpush1.bf16.msra.mxu0 0
        %1689 = vmatprep.mubr.bf16.mxu0 0
        %1690 = vmatmul.mubr.bf16.gmra.mrb[0].mxu0 %v1646
        %v1691 = vpop.f32.mrb[0].mxu0
        %v1692 = vadd.f32 0.0, %v1691
        %v1693 = vpop.f32.mrb[0].mxu0
        %v1694 = vpop.f32.mrb[0].mxu0
        %v1695 = vadd.f32 0.0, %v1694
        %v1696 = vpop.f32.mrb[0].mxu0
        %1697 = vmatprep.mubr.bf16.mxu0 0
        %1698 = vmatmul.mubr.bf16.gmra.mrb[0].mxu0 %v1649
        %v1699 = vpop.f32.mrb[0].mxu0
        %v1700 = vadd.f32 0.0, %v1699
        %v1701 = vpop.f32.mrb[0].mxu0
        %v1702 = vpop.f32.mrb[0].mxu0
        %v1703 = vadd.f32 0.0, %v1702
        %v1704 = vpop.f32.mrb[0].mxu0
        %1705 = vmatprep.mubr.bf16.mxu0 0
        %1706 = vmatmul.mubr.bf16.gmra.mrb[0].mxu0 %v1652
        %v1707 = vpop.f32.mrb[0].mxu0
        %v1708 = vadd.f32 0.0, %v1707
        %v1709 = vpop.f32.mrb[0].mxu0
        %v1710 = vpop.f32.mrb[0].mxu0
        %v1711 = vadd.f32 0.0, %v1710
        %v1712 = vpop.f32.mrb[0].mxu0
        %1713 = vmatprep.mubr.bf16.mxu0 0
        %1714 = vmatmul.mubr.bf16.gmra.mrb[0].mxu0 %v1655
        %v1715 = vpop.f32.mrb[0].mxu0
        %v1716 = vadd.f32 0.0, %v1715
        %v1717 = vpop.f32.mrb[0].mxu0
        %v1718 = vpop.f32.mrb[0].mxu0
        %v1719 = vadd.f32 0.0, %v1718
        %v1720 = vpop.f32.mrb[0].mxu0
        %1721 = vdwg.mxu0
        %v1726 = vunpack.c.l.b16 %v1274
        %v1727 = vunpack.c.l.b16 %v1275
        %v1728 = vunpack.c.l.b16 %v1276
        %v1729 = vunpack.c.l.b16 %v1277
        %v1730 = vpack.c.b16 %v1727, %v1726
        %v1731 = vpack.c.b16 %v1729, %v1728
        %v1735 = vsel %vm991, %v1270, 0
        %v1738 = vsel %vm991, %v1271, 0
        %v1741 = vsel %vm991, %v1272, 0
        %v1744 = vsel %vm991, %v1273, 0
        %1746 = vmatprep.subr.bf16.mxu0 0
        %1747 = vmatpush1.bf16.msra.mxu0 %v1730
        %1748 = vmatprep.subr.bf16.mxu0 0
        %1749 = vmatpush1.bf16.msra.mxu0 %v1731
        %1750 = vmatprep.subr.bf16.mxu0 0
        %1751 = vmatpush1.bf16.msra.mxu0 0
        %1752 = vmatprep.subr.bf16.mxu0 0
        %1753 = vmatpush1.bf16.msra.mxu0 0
        %1754 = vmatprep.subr.bf16.mxu0 0
        %1755 = vmatpush1.bf16.msra.mxu0 0
        %1756 = vmatprep.subr.bf16.mxu0 0
        %1757 = vmatpush1.bf16.msra.mxu0 0
        %1758 = vmatprep.subr.bf16.mxu0 0
        %1759 = vmatpush1.bf16.msra.mxu0 0
        %1760 = vmatprep.subr.bf16.mxu0 0
        %1761 = vmatpush1.bf16.msra.mxu0 0
        %1762 = vmatprep.subr.bf16.mxu0 0
        %1763 = vmatpush1.bf16.msra.mxu0 0
        %1764 = vmatprep.subr.bf16.mxu0 0
        %1765 = vmatpush1.bf16.msra.mxu0 0
        %1766 = vmatprep.subr.bf16.mxu0 0
        %1767 = vmatpush1.bf16.msra.mxu0 0
        %1768 = vmatprep.subr.bf16.mxu0 0
        %1769 = vmatpush1.bf16.msra.mxu0 0
        %1770 = vmatprep.subr.bf16.mxu0 0
        %1771 = vmatpush1.bf16.msra.mxu0 0
        %1772 = vmatprep.subr.bf16.mxu0 0
        %1773 = vmatpush1.bf16.msra.mxu0 0
        %1774 = vmatprep.subr.bf16.mxu0 0
        %1775 = vmatpush1.bf16.msra.mxu0 0
        %1776 = vmatprep.subr.bf16.mxu0 0
        %1777 = vmatpush1.bf16.msra.mxu0 0
        %1778 = vmatprep.mubr.bf16.mxu0 0
        %1779 = vmatmul.mubr.bf16.gmra.mrb[0].mxu0 %v1735
        %v1780 = vpop.f32.mrb[0].mxu0
        %v1781 = vadd.f32 %v1692, %v1780
        %v1782 = vpop.f32.mrb[0].mxu0
        %v1783 = vpop.f32.mrb[0].mxu0
        %v1784 = vadd.f32 %v1695, %v1783
        %v1785 = vpop.f32.mrb[0].mxu0
        %1786 = vmatprep.mubr.bf16.mxu0 0
        %1787 = vmatmul.mubr.bf16.gmra.mrb[0].mxu0 %v1738
        %v1788 = vpop.f32.mrb[0].mxu0
        %v1789 = vadd.f32 %v1700, %v1788
        %v1790 = vpop.f32.mrb[0].mxu0
        %v1791 = vpop.f32.mrb[0].mxu0
        %v1792 = vadd.f32 %v1703, %v1791
        %v1793 = vpop.f32.mrb[0].mxu0
        %1794 = vmatprep.mubr.bf16.mxu0 0
        %1795 = vmatmul.mubr.bf16.gmra.mrb[0].mxu0 %v1741
        %v1796 = vpop.f32.mrb[0].mxu0
        %v1797 = vadd.f32 %v1708, %v1796
        %v1798 = vpop.f32.mrb[0].mxu0
        %v1799 = vpop.f32.mrb[0].mxu0
        %v1800 = vadd.f32 %v1711, %v1799
        %v1801 = vpop.f32.mrb[0].mxu0
        %1802 = vmatprep.mubr.bf16.mxu0 0
        %1803 = vmatmul.mubr.bf16.gmra.mrb[0].mxu0 %v1744
        %v1804 = vpop.f32.mrb[0].mxu0
        %v1805 = vadd.f32 %v1716, %v1804
        %v1806 = vpop.f32.mrb[0].mxu0
        %v1807 = vpop.f32.mrb[0].mxu0
        %v1808 = vadd.f32 %v1719, %v1807
        %v1809 = vpop.f32.mrb[0].mxu0
        %1810 = vdwg.mxu0
        %1811 = vrot.lane.b32.xlu0 %v698, 64
        %v1812 = vpop.permute.xlu0 %1811
        %1813 = vrot.lane.b32.xlu0 %v699, 64
        %v1814 = vpop.permute.xlu0 %1813
        %1815 = vrot.lane.b32.xlu0 %v700, 64
        %v1816 = vpop.permute.xlu0 %1815
        %1817 = vrot.lane.b32.xlu0 %v701, 64
        %v1818 = vpop.permute.xlu0 %1817
        %1819 = vrot.lane.b32.xlu0 %v959, 64
        %v1820 = vpop.permute.xlu0 %1819
        %1821 = vrot.lane.b32.xlu0 %v961, 64
        %v1822 = vpop.permute.xlu0 %1821
        %1823 = vrot.lane.b32.xlu0 %v963, 64
        %v1824 = vpop.permute.xlu0 %1823
        %1825 = vrot.lane.b32.xlu0 %v965, 64
        %v1826 = vpop.permute.xlu0 %1825
        %1827 = vrot.lane.b32.xlu0 %v967, 64
        %v1828 = vpop.permute.xlu0 %1827
        %1829 = vrot.lane.b32.xlu0 %v969, 64
        %v1830 = vpop.permute.xlu0 %1829
        %1831 = vrot.lane.b32.xlu0 %v971, 64
        %v1832 = vpop.permute.xlu0 %1831
        %1833 = vrot.lane.b32.xlu0 %v973, 64
        %v1834 = vpop.permute.xlu0 %1833
        %v1836 = vsel %vm991, %v1812, 0
        %v1839 = vsel %vm991, %v1814, 0
        %v1842 = vsel %vm991, %v1816, 0
        %v1845 = vsel %vm991, %v1818, 0
        %v1848 = vsel %vm991, %v1820, 0
        %v1851 = vsel %vm991, %v1822, 0
        %v1854 = vsel %vm991, %v1824, 0
        %v1857 = vsel %vm991, %v1826, 0
        %v1860 = vsel %vm991, %v1828, 0
        %v1863 = vsel %vm991, %v1830, 0
        %v1866 = vsel %vm991, %v1832, 0
        %v1869 = vsel %vm991, %v1834, 0
        %1871 = vmatprep.subr.bf16.mxu0 0
        %1872 = vmatpush1.bf16.xpose.msra.mxu0 %v1848
        %1873 = vmatprep.subr.bf16.mxu0 0
        %1874 = vmatpush1.bf16.xpose.msra.mxu0 %v1851
        %1875 = vmatprep.subr.bf16.mxu0 0
        %1876 = vmatpush1.bf16.xpose.msra.mxu0 %v1854
        %1877 = vmatprep.subr.bf16.mxu0 0
        %1878 = vmatpush1.bf16.xpose.msra.mxu0 %v1857
        %1879 = vmatprep.subr.bf16.mxu0 0
        %1880 = vmatpush1.bf16.xpose.msra.mxu0 %v1860
        %1881 = vmatprep.subr.bf16.mxu0 0
        %1882 = vmatpush1.bf16.xpose.msra.mxu0 %v1863
        %1883 = vmatprep.subr.bf16.mxu0 0
        %1884 = vmatpush1.bf16.xpose.msra.mxu0 %v1866
        %1885 = vmatprep.subr.bf16.mxu0 0
        %1886 = vmatpush1.bf16.xpose.msra.mxu0 %v1869
        %1887 = vmatprep.subr.bf16.mxu0 0
        %1888 = vmatpush1.bf16.xpose.msra.mxu0 0
        %1889 = vmatprep.subr.bf16.mxu0 0
        %1890 = vmatpush1.bf16.xpose.msra.mxu0 0
        %1891 = vmatprep.subr.bf16.mxu0 0
        %1892 = vmatpush1.bf16.xpose.msra.mxu0 0
        %1893 = vmatprep.subr.bf16.mxu0 0
        %1894 = vmatpush1.bf16.xpose.msra.mxu0 0
        %1895 = vmatprep.subr.bf16.mxu0 0
        %1896 = vmatpush1.bf16.xpose.msra.mxu0 0
        %1897 = vmatprep.subr.bf16.mxu0 0
        %1898 = vmatpush1.bf16.xpose.msra.mxu0 0
        %1899 = vmatprep.subr.bf16.mxu0 0
        %1900 = vmatpush1.bf16.xpose.msra.mxu0 0
        %1901 = vmatprep.subr.bf16.mxu0 0
        %1902 = vmatpush1.bf16.xpose.msra.mxu0 0
        %1903 = vmatprep.mubr.bf16.mxu0 0
        %1904 = vmatmul.mubr.bf16.gmra.mrb[0].mxu0 %v1836
        %v1905 = vpop.f32.mrb[0].mxu0
        %v1906 = vadd.f32 %v983, %v1905
        %v1907 = vpop.f32.mrb[0].mxu0
        %v1908 = vpop.f32.mrb[0].mxu0
        %v1909 = vadd.f32 %v984, %v1908
        %v1910 = vpop.f32.mrb[0].mxu0
        %1911 = vmatprep.mubr.bf16.mxu0 0
        %1912 = vmatmul.mubr.bf16.gmra.mrb[0].mxu0 %v1839
        %v1913 = vpop.f32.mrb[0].mxu0
        %v1914 = vadd.f32 %v985, %v1913
        %v1915 = vpop.f32.mrb[0].mxu0
        %v1916 = vpop.f32.mrb[0].mxu0
        %v1917 = vadd.f32 %v986, %v1916
        %v1918 = vpop.f32.mrb[0].mxu0
        %1919 = vmatprep.mubr.bf16.mxu0 0
        %1920 = vmatmul.mubr.bf16.gmra.mrb[0].mxu0 %v1842
        %v1921 = vpop.f32.mrb[0].mxu0
        %v1922 = vadd.f32 %v987, %v1921
        %v1923 = vpop.f32.mrb[0].mxu0
        %v1924 = vpop.f32.mrb[0].mxu0
        %v1925 = vadd.f32 %v988, %v1924
        %v1926 = vpop.f32.mrb[0].mxu0
        %1927 = vmatprep.mubr.bf16.mxu0 0
        %1928 = vmatmul.mubr.bf16.gmra.mrb[0].mxu0 %v1845
        %v1929 = vpop.f32.mrb[0].mxu0
        %v1930 = vadd.f32 %v989, %v1929
        %v1931 = vpop.f32.mrb[0].mxu0
        %v1932 = vpop.f32.mrb[0].mxu0
        %v1933 = vadd.f32 %v990, %v1932
        %v1934 = vpop.f32.mrb[0].mxu0
        %1935 = vdwg.mxu0
        %1936 = vmax.xlane.f32.xlu0 %v1906
        %v1937 = vpop.xlane.xlu0 %1936
        %1938 = vmax.xlane.f32.xlu0 %v1909
        %v1939 = vpop.xlane.xlu0 %1938
        %1940 = vmax.xlane.f32.xlu0 %v1914
        %v1941 = vpop.xlane.xlu0 %1940
        %1942 = vmax.xlane.f32.xlu0 %v1917
        %v1943 = vpop.xlane.xlu0 %1942
        %1944 = vmax.xlane.f32.xlu0 %v1922
        %v1945 = vpop.xlane.xlu0 %1944
        %1946 = vmax.xlane.f32.xlu0 %v1925
        %v1947 = vpop.xlane.xlu0 %1946
        %1948 = vmax.xlane.f32.xlu0 %v1930
        %v1949 = vpop.xlane.xlu0 %1948
        %1950 = vmax.xlane.f32.xlu0 %v1933
        %v1951 = vpop.xlane.xlu0 %1950
        %v1952 = vsub.f32 %v1906, %v1937
        %v1953 = vsub.f32 %v1909, %v1939
        %v1954 = vsub.f32 %v1914, %v1941
        %v1955 = vsub.f32 %v1917, %v1943
        %v1956 = vsub.f32 %v1922, %v1945
        %v1957 = vsub.f32 %v1925, %v1947
        %v1958 = vsub.f32 %v1930, %v1949
        %v1959 = vsub.f32 %v1933, %v1951
        %v1960 = vmul.f32 %v1952, 1.442695
        %v1961 = vpow.pop %v1960
        %v1962 = vmul.f32 %v1953, 1.442695
        %v1963 = vpow.pop %v1962
        %v1964 = vmul.f32 %v1954, 1.442695
        %v1965 = vpow.pop %v1964
        %v1966 = vmul.f32 %v1955, 1.442695
        %v1967 = vpow.pop %v1966
        %v1968 = vmul.f32 %v1956, 1.442695
        %v1969 = vpow.pop %v1968
        %v1970 = vmul.f32 %v1957, 1.442695
        %v1971 = vpow.pop %v1970
        %v1972 = vmul.f32 %v1958, 1.442695
        %v1973 = vpow.pop %v1972
        %v1974 = vmul.f32 %v1959, 1.442695
        %v1975 = vpow.pop %v1974
        %1976 = vadd.xlane.f32.xlu0 %v1961
        %v1977 = vpop.xlane.xlu0 %1976
        %1978 = vadd.xlane.f32.xlu0 %v1963
        %v1979 = vpop.xlane.xlu0 %1978
        %1980 = vadd.xlane.f32.xlu0 %v1965
        %v1981 = vpop.xlane.xlu0 %1980
        %1982 = vadd.xlane.f32.xlu0 %v1967
        %v1983 = vpop.xlane.xlu0 %1982
        %1984 = vadd.xlane.f32.xlu0 %v1969
        %v1985 = vpop.xlane.xlu0 %1984
        %1986 = vadd.xlane.f32.xlu0 %v1971
        %v1987 = vpop.xlane.xlu0 %1986
        %1988 = vadd.xlane.f32.xlu0 %v1973
        %v1989 = vpop.xlane.xlu0 %1988
        %1990 = vadd.xlane.f32.xlu0 %v1975
        %v1991 = vpop.xlane.xlu0 %1990
        %v1992 = vrcp.pop %v1977
        %v1993 = vrcp.pop %v1979
        %v1994 = vrcp.pop %v1981
        %v1995 = vrcp.pop %v1983
        %v1996 = vrcp.pop %v1985
        %v1997 = vrcp.pop %v1987
        %v1998 = vrcp.pop %v1989
        %v1999 = vrcp.pop %v1991
        %v2000 = vmul.f32 %v1961, %v1992
        %v2001 = vmul.f32 %v1963, %v1993
        %v2002 = vmul.f32 %v1965, %v1994
        %v2003 = vmul.f32 %v1967, %v1995
        %v2004 = vmul.f32 %v1969, %v1996
        %v2005 = vmul.f32 %v1971, %v1997
        %v2006 = vmul.f32 %v1973, %v1998
        %v2007 = vmul.f32 %v1975, %v1999
        %v2008 = vpack.c.bf16 %v2001, %v2000
        %v2009 = vpack.c.bf16 %v2003, %v2002
        %v2010 = vpack.c.bf16 %v2005, %v2004
        %v2011 = vpack.c.bf16 %v2007, %v2006
        %v2016 = vunpack.c.l.b16 %v2008
        %v2017 = vunpack.c.h.b16 %v2008
        %v2018 = vunpack.c.l.b16 %v2009
        %v2019 = vunpack.c.h.b16 %v2009
        %v2020 = vunpack.c.l.b16 %v2010
        %v2021 = vunpack.c.h.b16 %v2010
        %v2022 = vunpack.c.l.b16 %v2011
        %v2023 = vunpack.c.h.b16 %v2011
        %v2024 = vpack.c.b16 %v2016, %v2016
        %v2025 = vpack.c.b16 %v2017, %v2017
        %v2026 = vpack.c.b16 %v2018, %v2018
        %v2027 = vpack.c.b16 %v2019, %v2019
        %v2028 = vpack.c.b16 %v2020, %v2020
        %v2029 = vpack.c.b16 %v2021, %v2021
        %v2030 = vpack.c.b16 %v2022, %v2022
        %v2031 = vpack.c.b16 %v2023, %v2023
        %s2040 = scalar_lea.vmem %s535, 64 [#allocation17]
        %2041 = vst [vmem:[%s2040] sm:$0xf] %v2024
        %2042 = vst [vmem:[%s2040 + $0x4] sm:$0xf] %v2025
        %2043 = vst [vmem:[%s2040 + $0x8] sm:$0xf] %v2026
        %2044 = vst [vmem:[%s2040 + $0xc] sm:$0xf] %v2027
        %2045 = vst [vmem:[%s2040 + $0x10] sm:$0xf] %v2028
        %2046 = vst [vmem:[%s2040 + $0x14] sm:$0xf] %v2029
        %2047 = vst [vmem:[%s2040 + $0x18] sm:$0xf] %v2030
        %2048 = vst [vmem:[%s2040 + $0x1c] sm:$0xf] %v2031
        %2049 = vrot.lane.b32.xlu0 %v960, 64
        %v2050 = vpop.permute.xlu0 %2049
        %2051 = vrot.lane.b32.xlu0 %v962, 64
        %v2052 = vpop.permute.xlu0 %2051
        %2053 = vrot.lane.b32.xlu0 %v964, 64
        %v2054 = vpop.permute.xlu0 %2053
        %2055 = vrot.lane.b32.xlu0 %v966, 64
        %v2056 = vpop.permute.xlu0 %2055
        %2057 = vrot.lane.b32.xlu0 %v968, 64
        %v2058 = vpop.permute.xlu0 %2057
        %2059 = vrot.lane.b32.xlu0 %v970, 64
        %v2060 = vpop.permute.xlu0 %2059
        %2061 = vrot.lane.b32.xlu0 %v972, 64
        %v2062 = vpop.permute.xlu0 %2061
        %2063 = vrot.lane.b32.xlu0 %v974, 64
        %v2064 = vpop.permute.xlu0 %2063
        %2073 = vmatprep.subr.bf16.mxu0 0
        %2074 = vmatpush1.bf16.msra.mxu0 %v2050
        %2075 = vmatprep.subr.bf16.mxu0 0
        %2076 = vmatpush1.bf16.msra.mxu0 %v2052
        %2077 = vmatprep.subr.bf16.mxu0 0
        %2078 = vmatpush1.bf16.msra.mxu0 %v2054
        %2079 = vmatprep.subr.bf16.mxu0 0
        %2080 = vmatpush1.bf16.msra.mxu0 %v2056
        %2081 = vmatprep.subr.bf16.mxu0 0
        %2082 = vmatpush1.bf16.msra.mxu0 %v2058
        %2083 = vmatprep.subr.bf16.mxu0 0
        %2084 = vmatpush1.bf16.msra.mxu0 %v2060
        %2085 = vmatprep.subr.bf16.mxu0 0
        %2086 = vmatpush1.bf16.msra.mxu0 %v2062
        %2087 = vmatprep.subr.bf16.mxu0 0
        %2088 = vmatpush1.bf16.msra.mxu0 %v2064
        %2089 = vmatprep.subr.bf16.mxu0 0
        %2090 = vmatpush1.bf16.msra.mxu0 0
        %2091 = vmatprep.subr.bf16.mxu0 0
        %2092 = vmatpush1.bf16.msra.mxu0 0
        %2093 = vmatprep.subr.bf16.mxu0 0
        %2094 = vmatpush1.bf16.msra.mxu0 0
        %2095 = vmatprep.subr.bf16.mxu0 0
        %2096 = vmatpush1.bf16.msra.mxu0 0
        %2097 = vmatprep.subr.bf16.mxu0 0
        %2098 = vmatpush1.bf16.msra.mxu0 0
        %2099 = vmatprep.subr.bf16.mxu0 0
        %2100 = vmatpush1.bf16.msra.mxu0 0
        %2101 = vmatprep.subr.bf16.mxu0 0
        %2102 = vmatpush1.bf16.msra.mxu0 0
        %2103 = vmatprep.subr.bf16.mxu0 0
        %2104 = vmatpush1.bf16.msra.mxu0 0
        %2105 = vmatprep.mubr.bf16.mxu0 0
        %2106 = vmatmul.mubr.bf16.gmra.mrb[0].mxu0 %v2008
        %v2107 = vpop.f32.mrb[0].mxu0
        %v2108 = vadd.f32 0.0, %v2107
        %v2109 = vpop.f32.mrb[0].mxu0
        %v2110 = vpop.f32.mrb[0].mxu0
        %v2111 = vadd.f32 0.0, %v2110
        %v2112 = vpop.f32.mrb[0].mxu0
        %2113 = vmatprep.mubr.bf16.mxu0 0
        %2114 = vmatmul.mubr.bf16.gmra.mrb[0].mxu0 %v2009
        %v2115 = vpop.f32.mrb[0].mxu0
        %v2116 = vadd.f32 0.0, %v2115
        %v2117 = vpop.f32.mrb[0].mxu0
        %v2118 = vpop.f32.mrb[0].mxu0
        %v2119 = vadd.f32 0.0, %v2118
        %v2120 = vpop.f32.mrb[0].mxu0
        %2121 = vmatprep.mubr.bf16.mxu0 0
        %2122 = vmatmul.mubr.bf16.gmra.mrb[0].mxu0 %v2010
        %v2123 = vpop.f32.mrb[0].mxu0
        %v2124 = vadd.f32 0.0, %v2123
        %v2125 = vpop.f32.mrb[0].mxu0
        %v2126 = vpop.f32.mrb[0].mxu0
        %v2127 = vadd.f32 0.0, %v2126
        %v2128 = vpop.f32.mrb[0].mxu0
        %2129 = vmatprep.mubr.bf16.mxu0 0
        %2130 = vmatmul.mubr.bf16.gmra.mrb[0].mxu0 %v2011
        %v2131 = vpop.f32.mrb[0].mxu0
        %v2132 = vadd.f32 0.0, %v2131
        %v2133 = vpop.f32.mrb[0].mxu0
        %v2134 = vpop.f32.mrb[0].mxu0
        %v2135 = vadd.f32 0.0, %v2134
        %v2136 = vpop.f32.mrb[0].mxu0
        %2137 = vdwg.mxu0
        %v2138 = vpack.c.bf16 %v2111, %v2108
        %v2139 = vpack.c.bf16 %v2119, %v2116
        %v2140 = vpack.c.bf16 %v2127, %v2124
        %v2141 = vpack.c.bf16 %v2135, %v2132
        %v2142 = vld [vmem:[#allocation11 + $0x20] sm:$0xf]
        %v2143 = vld [vmem:[#allocation11 + $0x24] sm:$0xf]
        %v2144 = vld [vmem:[#allocation11 + $0x28] sm:$0xf]
        %v2145 = vld [vmem:[#allocation11 + $0x2c] sm:$0xf]
        %v2150 = vunpack.c.l.b16 %v2142
        %v2151 = vunpack.c.l.b16 %v2143
        %v2152 = vunpack.c.l.b16 %v2144
        %v2153 = vunpack.c.l.b16 %v2145
        %v2154 = vpack.c.b16 %v2151, %v2150
        %v2155 = vpack.c.b16 %v2153, %v2152
        %v2159 = vsel %vm991, %v2138, 0
        %v2162 = vsel %vm991, %v2139, 0
        %v2165 = vsel %vm991, %v2140, 0
        %v2168 = vsel %vm991, %v2141, 0
        %2170 = vmatprep.subr.bf16.mxu0 0
        %2171 = vmatpush1.bf16.msra.mxu0 %v2154
        %2172 = vmatprep.subr.bf16.mxu0 0
        %2173 = vmatpush1.bf16.msra.mxu0 %v2155
        %2174 = vmatprep.subr.bf16.mxu0 0
        %2175 = vmatpush1.bf16.msra.mxu0 0
        %2176 = vmatprep.subr.bf16.mxu0 0
        %2177 = vmatpush1.bf16.msra.mxu0 0
        %2178 = vmatprep.subr.bf16.mxu0 0
        %2179 = vmatpush1.bf16.msra.mxu0 0
        %2180 = vmatprep.subr.bf16.mxu0 0
        %2181 = vmatpush1.bf16.msra.mxu0 0
        %2182 = vmatprep.subr.bf16.mxu0 0
        %2183 = vmatpush1.bf16.msra.mxu0 0
        %2184 = vmatprep.subr.bf16.mxu0 0
        %2185 = vmatpush1.bf16.msra.mxu0 0
        %2186 = vmatprep.subr.bf16.mxu0 0
        %2187 = vmatpush1.bf16.msra.mxu0 0
        %2188 = vmatprep.subr.bf16.mxu0 0
        %2189 = vmatpush1.bf16.msra.mxu0 0
        %2190 = vmatprep.subr.bf16.mxu0 0
        %2191 = vmatpush1.bf16.msra.mxu0 0
        %2192 = vmatprep.subr.bf16.mxu0 0
        %2193 = vmatpush1.bf16.msra.mxu0 0
        %2194 = vmatprep.subr.bf16.mxu0 0
        %2195 = vmatpush1.bf16.msra.mxu0 0
        %2196 = vmatprep.subr.bf16.mxu0 0
        %2197 = vmatpush1.bf16.msra.mxu0 0
        %2198 = vmatprep.subr.bf16.mxu0 0
        %2199 = vmatpush1.bf16.msra.mxu0 0
        %2200 = vmatprep.subr.bf16.mxu0 0
        %2201 = vmatpush1.bf16.msra.mxu0 0
        %2202 = vmatprep.mubr.bf16.mxu0 0
        %2203 = vmatmul.mubr.bf16.gmra.mrb[0].mxu0 %v2159
        %v2204 = vpop.f32.mrb[0].mxu0
        %v2205 = vadd.f32 0.0, %v2204
        %v2206 = vpop.f32.mrb[0].mxu0
        %v2207 = vpop.f32.mrb[0].mxu0
        %v2208 = vadd.f32 0.0, %v2207
        %v2209 = vpop.f32.mrb[0].mxu0
        %2210 = vmatprep.mubr.bf16.mxu0 0
        %2211 = vmatmul.mubr.bf16.gmra.mrb[0].mxu0 %v2162
        %v2212 = vpop.f32.mrb[0].mxu0
        %v2213 = vadd.f32 0.0, %v2212
        %v2214 = vpop.f32.mrb[0].mxu0
        %v2215 = vpop.f32.mrb[0].mxu0
        %v2216 = vadd.f32 0.0, %v2215
        %v2217 = vpop.f32.mrb[0].mxu0
        %2218 = vmatprep.mubr.bf16.mxu0 0
        %2219 = vmatmul.mubr.bf16.gmra.mrb[0].mxu0 %v2165
        %v2220 = vpop.f32.mrb[0].mxu0
        %v2221 = vadd.f32 0.0, %v2220
        %v2222 = vpop.f32.mrb[0].mxu0
        %v2223 = vpop.f32.mrb[0].mxu0
        %v2224 = vadd.f32 0.0, %v2223
        %v2225 = vpop.f32.mrb[0].mxu0
        %2226 = vmatprep.mubr.bf16.mxu0 0
        %2227 = vmatmul.mubr.bf16.gmra.mrb[0].mxu0 %v2168
        %v2228 = vpop.f32.mrb[0].mxu0
        %v2229 = vadd.f32 0.0, %v2228
        %v2230 = vpop.f32.mrb[0].mxu0
        %v2231 = vpop.f32.mrb[0].mxu0
        %v2232 = vadd.f32 0.0, %v2231
        %v2233 = vpop.f32.mrb[0].mxu0
        %2234 = vdwg.mxu0
        %v2235 = vadd.f32 %v1781, %v2205
        %v2236 = vadd.f32 %v1784, %v2208
        %v2237 = vadd.f32 %v1789, %v2213
        %v2238 = vadd.f32 %v1792, %v2216
        %v2239 = vadd.f32 %v1797, %v2221
        %v2240 = vadd.f32 %v1800, %v2224
        %v2241 = vadd.f32 %v1805, %v2229
        %v2242 = vadd.f32 %v1808, %v2232
        %2243 = vrot.lane.b32.xlu0 %v698, 32
        %v2244 = vpop.permute.xlu0 %2243
        %2245 = vrot.lane.b32.xlu0 %v699, 32
        %v2246 = vpop.permute.xlu0 %2245
        %2247 = vrot.lane.b32.xlu0 %v700, 32
        %v2248 = vpop.permute.xlu0 %2247
        %2249 = vrot.lane.b32.xlu0 %v701, 32
        %v2250 = vpop.permute.xlu0 %2249
        %2251 = vrot.lane.b32.xlu0 %v959, 32
        %v2252 = vpop.permute.xlu0 %2251
        %2253 = vrot.lane.b32.xlu0 %v961, 32
        %v2254 = vpop.permute.xlu0 %2253
        %2255 = vrot.lane.b32.xlu0 %v963, 32
        %v2256 = vpop.permute.xlu0 %2255
        %2257 = vrot.lane.b32.xlu0 %v965, 32
        %v2258 = vpop.permute.xlu0 %2257
        %2259 = vrot.lane.b32.xlu0 %v967, 32
        %v2260 = vpop.permute.xlu0 %2259
        %2261 = vrot.lane.b32.xlu0 %v969, 32
        %v2262 = vpop.permute.xlu0 %2261
        %2263 = vrot.lane.b32.xlu0 %v971, 32
        %v2264 = vpop.permute.xlu0 %2263
        %2265 = vrot.lane.b32.xlu0 %v973, 32
        %v2266 = vpop.permute.xlu0 %2265
        %v2268 = vsel %vm991, %v2244, 0
        %v2271 = vsel %vm991, %v2246, 0
        %v2274 = vsel %vm991, %v2248, 0
        %v2277 = vsel %vm991, %v2250, 0
        %v2280 = vsel %vm991, %v2252, 0
        %v2283 = vsel %vm991, %v2254, 0
        %v2286 = vsel %vm991, %v2256, 0
        %v2289 = vsel %vm991, %v2258, 0
        %v2292 = vsel %vm991, %v2260, 0
        %v2295 = vsel %vm991, %v2262, 0
        %v2298 = vsel %vm991, %v2264, 0
        %v2301 = vsel %vm991, %v2266, 0
        %2303 = vmatprep.subr.bf16.mxu0 0
        %2304 = vmatpush1.bf16.xpose.msra.mxu0 %v2280
        %2305 = vmatprep.subr.bf16.mxu0 0
        %2306 = vmatpush1.bf16.xpose.msra.mxu0 %v2283
        %2307 = vmatprep.subr.bf16.mxu0 0
        %2308 = vmatpush1.bf16.xpose.msra.mxu0 %v2286
        %2309 = vmatprep.subr.bf16.mxu0 0
        %2310 = vmatpush1.bf16.xpose.msra.mxu0 %v2289
        %2311 = vmatprep.subr.bf16.mxu0 0
        %2312 = vmatpush1.bf16.xpose.msra.mxu0 %v2292
        %2313 = vmatprep.subr.bf16.mxu0 0
        %2314 = vmatpush1.bf16.xpose.msra.mxu0 %v2295
        %2315 = vmatprep.subr.bf16.mxu0 0
        %2316 = vmatpush1.bf16.xpose.msra.mxu0 %v2298
        %2317 = vmatprep.subr.bf16.mxu0 0
        %2318 = vmatpush1.bf16.xpose.msra.mxu0 %v2301
        %2319 = vmatprep.subr.bf16.mxu0 0
        %2320 = vmatpush1.bf16.xpose.msra.mxu0 0
        %2321 = vmatprep.subr.bf16.mxu0 0
        %2322 = vmatpush1.bf16.xpose.msra.mxu0 0
        %2323 = vmatprep.subr.bf16.mxu0 0
        %2324 = vmatpush1.bf16.xpose.msra.mxu0 0
        %2325 = vmatprep.subr.bf16.mxu0 0
        %2326 = vmatpush1.bf16.xpose.msra.mxu0 0
        %2327 = vmatprep.subr.bf16.mxu0 0
        %2328 = vmatpush1.bf16.xpose.msra.mxu0 0
        %2329 = vmatprep.subr.bf16.mxu0 0
        %2330 = vmatpush1.bf16.xpose.msra.mxu0 0
        %2331 = vmatprep.subr.bf16.mxu0 0
        %2332 = vmatpush1.bf16.xpose.msra.mxu0 0
        %2333 = vmatprep.subr.bf16.mxu0 0
        %2334 = vmatpush1.bf16.xpose.msra.mxu0 0
        %2335 = vmatprep.mubr.bf16.mxu0 0
        %2336 = vmatmul.mubr.bf16.gmra.mrb[0].mxu0 %v2268
        %v2337 = vpop.f32.mrb[0].mxu0
        %v2338 = vadd.f32 %v983, %v2337
        %v2339 = vpop.f32.mrb[0].mxu0
        %v2340 = vpop.f32.mrb[0].mxu0
        %v2341 = vadd.f32 %v984, %v2340
        %v2342 = vpop.f32.mrb[0].mxu0
        %2343 = vmatprep.mubr.bf16.mxu0 0
        %2344 = vmatmul.mubr.bf16.gmra.mrb[0].mxu0 %v2271
        %v2345 = vpop.f32.mrb[0].mxu0
        %v2346 = vadd.f32 %v985, %v2345
        %v2347 = vpop.f32.mrb[0].mxu0
        %v2348 = vpop.f32.mrb[0].mxu0
        %v2349 = vadd.f32 %v986, %v2348
        %v2350 = vpop.f32.mrb[0].mxu0
        %2351 = vmatprep.mubr.bf16.mxu0 0
        %2352 = vmatmul.mubr.bf16.gmra.mrb[0].mxu0 %v2274
        %v2353 = vpop.f32.mrb[0].mxu0
        %v2354 = vadd.f32 %v987, %v2353
        %v2355 = vpop.f32.mrb[0].mxu0
        %v2356 = vpop.f32.mrb[0].mxu0
        %v2357 = vadd.f32 %v988, %v2356
        %v2358 = vpop.f32.mrb[0].mxu0
        %2359 = vmatprep.mubr.bf16.mxu0 0
        %2360 = vmatmul.mubr.bf16.gmra.mrb[0].mxu0 %v2277
        %v2361 = vpop.f32.mrb[0].mxu0
        %v2362 = vadd.f32 %v989, %v2361
        %v2363 = vpop.f32.mrb[0].mxu0
        %v2364 = vpop.f32.mrb[0].mxu0
        %v2365 = vadd.f32 %v990, %v2364
        %v2366 = vpop.f32.mrb[0].mxu0
        %2367 = vdwg.mxu0
        %2368 = vmax.xlane.f32.xlu0 %v2338
        %v2369 = vpop.xlane.xlu0 %2368
        %2370 = vmax.xlane.f32.xlu0 %v2341
        %v2371 = vpop.xlane.xlu0 %2370
        %2372 = vmax.xlane.f32.xlu0 %v2346
        %v2373 = vpop.xlane.xlu0 %2372
        %2374 = vmax.xlane.f32.xlu0 %v2349
        %v2375 = vpop.xlane.xlu0 %2374
        %2376 = vmax.xlane.f32.xlu0 %v2354
        %v2377 = vpop.xlane.xlu0 %2376
        %2378 = vmax.xlane.f32.xlu0 %v2357
        %v2379 = vpop.xlane.xlu0 %2378
        %2380 = vmax.xlane.f32.xlu0 %v2362
        %v2381 = vpop.xlane.xlu0 %2380
        %2382 = vmax.xlane.f32.xlu0 %v2365
        %v2383 = vpop.xlane.xlu0 %2382
        %v2384 = vsub.f32 %v2338, %v2369
        %v2385 = vsub.f32 %v2341, %v2371
        %v2386 = vsub.f32 %v2346, %v2373
        %v2387 = vsub.f32 %v2349, %v2375
        %v2388 = vsub.f32 %v2354, %v2377
        %v2389 = vsub.f32 %v2357, %v2379
        %v2390 = vsub.f32 %v2362, %v2381
        %v2391 = vsub.f32 %v2365, %v2383
        %v2392 = vmul.f32 %v2384, 1.442695
        %v2393 = vpow.pop %v2392
        %v2394 = vmul.f32 %v2385, 1.442695
        %v2395 = vpow.pop %v2394
        %v2396 = vmul.f32 %v2386, 1.442695
        %v2397 = vpow.pop %v2396
        %v2398 = vmul.f32 %v2387, 1.442695
        %v2399 = vpow.pop %v2398
        %v2400 = vmul.f32 %v2388, 1.442695
        %v2401 = vpow.pop %v2400
        %v2402 = vmul.f32 %v2389, 1.442695
        %v2403 = vpow.pop %v2402
        %v2404 = vmul.f32 %v2390, 1.442695
        %v2405 = vpow.pop %v2404
        %v2406 = vmul.f32 %v2391, 1.442695
        %v2407 = vpow.pop %v2406
        %2408 = vadd.xlane.f32.xlu0 %v2393
        %v2409 = vpop.xlane.xlu0 %2408
        %2410 = vadd.xlane.f32.xlu0 %v2395
        %v2411 = vpop.xlane.xlu0 %2410
        %2412 = vadd.xlane.f32.xlu0 %v2397
        %v2413 = vpop.xlane.xlu0 %2412
        %2414 = vadd.xlane.f32.xlu0 %v2399
        %v2415 = vpop.xlane.xlu0 %2414
        %2416 = vadd.xlane.f32.xlu0 %v2401
        %v2417 = vpop.xlane.xlu0 %2416
        %2418 = vadd.xlane.f32.xlu0 %v2403
        %v2419 = vpop.xlane.xlu0 %2418
        %2420 = vadd.xlane.f32.xlu0 %v2405
        %v2421 = vpop.xlane.xlu0 %2420
        %2422 = vadd.xlane.f32.xlu0 %v2407
        %v2423 = vpop.xlane.xlu0 %2422
        %v2424 = vrcp.pop %v2409
        %v2425 = vrcp.pop %v2411
        %v2426 = vrcp.pop %v2413
        %v2427 = vrcp.pop %v2415
        %v2428 = vrcp.pop %v2417
        %v2429 = vrcp.pop %v2419
        %v2430 = vrcp.pop %v2421
        %v2431 = vrcp.pop %v2423
        %v2432 = vmul.f32 %v2393, %v2424
        %v2433 = vmul.f32 %v2395, %v2425
        %v2434 = vmul.f32 %v2397, %v2426
        %v2435 = vmul.f32 %v2399, %v2427
        %v2436 = vmul.f32 %v2401, %v2428
        %v2437 = vmul.f32 %v2403, %v2429
        %v2438 = vmul.f32 %v2405, %v2430
        %v2439 = vmul.f32 %v2407, %v2431
        %v2440 = vpack.c.bf16 %v2433, %v2432
        %v2441 = vpack.c.bf16 %v2435, %v2434
        %v2442 = vpack.c.bf16 %v2437, %v2436
        %v2443 = vpack.c.bf16 %v2439, %v2438
        %v2448 = vunpack.c.l.b16 %v2440
        %v2449 = vunpack.c.h.b16 %v2440
        %v2450 = vunpack.c.l.b16 %v2441
        %v2451 = vunpack.c.h.b16 %v2441
        %v2452 = vunpack.c.l.b16 %v2442
        %v2453 = vunpack.c.h.b16 %v2442
        %v2454 = vunpack.c.l.b16 %v2443
        %v2455 = vunpack.c.h.b16 %v2443
        %v2456 = vpack.c.b16 %v2448, %v2448
        %v2457 = vpack.c.b16 %v2449, %v2449
        %v2458 = vpack.c.b16 %v2450, %v2450
        %v2459 = vpack.c.b16 %v2451, %v2451
        %v2460 = vpack.c.b16 %v2452, %v2452
        %v2461 = vpack.c.b16 %v2453, %v2453
        %v2462 = vpack.c.b16 %v2454, %v2454
        %v2463 = vpack.c.b16 %v2455, %v2455
        %s2472 = scalar_lea.vmem %s535, 96 [#allocation17]
        %2473 = vst [vmem:[%s2472] sm:$0xf] %v2456
        %2474 = vst [vmem:[%s2472 + $0x4] sm:$0xf] %v2457
        %2475 = vst [vmem:[%s2472 + $0x8] sm:$0xf] %v2458
        %2476 = vst [vmem:[%s2472 + $0xc] sm:$0xf] %v2459
        %2477 = vst [vmem:[%s2472 + $0x10] sm:$0xf] %v2460
        %2478 = vst [vmem:[%s2472 + $0x14] sm:$0xf] %v2461
        %2479 = vst [vmem:[%s2472 + $0x18] sm:$0xf] %v2462
        %2480 = vst [vmem:[%s2472 + $0x1c] sm:$0xf] %v2463
        %2481 = vrot.lane.b32.xlu0 %v960, 32
        %v2482 = vpop.permute.xlu0 %2481
        %2483 = vrot.lane.b32.xlu0 %v962, 32
        %v2484 = vpop.permute.xlu0 %2483
        %2485 = vrot.lane.b32.xlu0 %v964, 32
        %v2486 = vpop.permute.xlu0 %2485
        %2487 = vrot.lane.b32.xlu0 %v966, 32
        %v2488 = vpop.permute.xlu0 %2487
        %2489 = vrot.lane.b32.xlu0 %v968, 32
        %v2490 = vpop.permute.xlu0 %2489
        %2491 = vrot.lane.b32.xlu0 %v970, 32
        %v2492 = vpop.permute.xlu0 %2491
        %2493 = vrot.lane.b32.xlu0 %v972, 32
        %v2494 = vpop.permute.xlu0 %2493
        %2495 = vrot.lane.b32.xlu0 %v974, 32
        %v2496 = vpop.permute.xlu0 %2495
        %2505 = vmatprep.subr.bf16.mxu0 0
        %2506 = vmatpush1.bf16.msra.mxu0 %v2482
        %2507 = vmatprep.subr.bf16.mxu0 0
        %2508 = vmatpush1.bf16.msra.mxu0 %v2484
        %2509 = vmatprep.subr.bf16.mxu0 0
        %2510 = vmatpush1.bf16.msra.mxu0 %v2486
        %2511 = vmatprep.subr.bf16.mxu0 0
        %2512 = vmatpush1.bf16.msra.mxu0 %v2488
        %2513 = vmatprep.subr.bf16.mxu0 0
        %2514 = vmatpush1.bf16.msra.mxu0 %v2490
        %2515 = vmatprep.subr.bf16.mxu0 0
        %2516 = vmatpush1.bf16.msra.mxu0 %v2492
        %2517 = vmatprep.subr.bf16.mxu0 0
        %2518 = vmatpush1.bf16.msra.mxu0 %v2494
        %2519 = vmatprep.subr.bf16.mxu0 0
        %2520 = vmatpush1.bf16.msra.mxu0 %v2496
        %2521 = vmatprep.subr.bf16.mxu0 0
        %2522 = vmatpush1.bf16.msra.mxu0 0
        %2523 = vmatprep.subr.bf16.mxu0 0
        %2524 = vmatpush1.bf16.msra.mxu0 0
        %2525 = vmatprep.subr.bf16.mxu0 0
        %2526 = vmatpush1.bf16.msra.mxu0 0
        %2527 = vmatprep.subr.bf16.mxu0 0
        %2528 = vmatpush1.bf16.msra.mxu0 0
        %2529 = vmatprep.subr.bf16.mxu0 0
        %2530 = vmatpush1.bf16.msra.mxu0 0
        %2531 = vmatprep.subr.bf16.mxu0 0
        %2532 = vmatpush1.bf16.msra.mxu0 0
        %2533 = vmatprep.subr.bf16.mxu0 0
        %2534 = vmatpush1.bf16.msra.mxu0 0
        %2535 = vmatprep.subr.bf16.mxu0 0
        %2536 = vmatpush1.bf16.msra.mxu0 0
        %2537 = vmatprep.mubr.bf16.mxu0 0
        %2538 = vmatmul.mubr.bf16.gmra.mrb[0].mxu0 %v2440
        %v2539 = vpop.f32.mrb[0].mxu0
        %v2540 = vadd.f32 0.0, %v2539
        %v2541 = vpop.f32.mrb[0].mxu0
        %v2542 = vpop.f32.mrb[0].mxu0
        %v2543 = vadd.f32 0.0, %v2542
        %v2544 = vpop.f32.mrb[0].mxu0
        %2545 = vmatprep.mubr.bf16.mxu0 0
        %2546 = vmatmul.mubr.bf16.gmra.mrb[0].mxu0 %v2441
        %v2547 = vpop.f32.mrb[0].mxu0
        %v2548 = vadd.f32 0.0, %v2547
        %v2549 = vpop.f32.mrb[0].mxu0
        %v2550 = vpop.f32.mrb[0].mxu0
        %v2551 = vadd.f32 0.0, %v2550
        %v2552 = vpop.f32.mrb[0].mxu0
        %2553 = vmatprep.mubr.bf16.mxu0 0
        %2554 = vmatmul.mubr.bf16.gmra.mrb[0].mxu0 %v2442
        %v2555 = vpop.f32.mrb[0].mxu0
        %v2556 = vadd.f32 0.0, %v2555
        %v2557 = vpop.f32.mrb[0].mxu0
        %v2558 = vpop.f32.mrb[0].mxu0
        %v2559 = vadd.f32 0.0, %v2558
        %v2560 = vpop.f32.mrb[0].mxu0
        %2561 = vmatprep.mubr.bf16.mxu0 0
        %2562 = vmatmul.mubr.bf16.gmra.mrb[0].mxu0 %v2443
        %v2563 = vpop.f32.mrb[0].mxu0
        %v2564 = vadd.f32 0.0, %v2563
        %v2565 = vpop.f32.mrb[0].mxu0
        %v2566 = vpop.f32.mrb[0].mxu0
        %v2567 = vadd.f32 0.0, %v2566
        %v2568 = vpop.f32.mrb[0].mxu0
        %2569 = vdwg.mxu0
        %v2570 = vpack.c.bf16 %v2543, %v2540
        %v2571 = vpack.c.bf16 %v2551, %v2548
        %v2572 = vpack.c.bf16 %v2559, %v2556
        %v2573 = vpack.c.bf16 %v2567, %v2564
        %v2574 = vld [vmem:[#allocation11 + $0x30] sm:$0xf]
        %v2575 = vld [vmem:[#allocation11 + $0x34] sm:$0xf]
        %v2576 = vld [vmem:[#allocation11 + $0x38] sm:$0xf]
        %v2577 = vld [vmem:[#allocation11 + $0x3c] sm:$0xf]
        %v2582 = vunpack.c.l.b16 %v2574
        %v2583 = vunpack.c.l.b16 %v2575
        %v2584 = vunpack.c.l.b16 %v2576
        %v2585 = vunpack.c.l.b16 %v2577
        %v2586 = vpack.c.b16 %v2583, %v2582
        %v2587 = vpack.c.b16 %v2585, %v2584
        %v2591 = vsel %vm991, %v2570, 0
        %v2594 = vsel %vm991, %v2571, 0
        %v2597 = vsel %vm991, %v2572, 0
        %v2600 = vsel %vm991, %v2573, 0
        %2602 = vmatprep.subr.bf16.mxu0 0
        %2603 = vmatpush1.bf16.msra.mxu0 %v2586
        %2604 = vmatprep.subr.bf16.mxu0 0
        %2605 = vmatpush1.bf16.msra.mxu0 %v2587
        %2606 = vmatprep.subr.bf16.mxu0 0
        %2607 = vmatpush1.bf16.msra.mxu0 0
        %2608 = vmatprep.subr.bf16.mxu0 0
        %2609 = vmatpush1.bf16.msra.mxu0 0
        %2610 = vmatprep.subr.bf16.mxu0 0
        %2611 = vmatpush1.bf16.msra.mxu0 0
        %2612 = vmatprep.subr.bf16.mxu0 0
        %2613 = vmatpush1.bf16.msra.mxu0 0
        %2614 = vmatprep.subr.bf16.mxu0 0
        %2615 = vmatpush1.bf16.msra.mxu0 0
        %2616 = vmatprep.subr.bf16.mxu0 0
        %2617 = vmatpush1.bf16.msra.mxu0 0
        %2618 = vmatprep.subr.bf16.mxu0 0
        %2619 = vmatpush1.bf16.msra.mxu0 0
        %2620 = vmatprep.subr.bf16.mxu0 0
        %2621 = vmatpush1.bf16.msra.mxu0 0
        %2622 = vmatprep.subr.bf16.mxu0 0
        %2623 = vmatpush1.bf16.msra.mxu0 0
        %2624 = vmatprep.subr.bf16.mxu0 0
        %2625 = vmatpush1.bf16.msra.mxu0 0
        %2626 = vmatprep.subr.bf16.mxu0 0
        %2627 = vmatpush1.bf16.msra.mxu0 0
        %2628 = vmatprep.subr.bf16.mxu0 0
        %2629 = vmatpush1.bf16.msra.mxu0 0
        %2630 = vmatprep.subr.bf16.mxu0 0
        %2631 = vmatpush1.bf16.msra.mxu0 0
        %2632 = vmatprep.subr.bf16.mxu0 0
        %2633 = vmatpush1.bf16.msra.mxu0 0
        %2634 = vmatprep.mubr.bf16.mxu0 0
        %2635 = vmatmul.mubr.bf16.gmra.mrb[0].mxu0 %v2591
        %v2636 = vpop.f32.mrb[0].mxu0
        %v2637 = vadd.f32 0.0, %v2636
        %v2638 = vpop.f32.mrb[0].mxu0
        %v2639 = vpop.f32.mrb[0].mxu0
        %v2640 = vadd.f32 0.0, %v2639
        %v2641 = vpop.f32.mrb[0].mxu0
        %2642 = vmatprep.mubr.bf16.mxu0 0
        %2643 = vmatmul.mubr.bf16.gmra.mrb[0].mxu0 %v2594
        %v2644 = vpop.f32.mrb[0].mxu0
        %v2645 = vadd.f32 0.0, %v2644
        %v2646 = vpop.f32.mrb[0].mxu0
        %v2647 = vpop.f32.mrb[0].mxu0
        %v2648 = vadd.f32 0.0, %v2647
        %v2649 = vpop.f32.mrb[0].mxu0
        %2650 = vmatprep.mubr.bf16.mxu0 0
        %2651 = vmatmul.mubr.bf16.gmra.mrb[0].mxu0 %v2597
        %v2652 = vpop.f32.mrb[0].mxu0
        %v2653 = vadd.f32 0.0, %v2652
        %v2654 = vpop.f32.mrb[0].mxu0
        %v2655 = vpop.f32.mrb[0].mxu0
        %v2656 = vadd.f32 0.0, %v2655
        %v2657 = vpop.f32.mrb[0].mxu0
        %2658 = vmatprep.mubr.bf16.mxu0 0
        %2659 = vmatmul.mubr.bf16.gmra.mrb[0].mxu0 %v2600
        %v2660 = vpop.f32.mrb[0].mxu0
        %v2661 = vadd.f32 0.0, %v2660
        %v2662 = vpop.f32.mrb[0].mxu0
        %v2663 = vpop.f32.mrb[0].mxu0
        %v2664 = vadd.f32 0.0, %v2663
        %v2665 = vpop.f32.mrb[0].mxu0
        %2666 = vdwg.mxu0
        %v2667 = vadd.f32 %v2235, %v2637
        %v2668 = vadd.f32 %v2236, %v2640
        %v2669 = vadd.f32 %v2237, %v2645
        %v2670 = vadd.f32 %v2238, %v2648
        %v2671 = vadd.f32 %v2239, %v2653
        %v2672 = vadd.f32 %v2240, %v2656
        %v2673 = vadd.f32 %v2241, %v2661
        %v2674 = vadd.f32 %v2242, %v2664
        %v2675 = vadd.f32 %v2667, %v541
        %v2676 = vadd.f32 %v2668, %v542
        %v2677 = vadd.f32 %v2669, %v543
        %v2678 = vadd.f32 %v2670, %v544
        %v2679 = vadd.f32 %v2671, %v545
        %v2680 = vadd.f32 %v2672, %v546
        %v2681 = vadd.f32 %v2673, %v547
        %v2682 = vadd.f32 %v2674, %v548
        %2683 = vadd.xlane.f32.xlu0 %v2675
        %v2684 = vpop.xlane.xlu0 %2683
        %2685 = vadd.xlane.f32.xlu0 %v2676
        %v2686 = vpop.xlane.xlu0 %2685
        %2687 = vadd.xlane.f32.xlu0 %v2677
        %v2688 = vpop.xlane.xlu0 %2687
        %2689 = vadd.xlane.f32.xlu0 %v2678
        %v2690 = vpop.xlane.xlu0 %2689
        %2691 = vadd.xlane.f32.xlu0 %v2679
        %v2692 = vpop.xlane.xlu0 %2691
        %2693 = vadd.xlane.f32.xlu0 %v2680
        %v2694 = vpop.xlane.xlu0 %2693
        %2695 = vadd.xlane.f32.xlu0 %v2681
        %v2696 = vpop.xlane.xlu0 %2695
        %2697 = vadd.xlane.f32.xlu0 %v2682
        %v2698 = vpop.xlane.xlu0 %2697
        %v2699 = vrcp.pop 128.0
        %v2700 = vmul.f32 %v2684, %v2699
        %v2701 = vmul.f32 %v2686, %v2699
        %v2702 = vmul.f32 %v2688, %v2699
        %v2703 = vmul.f32 %v2690, %v2699
        %v2704 = vmul.f32 %v2692, %v2699
        %v2705 = vmul.f32 %v2694, %v2699
        %v2706 = vmul.f32 %v2696, %v2699
        %v2707 = vmul.f32 %v2698, %v2699
        %v2708 = vsub.f32 %v2675, %v2700
        %v2709 = vsub.f32 %v2676, %v2701
        %v2710 = vsub.f32 %v2677, %v2702
        %v2711 = vsub.f32 %v2678, %v2703
        %v2712 = vsub.f32 %v2679, %v2704
        %v2713 = vsub.f32 %v2680, %v2705
        %v2714 = vsub.f32 %v2681, %v2706
        %v2715 = vsub.f32 %v2682, %v2707
        %v2716 = vmul.f32 %v2708, %v2708
        %v2717 = vmul.f32 %v2709, %v2709
        %v2718 = vmul.f32 %v2710, %v2710
        %v2719 = vmul.f32 %v2711, %v2711
        %v2720 = vmul.f32 %v2712, %v2712
        %v2721 = vmul.f32 %v2713, %v2713
        %v2722 = vmul.f32 %v2714, %v2714
        %v2723 = vmul.f32 %v2715, %v2715
        %2724 = vadd.xlane.f32.xlu0 %v2716
        %v2725 = vpop.xlane.xlu0 %2724
        %2726 = vadd.xlane.f32.xlu0 %v2717
        %v2727 = vpop.xlane.xlu0 %2726
        %2728 = vadd.xlane.f32.xlu0 %v2718
        %v2729 = vpop.xlane.xlu0 %2728
        %2730 = vadd.xlane.f32.xlu0 %v2719
        %v2731 = vpop.xlane.xlu0 %2730
        %2732 = vadd.xlane.f32.xlu0 %v2720
        %v2733 = vpop.xlane.xlu0 %2732
        %2734 = vadd.xlane.f32.xlu0 %v2721
        %v2735 = vpop.xlane.xlu0 %2734
        %2736 = vadd.xlane.f32.xlu0 %v2722
        %v2737 = vpop.xlane.xlu0 %2736
        %2738 = vadd.xlane.f32.xlu0 %v2723
        %v2739 = vpop.xlane.xlu0 %2738
        %v2740 = vmul.f32 %v2725, %v2699
        %v2741 = vmul.f32 %v2727, %v2699
        %v2742 = vmul.f32 %v2729, %v2699
        %v2743 = vmul.f32 %v2731, %v2699
        %v2744 = vmul.f32 %v2733, %v2699
        %v2745 = vmul.f32 %v2735, %v2699
        %v2746 = vmul.f32 %v2737, %v2699
        %v2747 = vmul.f32 %v2739, %v2699
        %v2748 = vadd.f32 %v2740, 1e-05
        %v2749 = vadd.f32 %v2741, 1e-05
        %v2750 = vadd.f32 %v2742, 1e-05
        %v2751 = vadd.f32 %v2743, 1e-05
        %v2752 = vadd.f32 %v2744, 1e-05
        %v2753 = vadd.f32 %v2745, 1e-05
        %v2754 = vadd.f32 %v2746, 1e-05
        %v2755 = vadd.f32 %v2747, 1e-05
        %v2756 = vrsqrt.pop %v2748
        %v2757 = vrsqrt.pop %v2749
        %v2758 = vrsqrt.pop %v2750
        %v2759 = vrsqrt.pop %v2751
        %v2760 = vrsqrt.pop %v2752
        %v2761 = vrsqrt.pop %v2753
        %v2762 = vrsqrt.pop %v2754
        %v2763 = vrsqrt.pop %v2755
        %v2764 = vmul.f32 %v2708, %v2756
        %v2765 = vmul.f32 %v2709, %v2757
        %v2766 = vmul.f32 %v2710, %v2758
        %v2767 = vmul.f32 %v2711, %v2759
        %v2768 = vmul.f32 %v2712, %v2760
        %v2769 = vmul.f32 %v2713, %v2761
        %v2770 = vmul.f32 %v2714, %v2762
        %v2771 = vmul.f32 %v2715, %v2763
        %v2772 = vpack.c.bf16 %v2765, %v2764
        %v2773 = vpack.c.bf16 %v2767, %v2766
        %v2774 = vpack.c.bf16 %v2769, %v2768
        %v2775 = vpack.c.bf16 %v2771, %v2770
        %v2776 = vld [vmem:[#allocation13] sm:$0xff]
        %v2777 = vld [vmem:[#allocation13 + $0x8] sm:$0xff]
        %v2778 = vld [vmem:[#allocation13 + $0x10] sm:$0xff]
        %v2779 = vld [vmem:[#allocation13 + $0x18] sm:$0xff]
        %v2780 = vld [vmem:[#allocation13 + $0x20] sm:$0xff]
        %v2781 = vld [vmem:[#allocation13 + $0x28] sm:$0xff]
        %v2782 = vld [vmem:[#allocation13 + $0x30] sm:$0xff]
        %v2783 = vld [vmem:[#allocation13 + $0x38] sm:$0xff]
        %v2784 = vld [vmem:[#allocation13 + $0x40] sm:$0xff]
        %v2785 = vld [vmem:[#allocation13 + $0x48] sm:$0xff]
        %v2786 = vld [vmem:[#allocation13 + $0x50] sm:$0xff]
        %v2787 = vld [vmem:[#allocation13 + $0x58] sm:$0xff]
        %v2788 = vld [vmem:[#allocation13 + $0x60] sm:$0xff]
        %v2789 = vld [vmem:[#allocation13 + $0x68] sm:$0xff]
        %v2790 = vld [vmem:[#allocation13 + $0x70] sm:$0xff]
        %v2791 = vld [vmem:[#allocation13 + $0x78] sm:$0xff]
        %v2808 = vunpack.c.l.b16 %v2776
        %v2809 = vunpack.c.h.b16 %v2776
        %v2810 = vunpack.c.l.b16 %v2777
        %v2811 = vunpack.c.h.b16 %v2777
        %v2812 = vunpack.c.l.b16 %v2778
        %v2813 = vunpack.c.h.b16 %v2778
        %v2814 = vunpack.c.l.b16 %v2779
        %v2815 = vunpack.c.h.b16 %v2779
        %v2816 = vunpack.c.l.b16 %v2780
        %v2817 = vunpack.c.h.b16 %v2780
        %v2818 = vunpack.c.l.b16 %v2781
        %v2819 = vunpack.c.h.b16 %v2781
        %v2820 = vunpack.c.l.b16 %v2782
        %v2821 = vunpack.c.h.b16 %v2782
        %v2822 = vunpack.c.l.b16 %v2783
        %v2823 = vunpack.c.h.b16 %v2783
        %v2824 = vunpack.c.l.b16 %v2784
        %v2825 = vunpack.c.h.b16 %v2784
        %v2826 = vunpack.c.l.b16 %v2785
        %v2827 = vunpack.c.h.b16 %v2785
        %v2828 = vunpack.c.l.b16 %v2786
        %v2829 = vunpack.c.h.b16 %v2786
        %v2830 = vunpack.c.l.b16 %v2787
        %v2831 = vunpack.c.h.b16 %v2787
        %v2832 = vunpack.c.l.b16 %v2788
        %v2833 = vunpack.c.h.b16 %v2788
        %v2834 = vunpack.c.l.b16 %v2789
        %v2835 = vunpack.c.h.b16 %v2789
        %v2836 = vunpack.c.l.b16 %v2790
        %v2837 = vunpack.c.h.b16 %v2790
        %v2838 = vunpack.c.l.b16 %v2791
        %v2839 = vunpack.c.h.b16 %v2791
        %v2840 = vpack.c.b16 %v2810, %v2808
        %v2841 = vpack.c.b16 %v2811, %v2809
        %v2842 = vpack.c.b16 %v2814, %v2812
        %v2843 = vpack.c.b16 %v2815, %v2813
        %v2844 = vpack.c.b16 %v2818, %v2816
        %v2845 = vpack.c.b16 %v2819, %v2817
        %v2846 = vpack.c.b16 %v2822, %v2820
        %v2847 = vpack.c.b16 %v2823, %v2821
        %v2848 = vpack.c.b16 %v2826, %v2824
        %v2849 = vpack.c.b16 %v2827, %v2825
        %v2850 = vpack.c.b16 %v2830, %v2828
        %v2851 = vpack.c.b16 %v2831, %v2829
        %v2852 = vpack.c.b16 %v2834, %v2832
        %v2853 = vpack.c.b16 %v2835, %v2833
        %v2854 = vpack.c.b16 %v2838, %v2836
        %v2855 = vpack.c.b16 %v2839, %v2837
        %2872 = vmatprep.subr.bf16.mxu0 %v2841
        %2873 = vmatpush1.bf16.msra.mxu0 %v2840
        %2874 = vmatprep.subr.bf16.mxu0 %v2843
        %2875 = vmatpush1.bf16.msra.mxu0 %v2842
        %2876 = vmatprep.subr.bf16.mxu0 %v2845
        %2877 = vmatpush1.bf16.msra.mxu0 %v2844
        %2878 = vmatprep.subr.bf16.mxu0 %v2847
        %2879 = vmatpush1.bf16.msra.mxu0 %v2846
        %2880 = vmatprep.subr.bf16.mxu0 %v2849
        %2881 = vmatpush1.bf16.msra.mxu0 %v2848
        %2882 = vmatprep.subr.bf16.mxu0 %v2851
        %2883 = vmatpush1.bf16.msra.mxu0 %v2850
        %2884 = vmatprep.subr.bf16.mxu0 %v2853
        %2885 = vmatpush1.bf16.msra.mxu0 %v2852
        %2886 = vmatprep.subr.bf16.mxu0 %v2855
        %2887 = vmatpush1.bf16.msra.mxu0 %v2854
        %2888 = vmatprep.subr.bf16.mxu0 0
        %2889 = vmatpush1.bf16.msra.mxu0 0
        %2890 = vmatprep.subr.bf16.mxu0 0
        %2891 = vmatpush1.bf16.msra.mxu0 0
        %2892 = vmatprep.subr.bf16.mxu0 0
        %2893 = vmatpush1.bf16.msra.mxu0 0
        %2894 = vmatprep.subr.bf16.mxu0 0
        %2895 = vmatpush1.bf16.msra.mxu0 0
        %2896 = vmatprep.subr.bf16.mxu0 0
        %2897 = vmatpush1.bf16.msra.mxu0 0
        %2898 = vmatprep.subr.bf16.mxu0 0
        %2899 = vmatpush1.bf16.msra.mxu0 0
        %2900 = vmatprep.subr.bf16.mxu0 0
        %2901 = vmatpush1.bf16.msra.mxu0 0
        %2902 = vmatprep.subr.bf16.mxu0 0
        %2903 = vmatpush1.bf16.msra.mxu0 0
        %2904 = vmatprep.mubr.bf16.mxu0 0
        %2905 = vmatmul.mubr.bf16.gmra.mrb[0].mxu0 %v2772
        %v2906 = vpop.f32.mrb[0].mxu0
        %v2907 = vadd.f32 0.0, %v2906
        %v2908 = vpop.f32.mrb[0].mxu0
        %v2909 = vadd.f32 0.0, %v2908
        %v2910 = vpop.f32.mrb[0].mxu0
        %v2911 = vadd.f32 0.0, %v2910
        %v2912 = vpop.f32.mrb[0].mxu0
        %v2913 = vadd.f32 0.0, %v2912
        %2914 = vmatprep.mubr.bf16.mxu0 0
        %2915 = vmatmul.mubr.bf16.gmra.mrb[0].mxu0 %v2773
        %v2916 = vpop.f32.mrb[0].mxu0
        %v2917 = vadd.f32 0.0, %v2916
        %v2918 = vpop.f32.mrb[0].mxu0
        %v2919 = vadd.f32 0.0, %v2918
        %v2920 = vpop.f32.mrb[0].mxu0
        %v2921 = vadd.f32 0.0, %v2920
        %v2922 = vpop.f32.mrb[0].mxu0
        %v2923 = vadd.f32 0.0, %v2922
        %2924 = vmatprep.mubr.bf16.mxu0 0
        %2925 = vmatmul.mubr.bf16.gmra.mrb[0].mxu0 %v2774
        %v2926 = vpop.f32.mrb[0].mxu0
        %v2927 = vadd.f32 0.0, %v2926
        %v2928 = vpop.f32.mrb[0].mxu0
        %v2929 = vadd.f32 0.0, %v2928
        %v2930 = vpop.f32.mrb[0].mxu0
        %v2931 = vadd.f32 0.0, %v2930
        %v2932 = vpop.f32.mrb[0].mxu0
        %v2933 = vadd.f32 0.0, %v2932
        %2934 = vmatprep.mubr.bf16.mxu0 0
        %2935 = vmatmul.mubr.bf16.gmra.mrb[0].mxu0 %v2775
        %v2936 = vpop.f32.mrb[0].mxu0
        %v2937 = vadd.f32 0.0, %v2936
        %v2938 = vpop.f32.mrb[0].mxu0
        %v2939 = vadd.f32 0.0, %v2938
        %v2940 = vpop.f32.mrb[0].mxu0
        %v2941 = vadd.f32 0.0, %v2940
        %v2942 = vpop.f32.mrb[0].mxu0
        %v2943 = vadd.f32 0.0, %v2942
        %2944 = vdwg.mxu0
        %v2945 = vmax.f32 %v2907, 0.0
        %v2946 = vmax.f32 %v2909, 0.0
        %v2947 = vmax.f32 %v2911, 0.0
        %v2948 = vmax.f32 %v2913, 0.0
        %v2949 = vmax.f32 %v2917, 0.0
        %v2950 = vmax.f32 %v2919, 0.0
        %v2951 = vmax.f32 %v2921, 0.0
        %v2952 = vmax.f32 %v2923, 0.0
        %v2953 = vmax.f32 %v2927, 0.0
        %v2954 = vmax.f32 %v2929, 0.0
        %v2955 = vmax.f32 %v2931, 0.0
        %v2956 = vmax.f32 %v2933, 0.0
        %v2957 = vmax.f32 %v2937, 0.0
        %v2958 = vmax.f32 %v2939, 0.0
        %v2959 = vmax.f32 %v2941, 0.0
        %v2960 = vmax.f32 %v2943, 0.0
        %v2961 = vpack.c.bf16 %v2947, %v2945
        %v2962 = vpack.c.bf16 %v2948, %v2946
        %v2963 = vpack.c.bf16 %v2951, %v2949
        %v2964 = vpack.c.bf16 %v2952, %v2950
        %v2965 = vpack.c.bf16 %v2955, %v2953
        %v2966 = vpack.c.bf16 %v2956, %v2954
        %v2967 = vpack.c.bf16 %v2959, %v2957
        %v2968 = vpack.c.bf16 %v2960, %v2958
        %v2969 = vld [vmem:[#allocation14] sm:$0xf]
        %v2970 = vld [vmem:[#allocation14 + $0x4] sm:$0xf]
        %v2971 = vld [vmem:[#allocation14 + $0x8] sm:$0xf]
        %v2972 = vld [vmem:[#allocation14 + $0xc] sm:$0xf]
        %v2973 = vld [vmem:[#allocation14 + $0x10] sm:$0xf]
        %v2974 = vld [vmem:[#allocation14 + $0x14] sm:$0xf]
        %v2975 = vld [vmem:[#allocation14 + $0x18] sm:$0xf]
        %v2976 = vld [vmem:[#allocation14 + $0x1c] sm:$0xf]
        %v2977 = vld [vmem:[#allocation14 + $0x20] sm:$0xf]
        %v2978 = vld [vmem:[#allocation14 + $0x24] sm:$0xf]
        %v2979 = vld [vmem:[#allocation14 + $0x28] sm:$0xf]
        %v2980 = vld [vmem:[#allocation14 + $0x2c] sm:$0xf]
        %v2981 = vld [vmem:[#allocation14 + $0x30] sm:$0xf]
        %v2982 = vld [vmem:[#allocation14 + $0x34] sm:$0xf]
        %v2983 = vld [vmem:[#allocation14 + $0x38] sm:$0xf]
        %v2984 = vld [vmem:[#allocation14 + $0x3c] sm:$0xf]
        %v2985 = vld [vmem:[#allocation14 + $0x40] sm:$0xf]
        %v2986 = vld [vmem:[#allocation14 + $0x44] sm:$0xf]
        %v2987 = vld [vmem:[#allocation14 + $0x48] sm:$0xf]
        %v2988 = vld [vmem:[#allocation14 + $0x4c] sm:$0xf]
        %v2989 = vld [vmem:[#allocation14 + $0x50] sm:$0xf]
        %v2990 = vld [vmem:[#allocation14 + $0x54] sm:$0xf]
        %v2991 = vld [vmem:[#allocation14 + $0x58] sm:$0xf]
        %v2992 = vld [vmem:[#allocation14 + $0x5c] sm:$0xf]
        %v2993 = vld [vmem:[#allocation14 + $0x60] sm:$0xf]
        %v2994 = vld [vmem:[#allocation14 + $0x64] sm:$0xf]
        %v2995 = vld [vmem:[#allocation14 + $0x68] sm:$0xf]
        %v2996 = vld [vmem:[#allocation14 + $0x6c] sm:$0xf]
        %v2997 = vld [vmem:[#allocation14 + $0x70] sm:$0xf]
        %v2998 = vld [vmem:[#allocation14 + $0x74] sm:$0xf]
        %v2999 = vld [vmem:[#allocation14 + $0x78] sm:$0xf]
        %v3000 = vld [vmem:[#allocation14 + $0x7c] sm:$0xf]
        %v3033 = vunpack.c.l.b16 %v2969
        %v3034 = vunpack.c.l.b16 %v2970
        %v3035 = vunpack.c.l.b16 %v2971
        %v3036 = vunpack.c.l.b16 %v2972
        %v3037 = vunpack.c.l.b16 %v2973
        %v3038 = vunpack.c.l.b16 %v2974
        %v3039 = vunpack.c.l.b16 %v2975
        %v3040 = vunpack.c.l.b16 %v2976
        %v3041 = vunpack.c.l.b16 %v2977
        %v3042 = vunpack.c.l.b16 %v2978
        %v3043 = vunpack.c.l.b16 %v2979
        %v3044 = vunpack.c.l.b16 %v2980
        %v3045 = vunpack.c.l.b16 %v2981
        %v3046 = vunpack.c.l.b16 %v2982
        %v3047 = vunpack.c.l.b16 %v2983
        %v3048 = vunpack.c.l.b16 %v2984
        %v3049 = vunpack.c.l.b16 %v2985
        %v3050 = vunpack.c.l.b16 %v2986
        %v3051 = vunpack.c.l.b16 %v2987
        %v3052 = vunpack.c.l.b16 %v2988
        %v3053 = vunpack.c.l.b16 %v2989
        %v3054 = vunpack.c.l.b16 %v2990
        %v3055 = vunpack.c.l.b16 %v2991
        %v3056 = vunpack.c.l.b16 %v2992
        %v3057 = vunpack.c.l.b16 %v2993
        %v3058 = vunpack.c.l.b16 %v2994
        %v3059 = vunpack.c.l.b16 %v2995
        %v3060 = vunpack.c.l.b16 %v2996
        %v3061 = vunpack.c.l.b16 %v2997
        %v3062 = vunpack.c.l.b16 %v2998
        %v3063 = vunpack.c.l.b16 %v2999
        %v3064 = vunpack.c.l.b16 %v3000
        %v3065 = vpack.c.b16 %v3034, %v3033
        %v3066 = vpack.c.b16 %v3036, %v3035
        %v3067 = vpack.c.b16 %v3038, %v3037
        %v3068 = vpack.c.b16 %v3040, %v3039
        %v3069 = vpack.c.b16 %v3042, %v3041
        %v3070 = vpack.c.b16 %v3044, %v3043
        %v3071 = vpack.c.b16 %v3046, %v3045
        %v3072 = vpack.c.b16 %v3048, %v3047
        %v3073 = vpack.c.b16 %v3050, %v3049
        %v3074 = vpack.c.b16 %v3052, %v3051
        %v3075 = vpack.c.b16 %v3054, %v3053
        %v3076 = vpack.c.b16 %v3056, %v3055
        %v3077 = vpack.c.b16 %v3058, %v3057
        %v3078 = vpack.c.b16 %v3060, %v3059
        %v3079 = vpack.c.b16 %v3062, %v3061
        %v3080 = vpack.c.b16 %v3064, %v3063
        %3097 = vmatprep.subr.bf16.mxu0 0
        %3098 = vmatpush1.bf16.msra.mxu0 %v3065
        %3099 = vmatprep.subr.bf16.mxu0 0
        %3100 = vmatpush1.bf16.msra.mxu0 %v3066
        %3101 = vmatprep.subr.bf16.mxu0 0
        %3102 = vmatpush1.bf16.msra.mxu0 %v3067
        %3103 = vmatprep.subr.bf16.mxu0 0
        %3104 = vmatpush1.bf16.msra.mxu0 %v3068
        %3105 = vmatprep.subr.bf16.mxu0 0
        %3106 = vmatpush1.bf16.msra.mxu0 %v3069
        %3107 = vmatprep.subr.bf16.mxu0 0
        %3108 = vmatpush1.bf16.msra.mxu0 %v3070
        %3109 = vmatprep.subr.bf16.mxu0 0
        %3110 = vmatpush1.bf16.msra.mxu0 %v3071
        %3111 = vmatprep.subr.bf16.mxu0 0
        %3112 = vmatpush1.bf16.msra.mxu0 %v3072
        %3113 = vmatprep.subr.bf16.mxu0 0
        %3114 = vmatpush1.bf16.msra.mxu0 %v3073
        %3115 = vmatprep.subr.bf16.mxu0 0
        %3116 = vmatpush1.bf16.msra.mxu0 %v3074
        %3117 = vmatprep.subr.bf16.mxu0 0
        %3118 = vmatpush1.bf16.msra.mxu0 %v3075
        %3119 = vmatprep.subr.bf16.mxu0 0
        %3120 = vmatpush1.bf16.msra.mxu0 %v3076
        %3121 = vmatprep.subr.bf16.mxu0 0
        %3122 = vmatpush1.bf16.msra.mxu0 %v3077
        %3123 = vmatprep.subr.bf16.mxu0 0
        %3124 = vmatpush1.bf16.msra.mxu0 %v3078
        %3125 = vmatprep.subr.bf16.mxu0 0
        %3126 = vmatpush1.bf16.msra.mxu0 %v3079
        %3127 = vmatprep.subr.bf16.mxu0 0
        %3128 = vmatpush1.bf16.msra.mxu0 %v3080
        %3129 = vmatprep.mubr.bf16.mxu0 %v2962
        %3130 = vmatmul.mubr.bf16.gmra.mrb[0].mxu0 %v2961
        %v3131 = vpop.f32.mrb[0].mxu0
        %v3132 = vadd.f32 %v2764, %v3131
        %v3133 = vpop.f32.mrb[0].mxu0
        %v3134 = vpop.f32.mrb[0].mxu0
        %v3135 = vadd.f32 %v2765, %v3134
        %v3136 = vpop.f32.mrb[0].mxu0
        %3137 = vmatprep.mubr.bf16.mxu0 %v2964
        %3138 = vmatmul.mubr.bf16.gmra.mrb[0].mxu0 %v2963
        %v3139 = vpop.f32.mrb[0].mxu0
        %v3140 = vadd.f32 %v2766, %v3139
        %v3141 = vpop.f32.mrb[0].mxu0
        %v3142 = vpop.f32.mrb[0].mxu0
        %v3143 = vadd.f32 %v2767, %v3142
        %v3144 = vpop.f32.mrb[0].mxu0
        %3145 = vmatprep.mubr.bf16.mxu0 %v2966
        %3146 = vmatmul.mubr.bf16.gmra.mrb[0].mxu0 %v2965
        %v3147 = vpop.f32.mrb[0].mxu0
        %v3148 = vadd.f32 %v2768, %v3147
        %v3149 = vpop.f32.mrb[0].mxu0
        %v3150 = vpop.f32.mrb[0].mxu0
        %v3151 = vadd.f32 %v2769, %v3150
        %v3152 = vpop.f32.mrb[0].mxu0
        %3153 = vmatprep.mubr.bf16.mxu0 %v2968
        %3154 = vmatmul.mubr.bf16.gmra.mrb[0].mxu0 %v2967
        %v3155 = vpop.f32.mrb[0].mxu0
        %v3156 = vadd.f32 %v2770, %v3155
        %v3157 = vpop.f32.mrb[0].mxu0
        %v3158 = vpop.f32.mrb[0].mxu0
        %v3159 = vadd.f32 %v2771, %v3158
        %v3160 = vpop.f32.mrb[0].mxu0
        %3161 = vdwg.mxu0
        %3162 = vadd.xlane.f32.xlu0 %v3132
        %v3163 = vpop.xlane.xlu0 %3162
        %3164 = vadd.xlane.f32.xlu0 %v3135
        %v3165 = vpop.xlane.xlu0 %3164
        %3166 = vadd.xlane.f32.xlu0 %v3140
        %v3167 = vpop.xlane.xlu0 %3166
        %3168 = vadd.xlane.f32.xlu0 %v3143
        %v3169 = vpop.xlane.xlu0 %3168
        %3170 = vadd.xlane.f32.xlu0 %v3148
        %v3171 = vpop.xlane.xlu0 %3170
        %3172 = vadd.xlane.f32.xlu0 %v3151
        %v3173 = vpop.xlane.xlu0 %3172
        %3174 = vadd.xlane.f32.xlu0 %v3156
        %v3175 = vpop.xlane.xlu0 %3174
        %3176 = vadd.xlane.f32.xlu0 %v3159
        %v3177 = vpop.xlane.xlu0 %3176
        %v3178 = vmul.f32 %v3163, %v2699
        %v3179 = vmul.f32 %v3165, %v2699
        %v3180 = vmul.f32 %v3167, %v2699
        %v3181 = vmul.f32 %v3169, %v2699
        %v3182 = vmul.f32 %v3171, %v2699
        %v3183 = vmul.f32 %v3173, %v2699
        %v3184 = vmul.f32 %v3175, %v2699
        %v3185 = vmul.f32 %v3177, %v2699
        %v3186 = vsub.f32 %v3132, %v3178
        %v3187 = vsub.f32 %v3135, %v3179
        %v3188 = vsub.f32 %v3140, %v3180
        %v3189 = vsub.f32 %v3143, %v3181
        %v3190 = vsub.f32 %v3148, %v3182
        %v3191 = vsub.f32 %v3151, %v3183
        %v3192 = vsub.f32 %v3156, %v3184
        %v3193 = vsub.f32 %v3159, %v3185
        %v3194 = vmul.f32 %v3186, %v3186
        %v3195 = vmul.f32 %v3187, %v3187
        %v3196 = vmul.f32 %v3188, %v3188
        %v3197 = vmul.f32 %v3189, %v3189
        %v3198 = vmul.f32 %v3190, %v3190
        %v3199 = vmul.f32 %v3191, %v3191
        %v3200 = vmul.f32 %v3192, %v3192
        %v3201 = vmul.f32 %v3193, %v3193
        %3202 = vadd.xlane.f32.xlu0 %v3194
        %v3203 = vpop.xlane.xlu0 %3202
        %3204 = vadd.xlane.f32.xlu0 %v3195
        %v3205 = vpop.xlane.xlu0 %3204
        %3206 = vadd.xlane.f32.xlu0 %v3196
        %v3207 = vpop.xlane.xlu0 %3206
        %3208 = vadd.xlane.f32.xlu0 %v3197
        %v3209 = vpop.xlane.xlu0 %3208
        %3210 = vadd.xlane.f32.xlu0 %v3198
        %v3211 = vpop.xlane.xlu0 %3210
        %3212 = vadd.xlane.f32.xlu0 %v3199
        %v3213 = vpop.xlane.xlu0 %3212
        %3214 = vadd.xlane.f32.xlu0 %v3200
        %v3215 = vpop.xlane.xlu0 %3214
        %3216 = vadd.xlane.f32.xlu0 %v3201
        %v3217 = vpop.xlane.xlu0 %3216
        %v3218 = vmul.f32 %v3203, %v2699
        %v3219 = vmul.f32 %v3205, %v2699
        %v3220 = vmul.f32 %v3207, %v2699
        %v3221 = vmul.f32 %v3209, %v2699
        %v3222 = vmul.f32 %v3211, %v2699
        %v3223 = vmul.f32 %v3213, %v2699
        %v3224 = vmul.f32 %v3215, %v2699
        %v3225 = vmul.f32 %v3217, %v2699
        %v3226 = vadd.f32 %v3218, 1e-05
        %v3227 = vadd.f32 %v3219, 1e-05
        %v3228 = vadd.f32 %v3220, 1e-05
        %v3229 = vadd.f32 %v3221, 1e-05
        %v3230 = vadd.f32 %v3222, 1e-05
        %v3231 = vadd.f32 %v3223, 1e-05
        %v3232 = vadd.f32 %v3224, 1e-05
        %v3233 = vadd.f32 %v3225, 1e-05
        %v3234 = vrsqrt.pop %v3226
        %v3235 = vrsqrt.pop %v3227
        %v3236 = vrsqrt.pop %v3228
        %v3237 = vrsqrt.pop %v3229
        %v3238 = vrsqrt.pop %v3230
        %v3239 = vrsqrt.pop %v3231
        %v3240 = vrsqrt.pop %v3232
        %v3241 = vrsqrt.pop %v3233
        %v3242 = vmul.f32 %v3186, %v3234
        %v3243 = vmul.f32 %v3187, %v3235
        %v3244 = vmul.f32 %v3188, %v3236
        %v3245 = vmul.f32 %v3189, %v3237
        %v3246 = vmul.f32 %v3190, %v3238
        %v3247 = vmul.f32 %v3191, %v3239
        %v3248 = vmul.f32 %v3192, %v3240
        %v3249 = vmul.f32 %v3193, %v3241
        %3250 = vst [vmem:[%s528] sm:$0xff] %v3242
        %3251 = vst [vmem:[%s528 + $0x8] sm:$0xff] %v3243
        %3252 = vst [vmem:[%s528 + $0x10] sm:$0xff] %v3244
        %3253 = vst [vmem:[%s528 + $0x18] sm:$0xff] %v3245
        %3254 = vst [vmem:[%s528 + $0x20] sm:$0xff] %v3246
        %3255 = vst [vmem:[%s528 + $0x28] sm:$0xff] %v3247
        %3256 = vst [vmem:[%s528 + $0x30] sm:$0xff] %v3248
        %3257 = vst [vmem:[%s528 + $0x38] sm:$0xff] %v3249
        %s3258 = sand.u32 %s245, 1
        %s3259 = scalar_lea.sflag [#allocation4], %s3258
        %s3260 = sand.u32 %s245, 1
        %s3261 = smul.addr %s3260, 64
        %s3262 = scalar_lea.vmem [#allocation16], %s3261
        %s3263 = sand.u32 %s273, 1
        %s3264 = scalar_lea.sflag [#allocation18], %s3263
        %s3265 = sand.u32 %s273, 1
        %s3266 = smul.addr %s3265, 128
        %s3267 = scalar_lea.vmem [#allocation17], %s3266
        // Predicated region
        $region85: #{tpu_custom_call.1} parent=51 // pred_check
          %p3268 = pneg %p255
        $region86: #{tpu_custom_call.1} parent=51 // pred_check_branch
          %3270 = sbr.rel (%p3268) target = $region88
        $region87: #{tpu_custom_call.1} parent=51 // pred_region
          %s3271 = smul.u32 8, %s41
          %s3273 = ssub.s32 1024, 1024
          %3274 = vsyncadd %s3259, %s3273
          %s3275 = smul.addr %s40, 16
          %s3276 = sadd.s32 %s3271, %s3275
          %s3277 = smul.addr %s3276, 128
          %s3278 = scalar_lea.hbm %s8, %s3277
          %s3279 = sshll.u32 %s3262, 4
          %s3280 = int_to_ptr.vmem [resolvable:$true] %s3279
          %3285 = dma.vmem_to_hbm [thread:$0]  %s3280, 1024, %s3278, %s3259, 128, 128, 8
        $region88: #{tpu_custom_call.1} parent=51 // pred_fallthru
          _
        // Predicated region
        $region89: #{tpu_custom_call.1} parent=51 // pred_check
          %p3286 = pneg %p283
        $region90: #{tpu_custom_call.1} parent=51 // pred_check_branch
          %3288 = sbr.rel (%p3286) target = $region92
        $region91: #{tpu_custom_call.1} parent=51 // pred_region
          #allocation20 [shape = 'u32[6]{0}', space=smem, size = 0x18, scoped, tag = 'DMA stride descriptor']
          %s3289 = smul.u32 8, %s41
          %s3291 = ssub.s32 2048, 2048
          %3292 = vsyncadd %s3264, %s3291
          %s3293 = smul.addr %s40, 64
          %s3294 = sadd.s32 %s3289, %s3293
          %s3295 = smul.addr %s3294, 64
          %s3296 = scalar_lea.hbm %s9, %s3295
          %s3298 = sshll.u32 1, 14
          %s3299 = sxor.u32 4294967295, %s3298
          %s3302 = sshll.u32 7, 18
          %s3303 = sxor.u32 4294967295, %s3302
          %s3304 = sand.u32 0, %s3303
          %s3306 = sor.u32 %s3304, 0
          %s3308 = sshll.u32 3, 24
          %s3309 = sxor.u32 4294967295, %s3308
          %s3310 = sand.u32 %s3306, %s3309
          %s3312 = sor.u32 %s3310, 0
          %s3313 = sshll.u32 %s3267, 4
          %s3314 = int_to_ptr.vmem [resolvable:$true] %s3313
          %3320 = sst [smem:[#allocation20]] 512
          %s3321 = scalar_lea.smem [#allocation20], 1
          %3322 = sst [smem:[%s3321]] 1024
          %s3323 = scalar_lea.smem [#allocation20], 2
          %3324 = sst [smem:[%s3323]] 8
          %s3325 = scalar_lea.smem [#allocation20], 3
          %3326 = sst [smem:[%s3325]] 64
          %s3327 = scalar_lea.smem [#allocation20], 4
          %3328 = sst [smem:[%s3327]] 64
          %s3329 = scalar_lea.smem [#allocation20], 5
          %3330 = sst [smem:[%s3329]] 4
          %3332 = dma.general %s3314, 2048, %s3296, %s3264, [#allocation19], [#allocation20], %s3312, 0
        $region92: #{tpu_custom_call.1} parent=51 // pred_fallthru
          _
      $region52: #{tpu_custom_call.1} parent=5 // pred_fallthru
        _
      %p3333 = scmp.le.s32.totalorder 2, %s31
      // Predicated region
      $region93: #{tpu_custom_call.1} parent=5 // pred_check
        %p3334 = pneg %p3333
      $region94: #{tpu_custom_call.1} parent=5 // pred_check_branch
        %3336 = sbr.rel (%p3334) target = $region96
      $region95: #{tpu_custom_call.1} parent=5 // pred_region
        %s3337 = ssub.s32 %s31, 2
        // Predicated region
        $region97: #{tpu_custom_call.1} parent=95 // pred_check
          %p3338 = pneg %p261
        $region98: #{tpu_custom_call.1} parent=95 // pred_check_branch
          %3340 = sbr.rel (%p3338) target = $region100
        $region99: #{tpu_custom_call.1} parent=95 // pred_region
          %s3341 = sand.u32 %s246, 1
          %s3342 = scalar_lea.sflag [#allocation4], %s3341
          %s3343 = sand.u32 %s246, 1
          %s3344 = smul.addr %s3343, 64
          %s3345 = scalar_lea.vmem [#allocation16], %s3344
          %3346 = dma.done %s3342, 1024
        $region100: #{tpu_custom_call.1} parent=95 // pred_fallthru
          _
        // Predicated region
        $region101: #{tpu_custom_call.1} parent=95 // pred_check
          %p3347 = pneg %p289
        $region102: #{tpu_custom_call.1} parent=95 // pred_check_branch
          %3349 = sbr.rel (%p3347) target = $region104
        $region103: #{tpu_custom_call.1} parent=95 // pred_region
          %s3350 = sand.u32 %s274, 1
          %s3351 = scalar_lea.sflag [#allocation18], %s3350
          %s3352 = sand.u32 %s274, 1
          %s3353 = smul.addr %s3352, 128
          %s3354 = scalar_lea.vmem [#allocation17], %s3353
          %3355 = dma.done %s3351, 2048
        $region104: #{tpu_custom_call.1} parent=95 // pred_fallthru
          _
      $region96: #{tpu_custom_call.1} parent=5 // pred_fallthru
        _
    $region6: #{tpu_custom_call.1} parent=1 // loop_footer
      %s35 = sadd.s32 1, %s31
    $region7: #{tpu_custom_call.1} parent=1 // loop_footer_branch
      %30 = sbr.rel target = $region3
    $region8: #{tpu_custom_call.1} parent=1 // loop_exit
      _
    %3356 = vsyncpa [#allocation3], 1
    %s3357 = scalar_lea.sflag [#allocation3], 1
    %3358 = vsyncpa %s3357, 1
    %3359 = vsyncpa [#allocation6], 1
    %s3360 = scalar_lea.sflag [#allocation6], 1
    %3361 = vsyncpa %s3360, 1
    %3362 = vsyncpa [#allocation9], 1
    %3363 = vsyncpa [#allocation12], 1
    %3364 = vsyncpa [#allocation15], 1
    %3365 = vsyncpa [#allocation4], 1
    %s3366 = scalar_lea.sflag [#allocation4], 1
    %3367 = vsyncpa %s3366, 1
    %3368 = vsyncpa [#allocation18], 1
    %s3369 = scalar_lea.sflag [#allocation18], 1
    %3370 = vsyncpa %s3369, 1

</llo_original>
